<compile_context>
chip_gen: v7x
topology: tpu7x:2x2x1
jax: 0.10.0
libtpu: 0.0.40
codegen_flags: <defaults>
</compile_context>

<pallas_src>
import functools

import jax
import jax.numpy as jnp
from jax import lax
from jax.experimental import pallas as pl
from jax.experimental.pallas import tpu as pltpu

BN_EPS = 1e-5


def _round_up(x, m):
    return (x + m - 1) // m * m


def _vmem_limit_bytes():
    # ~60% of physical VMEM: ~38 MiB on v7x (64 MiB), ~76 MiB on v5e/v6e (128 MiB).
    try:
        cap = int(pltpu.get_tpu_info().vmem_capacity_bytes)
    except Exception:
        cap = 64 * 1024 * 1024  # conservative fallback (v7x-sized)
    return max(min(int(cap * 0.6), 96 * 1024 * 1024), 32 * 1024 * 1024)


def _resident_spec(block_shape, index_map):
    # Constant-index_map operands (weights/bias/scale/shift) stay resident across
    # the grid: single-buffer them to avoid duplicating the slab in VMEM.
    try:
        return pl.BlockSpec(block_shape, index_map, pipeline_mode=pl.Buffered(1))
    except Exception:
        return pl.BlockSpec(block_shape, index_map)


def _pick_batch_tile(n, oh, ow, hp, wp, cp, kk, ocp, vmem_limit):
    """Smallest batch tile (divisor of n) with TM = tn*OH*OW >= 256 that fits VMEM."""

    def fits(tn):
        tm = tn * oh * ow
        need = (2 * tn * hp * wp * cp * 2      # double-buffered input slabs (bf16)
                + tm * kk * cp * 2             # im2col scratch (bf16)
                + 2 * tm * ocp * 2             # double-buffered bf16 y tiles
                + kk * cp * ocp * 2 + ocp * 4  # resident weights + bias
                + tm * ocp * 4)                # f32 accumulator
        return need <= 0.7 * vmem_limit

    valid = [tn for tn in range(1, n + 1)
             if n % tn == 0 and ((tn * oh * ow) % 8 == 0 or tn == n)]
    fitting = [tn for tn in valid if fits(tn)]
    if not fitting:
        return valid[0]
    for tn in fitting:
        if tn * oh * ow >= 256:
            return tn
    return fitting[-1]


def _pick_row_tile(m, target=2048):
    # Lane-dense row block for the pure-bandwidth pass 2.
    for r in range(min(m, target), 7, -1):
        if m % r == 0 and r % 8 == 0:
            return r
    return m


def _pass1_kernel(x_ref, w_ref, b_ref, y_ref, sum_ref, ssq_ref, col_ref,
                  *, ksize_h, ksize_w, oh, ow):
    """Implicit-GEMM conv (fused taps) + bias + ReLU; per-tile BN partial sums."""
    cp = x_ref.shape[3]
    tm, ocp = y_ref.shape

    # Build the im2col slab in VMEM: one dense shifted-window copy per tap.
    for di in range(ksize_h):            # unrolled at trace time (<= 16 taps)
        for dj in range(ksize_w):
            t = di * ksize_w + dj
            win = x_ref[:, di:di + oh, dj:dj + ow, :]
            col_ref[:, t * cp:(t + 1) * cp] = win.reshape(tm, cp)

    # Single deep-K MXU contraction: (TM, KH*KW*Cp) x (KH*KW*Cp, OCp), f32 acc.
    acc = jnp.dot(col_ref[...], w_ref[...], preferred_element_type=jnp.float32)

    y = jnp.maximum(acc + b_ref[...], 0.0)      # bias + ReLU, f32 epilogue
    y_ref[...] = y.astype(y_ref.dtype)          # bf16 intermediate to HBM

    # Per-tile partial statistics, taken from the f32 value (pre-cast).
    sum_ref[...] = jnp.sum(y, axis=0, keepdims=True).reshape(1, 1, ocp)
    ssq_ref[...] = jnp.sum(y * y, axis=0, keepdims=True).reshape(1, 1, ocp)


def _pass2_kernel(y_ref, scale_ref, shift_ref, o_ref):
    # (y - mean) * inv_std * gamma + beta, pre-folded into scale/shift:
    # one f32 VPU pass over a lane-dense tile (v5e-safe: no bf16 VPU math).
    o_ref[...] = y_ref[...].astype(jnp.float32) * scale_ref[...] + shift_ref[...]


@functools.partial(jax.jit, static_argnames=("stride", "padding"))
def conv_relu_bn_nhwc(x_nhwc, weight, bias, gamma, beta, *, stride, padding):
    """Fused Conv2d -> ReLU -> BatchNorm2d (batch stats). NHWC in / NHWC out.

    x_nhwc: (N, H, W, C); weight: (OC, C, KH, KW) (PyTorch layout).
    """
    oc, c, kh, kw = weight.shape
    n, h, w, _ = x_nhwc.shape
    oh = (h + 2 * padding - kh) // stride + 1
    ow = (w + 2 * padding - kw) // stride + 1

    ocp = _round_up(oc, 128)   # lane-dense MXU N dim (256/512 stay whole on v6e/v7x)
    cp = _round_up(c, 8)       # sublane-aligned contraction dim

    # Spatial zero pad + channel pad once, bf16 MXU operand.
    xp = jnp.pad(x_nhwc.astype(jnp.bfloat16),
                 ((0, 0), (padding, padding), (padding, padding), (0, cp - c)))
    w_t = jnp.transpose(weight, (2, 3, 1, 0)).astype(jnp.float32)  # (KH,KW,C,OC)

    if stride > 1:
        # Space-to-depth: stride-s conv -> stride-1 conv with s*s x channels and
        # ceil(k/s) taps per axis (dense VMEM windows, no strided slicing).
        s = stride
        hp0, wp0 = xp.shape[1], xp.shape[2]
        hp1, wp1 = _round_up(hp0, s), _round_up(wp0, s)
        xp = jnp.pad(xp, ((0, 0), (0, hp1 - hp0), (0, wp1 - wp0), (0, 0)))
        xp = xp.reshape(n, hp1 // s, s, wp1 // s, s, cp)
        xp = xp.transpose(0, 1, 3, 2, 4, 5).reshape(n, hp1 // s, wp1 // s, s * s * cp)
        kh_e, kw_e = -(-kh // s), -(-kw // s)
        w_t = jnp.pad(w_t, ((0, kh_e * s - kh), (0, kw_e * s - kw),
                            (0, cp - c), (0, ocp - oc)))
        w_t = w_t.reshape(kh_e, s, kw_e, s, cp, ocp)
        w_t = w_t.transpose(0, 2, 1, 3, 4, 5).reshape(kh_e * kw_e, s * s * cp, ocp)
    else:
        kh_e, kw_e = kh, kw
        w_t = jnp.pad(w_t, ((0, 0), (0, 0), (0, cp - c), (0, ocp - oc)))
        w_t = w_t.reshape(kh_e * kw_e, cp, ocp)

    hp_e, wp_e, cp_e = xp.shape[1], xp.shape[2], xp.shape[3]
    kk = kh_e * kw_e
    kdim = kk * cp_e
    # Taps stacked along K: row t*Cp + c matches the im2col column layout.
    w_mat = w_t.reshape(kdim, ocp).astype(jnp.bfloat16)

    b_p = jnp.pad(bias.astype(jnp.float32), (0, ocp - oc)).reshape(1, ocp)
    gamma_p = jnp.pad(gamma.astype(jnp.float32), (0, ocp - oc)).reshape(1, ocp)
    beta_p = jnp.pad(beta.astype(jnp.float32), (0, ocp - oc)).reshape(1, ocp)

    vmem_limit = _vmem_limit_bytes()
    tn = _pick_batch_tile(n, oh, ow, hp_e, wp_e, cp_e, kk, ocp, vmem_limit)
    tm = tn * oh * ow
    m = n * oh * ow
    g1 = n // tn

    kernel1 = functools.partial(_pass1_kernel, ksize_h=kh_e, ksize_w=kw_e,
                                oh=oh, ow=ow)
    flops = 2 * m * kdim * ocp
    bytes_accessed = (xp.size * 2 + w_mat.size * 2 + b_p.size * 4
                      + m * ocp * 2 + 2 * g1 * ocp * 4)

    y, s1, s2 = pl.pallas_call(
        kernel1,
        grid=(g1,),
        in_specs=[
            pl.BlockSpec((tn, hp_e, wp_e, cp_e), lambda i: (i, 0, 0, 0)),  # input slab
            _resident_spec((kdim, ocp), lambda i: (0, 0)),                 # weights
            _resident_spec((1, ocp), lambda i: (0, 0)),                    # bias
        ],
        out_specs=(
            pl.BlockSpec((tm, ocp), lambda i: (i, 0)),        # y = relu(conv+b), bf16
            pl.BlockSpec((1, 1, ocp), lambda i: (i, 0, 0)),   # per-tile sum
            pl.BlockSpec((1, 1, ocp), lambda i: (i, 0, 0)),   # per-tile sumsq
        ),
        out_shape=(
            jax.ShapeDtypeStruct((m, ocp), jnp.bfloat16),
            jax.ShapeDtypeStruct((g1, 1, ocp), jnp.float32),
            jax.ShapeDtypeStruct((g1, 1, ocp), jnp.float32),
        ),
        scratch_shapes=[pltpu.VMEM((tm, kdim), jnp.bfloat16)],   # im2col slab
        compiler_params=pltpu.CompilerParams(
            dimension_semantics=("parallel",),   # no cross-iteration carries
            vmem_limit_bytes=vmem_limit),
        cost_estimate=pl.CostEstimate(flops=flops, transcendentals=0,
                                      bytes_accessed=bytes_accessed),
    )(xp, w_mat, b_p)

    # BatchNorm2d training-mode statistics (biased variance) from the per-tile
    # partial sums (pairwise-reduced in XLA); fold gamma/beta into one
    # scale/shift so pass 2 is a single fused multiply-add per element.
    s1 = jnp.sum(s1, axis=0)          # (1, OCp)
    s2 = jnp.sum(s2, axis=0)
    mean = s1 / m
    var = jnp.maximum(s2 / m - mean * mean, 0.0)
    inv_std = lax.rsqrt(var + BN_EPS)
    scale = gamma_p * inv_std
    shift = beta_p - mean * scale

    tm2 = _pick_row_tile(m)
    out_flat = pl.pallas_call(
        _pass2_kernel,
        grid=(m // tm2,),
        in_specs=[
            pl.BlockSpec((tm2, ocp), lambda i: (i, 0)),
            _resident_spec((1, ocp), lambda i: (0, 0)),
            _resident_spec((1, ocp), lambda i: (0, 0)),
        ],
        out_specs=pl.BlockSpec((tm2, ocp), lambda i: (i, 0)),
        out_shape=jax.ShapeDtypeStruct((m, ocp), jnp.float32),
        compiler_params=pltpu.CompilerParams(
            dimension_semantics=("parallel",),
            vmem_limit_bytes=vmem_limit),
    )(y, scale, shift)

    # Drop channel padding; (M, OC) -> (N, OH, OW, OC) is a free leading reshape.
    return out_flat[:, :oc].reshape(n, oh, ow, oc)


@functools.partial(jax.jit, static_argnames=("stride", "padding"))
def conv_relu_bn(x_nchw, weight, bias, gamma, beta, *, stride, padding):
    """PyTorch-contract wrapper: NCHW in / NCHW out (transposes only here)."""
    x_nhwc = jnp.transpose(x_nchw, (0, 2, 3, 1))
    out = conv_relu_bn_nhwc(x_nhwc, weight, bias, gamma, beta,
                            stride=stride, padding=padding)
    return jnp.transpose(out, (0, 3, 1, 2))


def _reference(x_nchw, weight, bias, gamma, beta, stride, padding):
    # Same precision policy as the kernel: bf16 conv operands, f32 accumulation,
    # f32 batch stats taken before the bf16 rounding of the y intermediate.
    xq = x_nchw.astype(jnp.bfloat16).astype(jnp.float32)
    wq = weight.astype(jnp.bfloat16).astype(jnp.float32)
    y = lax.conv_general_dilated(
        xq, wq, window_strides=(stride, stride),
        padding=[(padding, padding), (padding, padding)],
        dimension_numbers=("NCHW", "OIHW", "NCHW"),
    ) + bias.reshape(1, -1, 1, 1)
    y = jnp.maximum(y, 0.0)
    mean = jnp.mean(y, axis=(0, 2, 3), keepdims=True)
    var = jnp.mean((y - mean) ** 2, axis=(0, 2, 3), keepdims=True)
    yq = y.astype(jnp.bfloat16).astype(jnp.float32)   # kernel stores y as bf16
    return ((yq - mean) * lax.rsqrt(var + BN_EPS) * gamma.reshape(1, -1, 1, 1)
            + beta.reshape(1, -1, 1, 1))


if __name__ == "__main__":
    key = jax.random.PRNGKey(0)
    kx, kw1, kb1, kw2, kb2 = jax.random.split(key, 5)

    N, C, H, W = 2, 4, 16, 16
    OC = 8
    x = jax.random.normal(kx, (N, C, H, W), dtype=jnp.float32)
    gamma = jnp.ones((OC,), jnp.float32)   # BatchNorm2d default init
    beta = jnp.zeros((OC,), jnp.float32)

    # Conv(in_planes=4, out_planes=8, kernel_size=3, stride=1, padding=1)
    w1 = 0.1 * jax.random.normal(kw1, (OC, C, 3, 3), dtype=jnp.float32)
    b1 = 0.1 * jax.random.normal(kb1, (OC,), dtype=jnp.float32)
    out1 = jax.block_until_ready(
        conv_relu_bn(x, w1, b1, gamma, beta, stride=1, padding=1))
    ref1 = _reference(x, w1, b1, gamma, beta, 1, 1)
    assert out1.shape == (N, OC, 16, 16), out1.shape
    assert jnp.allclose(out1, ref1, atol=2e-2, rtol=2e-2), \
        float(jnp.max(jnp.abs(out1 - ref1)))

    # Conv(4, 8, kernel_size=4, stride=2, padding=1): exercises space-to-depth.
    w2 = 0.1 * jax.random.normal(kw2, (OC, C, 4, 4), dtype=jnp.float32)
    b2 = 0.1 * jax.random.normal(kb2, (OC,), dtype=jnp.float32)
    out2 = jax.block_until_ready(
        conv_relu_bn(x, w2, b2, gamma, beta, stride=2, padding=1))
    ref2 = _reference(x, w2, b2, gamma, beta, 2, 1)
    assert out2.shape == (N, OC, 8, 8), out2.shape
    assert jnp.allclose(out2, ref2, atol=2e-2, rtol=2e-2), \
        float(jnp.max(jnp.abs(out2 - ref2)))

    print("KERNEL_OK")
</pallas_src>

<mosaic_0001>
module attributes {stable_mosaic.version = 11 : i64} {
  func.func @_pass1_kernel(%arg0: i32, %arg1: memref<1x18x18x8xbf16, #tpu.memory_space<vmem>>, %arg2: memref<72x128xbf16, #tpu.memory_space<vmem>>, %arg3: memref<1x128xf32, #tpu.memory_space<vmem>>, %arg4: memref<256x128xbf16, #tpu.memory_space<vmem>>, %arg5: memref<1x1x128xf32, #tpu.memory_space<vmem>>, %arg6: memref<1x1x128xf32, #tpu.memory_space<vmem>>, %arg7: memref<256x72xbf16, #tpu.memory_space<vmem>>) attributes {dimension_semantics = [#tpu.dimension_semantics<parallel>], iteration_bounds = array<i64: 2>, scalar_prefetch = 0 : i64, scratch_operands = 1 : i64, tpu.core_type = #tpu.core_type<tc>, window_params = [{transform_indices = @transform_0, window_bounds = array<i64: 1, 18, 18, 8>}, {pipeline_mode = #tpu.pipeline_mode<synchronous>, transform_indices = @transform_1, window_bounds = array<i64: 72, 128>}, {pipeline_mode = #tpu.pipeline_mode<synchronous>, transform_indices = @transform_2, window_bounds = array<i64: 1, 128>}, {transform_indices = @transform_3, window_bounds = array<i64: 256, 128>}, {transform_indices = @transform_4, window_bounds = array<i64: 1, 1, 128>}, {transform_indices = @transform_5, window_bounds = array<i64: 1, 1, 128>}]} {
    %c0 = arith.constant 0 : index
    %c0_0 = arith.constant 0 : index
    %c0_1 = arith.constant 0 : index
    %c0_2 = arith.constant 0 : index
    %0 = vector.load %arg1[%c0, %c0_0, %c0_1, %c0_2] : memref<1x18x18x8xbf16, #tpu.memory_space<vmem>>, vector<1x16x16x8xbf16>
    %1 = vector.shape_cast %0 : vector<1x16x16x8xbf16> to vector<256x8xbf16>
    %c0_3 = arith.constant 0 : index
    %c0_4 = arith.constant 0 : index
    %2 = vector.load %arg7[%c0_3, %c0_4] : memref<256x72xbf16, #tpu.memory_space<vmem>>, vector<256x8xbf16>
    tpu.vector_store %arg7[%c0_3, %c0_4], %1 {strides = array<i32>} : memref<256x72xbf16, #tpu.memory_space<vmem>>, vector<256x8xbf16>,
    %c0_5 = arith.constant 0 : index
    %c0_6 = arith.constant 0 : index
    %c1 = arith.constant 1 : index
    %c0_7 = arith.constant 0 : index
    %3 = vector.load %arg1[%c0_5, %c0_6, %c1, %c0_7] : memref<1x18x18x8xbf16, #tpu.memory_space<vmem>>, vector<1x16x16x8xbf16>
    %4 = vector.shape_cast %3 : vector<1x16x16x8xbf16> to vector<256x8xbf16>
    %c0_8 = arith.constant 0 : index
    %c8 = arith.constant 8 : index
    %5 = vector.load %arg7[%c0_8, %c8] : memref<256x72xbf16, #tpu.memory_space<vmem>>, vector<256x8xbf16>
    tpu.vector_store %arg7[%c0_8, %c8], %4 {strides = array<i32>} : memref<256x72xbf16, #tpu.memory_space<vmem>>, vector<256x8xbf16>,
    %c0_9 = arith.constant 0 : index
    %c0_10 = arith.constant 0 : index
    %c2 = arith.constant 2 : index
    %c0_11 = arith.constant 0 : index
    %6 = vector.load %arg1[%c0_9, %c0_10, %c2, %c0_11] : memref<1x18x18x8xbf16, #tpu.memory_space<vmem>>, vector<1x16x16x8xbf16>
    %7 = vector.shape_cast %6 : vector<1x16x16x8xbf16> to vector<256x8xbf16>
    %c0_12 = arith.constant 0 : index
    %c16 = arith.constant 16 : index
    %8 = vector.load %arg7[%c0_12, %c16] : memref<256x72xbf16, #tpu.memory_space<vmem>>, vector<256x8xbf16>
    tpu.vector_store %arg7[%c0_12, %c16], %7 {strides = array<i32>} : memref<256x72xbf16, #tpu.memory_space<vmem>>, vector<256x8xbf16>,
    %c0_13 = arith.constant 0 : index
    %c1_14 = arith.constant 1 : index
    %c0_15 = arith.constant 0 : index
    %c0_16 = arith.constant 0 : index
    %9 = vector.load %arg1[%c0_13, %c1_14, %c0_15, %c0_16] : memref<1x18x18x8xbf16, #tpu.memory_space<vmem>>, vector<1x16x16x8xbf16>
    %10 = vector.shape_cast %9 : vector<1x16x16x8xbf16> to vector<256x8xbf16>
    %c0_17 = arith.constant 0 : index
    %c24 = arith.constant 24 : index
    %11 = vector.load %arg7[%c0_17, %c24] : memref<256x72xbf16, #tpu.memory_space<vmem>>, vector<256x8xbf16>
    tpu.vector_store %arg7[%c0_17, %c24], %10 {strides = array<i32>} : memref<256x72xbf16, #tpu.memory_space<vmem>>, vector<256x8xbf16>,
    %c0_18 = arith.constant 0 : index
    %c1_19 = arith.constant 1 : index
    %c1_20 = arith.constant 1 : index
    %c0_21 = arith.constant 0 : index
    %12 = vector.load %arg1[%c0_18, %c1_19, %c1_20, %c0_21] : memref<1x18x18x8xbf16, #tpu.memory_space<vmem>>, vector<1x16x16x8xbf16>
    %13 = vector.shape_cast %12 : vector<1x16x16x8xbf16> to vector<256x8xbf16>
    %c0_22 = arith.constant 0 : index
    %c32 = arith.constant 32 : index
    %14 = vector.load %arg7[%c0_22, %c32] : memref<256x72xbf16, #tpu.memory_space<vmem>>, vector<256x8xbf16>
    tpu.vector_store %arg7[%c0_22, %c32], %13 {strides = array<i32>} : memref<256x72xbf16, #tpu.memory_space<vmem>>, vector<256x8xbf16>,
    %c0_23 = arith.constant 0 : index
    %c1_24 = arith.constant 1 : index
    %c2_25 = arith.constant 2 : index
    %c0_26 = arith.constant 0 : index
    %15 = vector.load %arg1[%c0_23, %c1_24, %c2_25, %c0_26] : memref<1x18x18x8xbf16, #tpu.memory_space<vmem>>, vector<1x16x16x8xbf16>
    %16 = vector.shape_cast %15 : vector<1x16x16x8xbf16> to vector<256x8xbf16>
    %c0_27 = arith.constant 0 : index
    %c40 = arith.constant 40 : index
    %17 = vector.load %arg7[%c0_27, %c40] : memref<256x72xbf16, #tpu.memory_space<vmem>>, vector<256x8xbf16>
    tpu.vector_store %arg7[%c0_27, %c40], %16 {strides = array<i32>} : memref<256x72xbf16, #tpu.memory_space<vmem>>, vector<256x8xbf16>,
    %c0_28 = arith.constant 0 : index
    %c2_29 = arith.constant 2 : index
    %c0_30 = arith.constant 0 : index
    %c0_31 = arith.constant 0 : index
    %18 = vector.load %arg1[%c0_28, %c2_29, %c0_30, %c0_31] : memref<1x18x18x8xbf16, #tpu.memory_space<vmem>>, vector<1x16x16x8xbf16>
    %19 = vector.shape_cast %18 : vector<1x16x16x8xbf16> to vector<256x8xbf16>
    %c0_32 = arith.constant 0 : index
    %c48 = arith.constant 48 : index
    %20 = vector.load %arg7[%c0_32, %c48] : memref<256x72xbf16, #tpu.memory_space<vmem>>, vector<256x8xbf16>
    tpu.vector_store %arg7[%c0_32, %c48], %19 {strides = array<i32>} : memref<256x72xbf16, #tpu.memory_space<vmem>>, vector<256x8xbf16>,
    %c0_33 = arith.constant 0 : index
    %c2_34 = arith.constant 2 : index
    %c1_35 = arith.constant 1 : index
    %c0_36 = arith.constant 0 : index
    %21 = vector.load %arg1[%c0_33, %c2_34, %c1_35, %c0_36] : memref<1x18x18x8xbf16, #tpu.memory_space<vmem>>, vector<1x16x16x8xbf16>
    %22 = vector.shape_cast %21 : vector<1x16x16x8xbf16> to vector<256x8xbf16>
    %c0_37 = arith.constant 0 : index
    %c56 = arith.constant 56 : index
    %23 = vector.load %arg7[%c0_37, %c56] : memref<256x72xbf16, #tpu.memory_space<vmem>>, vector<256x8xbf16>
    tpu.vector_store %arg7[%c0_37, %c56], %22 {strides = array<i32>} : memref<256x72xbf16, #tpu.memory_space<vmem>>, vector<256x8xbf16>,
    %c0_38 = arith.constant 0 : index
    %c2_39 = arith.constant 2 : index
    %c2_40 = arith.constant 2 : index
    %c0_41 = arith.constant 0 : index
    %24 = vector.load %arg1[%c0_38, %c2_39, %c2_40, %c0_41] : memref<1x18x18x8xbf16, #tpu.memory_space<vmem>>, vector<1x16x16x8xbf16>
    %25 = vector.shape_cast %24 : vector<1x16x16x8xbf16> to vector<256x8xbf16>
    %c0_42 = arith.constant 0 : index
    %c64 = arith.constant 64 : index
    %26 = vector.load %arg7[%c0_42, %c64] : memref<256x72xbf16, #tpu.memory_space<vmem>>, vector<256x8xbf16>
    tpu.vector_store %arg7[%c0_42, %c64], %25 {strides = array<i32>} : memref<256x72xbf16, #tpu.memory_space<vmem>>, vector<256x8xbf16>,
    %c0_43 = arith.constant 0 : index
    %c0_44 = arith.constant 0 : index
    %27 = vector.load %arg7[%c0_43, %c0_44] : memref<256x72xbf16, #tpu.memory_space<vmem>>, vector<256x72xbf16>
    %c0_45 = arith.constant 0 : index
    %c0_46 = arith.constant 0 : index
    %28 = vector.load %arg2[%c0_45, %c0_46] : memref<72x128xbf16, #tpu.memory_space<vmem>>, vector<72x128xbf16>
    %cst = arith.constant dense<0.000000e+00> : vector<256x128xf32>
    %29 = tpu.matmul %27, %28, %cst {dimension_numbers = #tpu.dot_dimension_numbers<[1], [0], [0], [1], [0, 0, 1, 1], [], []>} : vector<256x72xbf16>, vector<72x128xbf16>, vector<256x128xf32> -> vector<256x128xf32>
    %c0_47 = arith.constant 0 : index
    %c0_48 = arith.constant 0 : index
    %30 = vector.load %arg3[%c0_47, %c0_48] : memref<1x128xf32, #tpu.memory_space<vmem>>, vector<1x128xf32>
    %31 = vector.broadcast %30 : vector<1x128xf32> to vector<256x128xf32>
    %32 = arith.addf %29, %31 : vector<256x128xf32>
    %cst_49 = arith.constant 0.000000e+00 : f32
    %33 = vector.broadcast %cst_49 : f32 to vector<256x128xf32>
    %34 = arith.maximumf %32, %33 : vector<256x128xf32>
    %35 = arith.truncf %34 : vector<256x128xf32> to vector<256x128xbf16>
    %c0_50 = arith.constant 0 : index
    %c0_51 = arith.constant 0 : index
    %36 = vector.load %arg4[%c0_50, %c0_51] : memref<256x128xbf16, #tpu.memory_space<vmem>>, vector<256x128xbf16>
    tpu.vector_store %arg4[%c0_50, %c0_51], %35 {strides = array<i32>} : memref<256x128xbf16, #tpu.memory_space<vmem>>, vector<256x128xbf16>,
    %cst_52 = arith.constant dense<0.000000e+00> : vector<128xf32>
    %37 = vector.multi_reduction <add>, %34, %cst_52 [0] : vector<256x128xf32> to vector<128xf32>
    %38 = vector.shape_cast %37 : vector<128xf32> to vector<1x128xf32>
    %39 = vector.shape_cast %38 : vector<1x128xf32> to vector<1x1x128xf32>
    %c0_53 = arith.constant 0 : index
    %c0_54 = arith.constant 0 : index
    %c0_55 = arith.constant 0 : index
    %40 = vector.load %arg5[%c0_53, %c0_54, %c0_55] : memref<1x1x128xf32, #tpu.memory_space<vmem>>, vector<1x1x128xf32>
    tpu.vector_store %arg5[%c0_53, %c0_54, %c0_55], %39 {strides = array<i32>} : memref<1x1x128xf32, #tpu.memory_space<vmem>>, vector<1x1x128xf32>,
    %41 = arith.mulf %34, %34 : vector<256x128xf32>
    %cst_56 = arith.constant dense<0.000000e+00> : vector<128xf32>
    %42 = vector.multi_reduction <add>, %41, %cst_56 [0] : vector<256x128xf32> to vector<128xf32>
    %43 = vector.shape_cast %42 : vector<128xf32> to vector<1x128xf32>
    %44 = vector.shape_cast %43 : vector<1x128xf32> to vector<1x1x128xf32>
    %c0_57 = arith.constant 0 : index
    %c0_58 = arith.constant 0 : index
    %c0_59 = arith.constant 0 : index
    %45 = vector.load %arg6[%c0_57, %c0_58, %c0_59] : memref<1x1x128xf32, #tpu.memory_space<vmem>>, vector<1x1x128xf32>
    tpu.vector_store %arg6[%c0_57, %c0_58, %c0_59], %44 {strides = array<i32>} : memref<1x1x128xf32, #tpu.memory_space<vmem>>, vector<1x1x128xf32>,
    return
  }
  func.func @transform_0(%arg0: i32) -> (i32, i32, i32, i32) {
    %c0_i32 = arith.constant 0 : i32
    %c0_i32_0 = arith.constant 0 : i32
    %c0_i32_1 = arith.constant 0 : i32
    %c0_i32_2 = arith.constant 0 : i32
    return %arg0, %c0_i32, %c0_i32_0, %c0_i32_1 : i32, i32, i32, i32
  }
  func.func @transform_1(%arg0: i32) -> (i32, i32) {
    %c0_i32 = arith.constant 0 : i32
    %c0_i32_0 = arith.constant 0 : i32
    %c0_i32_1 = arith.constant 0 : i32
    return %c0_i32, %c0_i32_0 : i32, i32
  }
  func.func @transform_2(%arg0: i32) -> (i32, i32) {
    %c0_i32 = arith.constant 0 : i32
    %c0_i32_0 = arith.constant 0 : i32
    %c0_i32_1 = arith.constant 0 : i32
    return %c0_i32, %c0_i32_0 : i32, i32
  }
  func.func @transform_3(%arg0: i32) -> (i32, i32) {
    %c0_i32 = arith.constant 0 : i32
    %c0_i32_0 = arith.constant 0 : i32
    return %arg0, %c0_i32 : i32, i32
  }
  func.func @transform_4(%arg0: i32) -> (i32, i32, i32) {
    %c0_i32 = arith.constant 0 : i32
    %c0_i32_0 = arith.constant 0 : i32
    %c0_i32_1 = arith.constant 0 : i32
    return %arg0, %c0_i32, %c0_i32_0 : i32, i32, i32
  }
  func.func @transform_5(%arg0: i32) -> (i32, i32, i32) {
    %c0_i32 = arith.constant 0 : i32
    %c0_i32_0 = arith.constant 0 : i32
    %c0_i32_1 = arith.constant 0 : i32
    return %arg0, %c0_i32, %c0_i32_0 : i32, i32, i32
  }
}

module attributes {stable_mosaic.version = 11 : i64} {
  func.func @_pass2_kernel(%arg0: i32, %arg1: memref<512x128xbf16, #tpu.memory_space<vmem>>, %arg2: memref<1x128xf32, #tpu.memory_space<vmem>>, %arg3: memref<1x128xf32, #tpu.memory_space<vmem>>, %arg4: memref<512x128xf32, #tpu.memory_space<vmem>>) attributes {dimension_semantics = [#tpu.dimension_semantics<parallel>], iteration_bounds = array<i64: 1>, scalar_prefetch = 0 : i64, scratch_operands = 0 : i64, tpu.core_type = #tpu.core_type<tc>, window_params = [{transform_indices = @transform_0, window_bounds = array<i64: 512, 128>}, {pipeline_mode = #tpu.pipeline_mode<synchronous>, transform_indices = @transform_1, window_bounds = array<i64: 1, 128>}, {pipeline_mode = #tpu.pipeline_mode<synchronous>, transform_indices = @transform_2, window_bounds = array<i64: 1, 128>}, {transform_indices = @transform_3, window_bounds = array<i64: 512, 128>}]} {
    %c0 = arith.constant 0 : index
    %c0_0 = arith.constant 0 : index
    %0 = vector.load %arg1[%c0, %c0_0] : memref<512x128xbf16, #tpu.memory_space<vmem>>, vector<512x128xbf16>
    %1 = arith.extf %0 : vector<512x128xbf16> to vector<512x128xf32>
    %c0_1 = arith.constant 0 : index
    %c0_2 = arith.constant 0 : index
    %2 = vector.load %arg2[%c0_1, %c0_2] : memref<1x128xf32, #tpu.memory_space<vmem>>, vector<1x128xf32>
    %3 = vector.broadcast %2 : vector<1x128xf32> to vector<512x128xf32>
    %4 = arith.mulf %1, %3 : vector<512x128xf32>
    %c0_3 = arith.constant 0 : index
    %c0_4 = arith.constant 0 : index
    %5 = vector.load %arg3[%c0_3, %c0_4] : memref<1x128xf32, #tpu.memory_space<vmem>>, vector<1x128xf32>
    %6 = vector.broadcast %5 : vector<1x128xf32> to vector<512x128xf32>
    %7 = arith.addf %4, %6 : vector<512x128xf32>
    %c0_5 = arith.constant 0 : index
    %c0_6 = arith.constant 0 : index
    %8 = vector.load %arg4[%c0_5, %c0_6] : memref<512x128xf32, #tpu.memory_space<vmem>>, vector<512x128xf32>
    tpu.vector_store %arg4[%c0_5, %c0_6], %7 {strides = array<i32>} : memref<512x128xf32, #tpu.memory_space<vmem>>, vector<512x128xf32>,
    return
  }
  func.func @transform_0(%arg0: i32) -> (i32, i32) {
    %c0_i32 = arith.constant 0 : i32
    %c0_i32_0 = arith.constant 0 : i32
    return %arg0, %c0_i32 : i32, i32
  }
  func.func @transform_1(%arg0: i32) -> (i32, i32) {
    %c0_i32 = arith.constant 0 : i32
    %c0_i32_0 = arith.constant 0 : i32
    %c0_i32_1 = arith.constant 0 : i32
    return %c0_i32, %c0_i32_0 : i32, i32
  }
  func.func @transform_2(%arg0: i32) -> (i32, i32) {
    %c0_i32 = arith.constant 0 : i32
    %c0_i32_0 = arith.constant 0 : i32
    %c0_i32_1 = arith.constant 0 : i32
    return %c0_i32, %c0_i32_0 : i32, i32
  }
  func.func @transform_3(%arg0: i32) -> (i32, i32) {
    %c0_i32 = arith.constant 0 : i32
    %c0_i32_0 = arith.constant 0 : i32
    return %arg0, %c0_i32 : i32, i32
  }
}

</mosaic_0001>

<llo_original>
// kernel: conv_relu_bn_nhwc.3
$region0: #{conv_relu_bn_nhwc.3}
  #allocation0 [shape = 'u32[]', space=smem, size = 0x4, offset = 0x4, fixed_abs, tag = 'smem constant byte address 0x4 - core index']
  #allocation1 [shape = 'u32[144,128]{1,0:T(1,128)}', space=vmem, size = 0x12000, scoped, tag = 'internal scratch']
  %s0 = inlined_call_operand.vmem [shape: bf16[512,128], index: 0, kind: input, shape index: {}]
  %s1 = inlined_call_operand.vmem [shape: f32[1,128], index: 1, kind: input, shape index: {}]
  %s2 = inlined_call_operand.vmem [shape: f32[1,128], index: 2, kind: input, shape index: {}]
  %s3 = inlined_call_operand.vmem [shape: f32[512,128], index: 3, kind: output, shape index: {}]
  %s4 = sld [smem:[#allocation0]]
  $region22: #{conv_relu_bn_nhwc.3} parent=0
    _
  %s6 = ssub.s32 1, %s4
  %s7 = scalar_select 0, %s6, %s4
  // Predicated region
  $region2: #{conv_relu_bn_nhwc.3} parent=0 // pred_check
    _
  $region3: #{conv_relu_bn_nhwc.3} parent=0 // pred_check_branch
    %9 = sbr.rel (0) target = $region5
  $region4: #{conv_relu_bn_nhwc.3} parent=0 // pred_region
    _
  $region5: #{conv_relu_bn_nhwc.3} parent=0 // pred_fallthru
    _
  // Predicated region
  $region6: #{conv_relu_bn_nhwc.3} parent=0 // pred_check
    _
  $region7: #{conv_relu_bn_nhwc.3} parent=0 // pred_check_branch
    %11 = sbr.rel (0) target = $region9
  $region8: #{conv_relu_bn_nhwc.3} parent=0 // pred_region
    _
  $region9: #{conv_relu_bn_nhwc.3} parent=0 // pred_fallthru
    _
  // Predicated region
  $region10: #{conv_relu_bn_nhwc.3} parent=0 // pred_check
    _
  $region11: #{conv_relu_bn_nhwc.3} parent=0 // pred_check_branch
    %13 = sbr.rel (0) target = $region13
  $region12: #{conv_relu_bn_nhwc.3} parent=0 // pred_region
    _
  $region13: #{conv_relu_bn_nhwc.3} parent=0 // pred_fallthru
    _
  %v14 = vld [vmem:[%s0] sm:$0xf]
  %v15 = vld [vmem:[%s0 + $0x4] sm:$0xf]
  %v16 = vld [vmem:[%s0 + $0x8] sm:$0xf]
  %v17 = vld [vmem:[%s0 + $0xc] sm:$0xf]
  %v18 = vld [vmem:[%s0 + $0x10] sm:$0xf]
  %v19 = vld [vmem:[%s0 + $0x14] sm:$0xf]
  %v20 = vld [vmem:[%s0 + $0x18] sm:$0xf]
  %v21 = vld [vmem:[%s0 + $0x1c] sm:$0xf]
  %v22 = vld [vmem:[%s0 + $0x20] sm:$0xf]
  %v23 = vld [vmem:[%s0 + $0x24] sm:$0xf]
  %v24 = vld [vmem:[%s0 + $0x28] sm:$0xf]
  %v25 = vld [vmem:[%s0 + $0x2c] sm:$0xf]
  %v26 = vld [vmem:[%s0 + $0x30] sm:$0xf]
  %v27 = vld [vmem:[%s0 + $0x34] sm:$0xf]
  %v28 = vld [vmem:[%s0 + $0x38] sm:$0xf]
  %v29 = vld [vmem:[%s0 + $0x3c] sm:$0xf]
  %v30 = vld [vmem:[%s0 + $0x40] sm:$0xf]
  %v31 = vld [vmem:[%s0 + $0x44] sm:$0xf]
  %v32 = vld [vmem:[%s0 + $0x48] sm:$0xf]
  %v33 = vld [vmem:[%s0 + $0x4c] sm:$0xf]
  %v34 = vld [vmem:[%s0 + $0x50] sm:$0xf]
  %v35 = vld [vmem:[%s0 + $0x54] sm:$0xf]
  %v36 = vld [vmem:[%s0 + $0x58] sm:$0xf]
  %v37 = vld [vmem:[%s0 + $0x5c] sm:$0xf]
  %v38 = vld [vmem:[%s0 + $0x60] sm:$0xf]
  %v39 = vld [vmem:[%s0 + $0x64] sm:$0xf]
  %v40 = vld [vmem:[%s0 + $0x68] sm:$0xf]
  %v41 = vld [vmem:[%s0 + $0x6c] sm:$0xf]
  %v42 = vld [vmem:[%s0 + $0x70] sm:$0xf]
  %v43 = vld [vmem:[%s0 + $0x74] sm:$0xf]
  %v44 = vld [vmem:[%s0 + $0x78] sm:$0xf]
  %v45 = vld [vmem:[%s0 + $0x7c] sm:$0xf]
  %v46 = vld [vmem:[%s0 + $0x80] sm:$0xf]
  %v47 = vld [vmem:[%s0 + $0x84] sm:$0xf]
  %v48 = vld [vmem:[%s0 + $0x88] sm:$0xf]
  %v49 = vld [vmem:[%s0 + $0x8c] sm:$0xf]
  %v50 = vld [vmem:[%s0 + $0x90] sm:$0xf]
  %v51 = vld [vmem:[%s0 + $0x94] sm:$0xf]
  %v52 = vld [vmem:[%s0 + $0x98] sm:$0xf]
  %v53 = vld [vmem:[%s0 + $0x9c] sm:$0xf]
  %v54 = vld [vmem:[%s0 + $0xa0] sm:$0xf]
  %v55 = vld [vmem:[%s0 + $0xa4] sm:$0xf]
  %v56 = vld [vmem:[%s0 + $0xa8] sm:$0xf]
  %v57 = vld [vmem:[%s0 + $0xac] sm:$0xf]
  %v58 = vld [vmem:[%s0 + $0xb0] sm:$0xf]
  %v59 = vld [vmem:[%s0 + $0xb4] sm:$0xf]
  %v60 = vld [vmem:[%s0 + $0xb8] sm:$0xf]
  %v61 = vld [vmem:[%s0 + $0xbc] sm:$0xf]
  %v62 = vld [vmem:[%s0 + $0xc0] sm:$0xf]
  %v63 = vld [vmem:[%s0 + $0xc4] sm:$0xf]
  %v64 = vld [vmem:[%s0 + $0xc8] sm:$0xf]
  %v65 = vld [vmem:[%s0 + $0xcc] sm:$0xf]
  %v66 = vld [vmem:[%s0 + $0xd0] sm:$0xf]
  %v67 = vld [vmem:[%s0 + $0xd4] sm:$0xf]
  %v68 = vld [vmem:[%s0 + $0xd8] sm:$0xf]
  %v69 = vld [vmem:[%s0 + $0xdc] sm:$0xf]
  %v70 = vld [vmem:[%s0 + $0xe0] sm:$0xf]
  %v71 = vld [vmem:[%s0 + $0xe4] sm:$0xf]
  %v72 = vld [vmem:[%s0 + $0xe8] sm:$0xf]
  %v73 = vld [vmem:[%s0 + $0xec] sm:$0xf]
  %v74 = vld [vmem:[%s0 + $0xf0] sm:$0xf]
  %v75 = vld [vmem:[%s0 + $0xf4] sm:$0xf]
  %v76 = vld [vmem:[%s0 + $0xf8] sm:$0xf]
  %v77 = vld [vmem:[%s0 + $0xfc] sm:$0xf]
  %v78 = vunpack.c.l.bf16 %v14
  %v79 = vunpack.c.l.bf16 %v15
  %v80 = vunpack.c.l.bf16 %v16
  %v81 = vunpack.c.l.bf16 %v17
  %v82 = vunpack.c.l.bf16 %v18
  %v83 = vunpack.c.l.bf16 %v19
  %v84 = vunpack.c.l.bf16 %v20
  %v85 = vunpack.c.l.bf16 %v21
  %v86 = vunpack.c.l.bf16 %v22
  %v87 = vunpack.c.l.bf16 %v23
  %v88 = vunpack.c.l.bf16 %v24
  %v89 = vunpack.c.l.bf16 %v25
  %v90 = vunpack.c.l.bf16 %v26
  %v91 = vunpack.c.l.bf16 %v27
  %v92 = vunpack.c.l.bf16 %v28
  %v93 = vunpack.c.l.bf16 %v29
  %v94 = vunpack.c.l.bf16 %v30
  %v95 = vunpack.c.l.bf16 %v31
  %v96 = vunpack.c.l.bf16 %v32
  %v97 = vunpack.c.l.bf16 %v33
  %v98 = vunpack.c.l.bf16 %v34
  %v99 = vunpack.c.l.bf16 %v35
  %v100 = vunpack.c.l.bf16 %v36
  %v101 = vunpack.c.l.bf16 %v37
  %v102 = vunpack.c.l.bf16 %v38
  %v103 = vunpack.c.l.bf16 %v39
  %v104 = vunpack.c.l.bf16 %v40
  %v105 = vunpack.c.l.bf16 %v41
  %v106 = vunpack.c.l.bf16 %v42
  %v107 = vunpack.c.l.bf16 %v43
  %v108 = vunpack.c.l.bf16 %v44
  %v109 = vunpack.c.l.bf16 %v45
  %v110 = vunpack.c.l.bf16 %v46
  %v111 = vunpack.c.l.bf16 %v47
  %v112 = vunpack.c.l.bf16 %v48
  %v113 = vunpack.c.l.bf16 %v49
  %v114 = vunpack.c.l.bf16 %v50
  %v115 = vunpack.c.l.bf16 %v51
  %v116 = vunpack.c.l.bf16 %v52
  %v117 = vunpack.c.l.bf16 %v53
  %v118 = vunpack.c.l.bf16 %v54
  %v119 = vunpack.c.l.bf16 %v55
  %v120 = vunpack.c.l.bf16 %v56
  %v121 = vunpack.c.l.bf16 %v57
  %v122 = vunpack.c.l.bf16 %v58
  %v123 = vunpack.c.l.bf16 %v59
  %v124 = vunpack.c.l.bf16 %v60
  %v125 = vunpack.c.l.bf16 %v61
  %v126 = vunpack.c.l.bf16 %v62
  %v127 = vunpack.c.l.bf16 %v63
  %v128 = vunpack.c.l.bf16 %v64
  %v129 = vunpack.c.l.bf16 %v65
  %v130 = vunpack.c.l.bf16 %v66
  %v131 = vunpack.c.l.bf16 %v67
  %v132 = vunpack.c.l.bf16 %v68
  %v133 = vunpack.c.l.bf16 %v69
  %v134 = vunpack.c.l.bf16 %v70
  %v135 = vunpack.c.l.bf16 %v71
  %v136 = vunpack.c.l.bf16 %v72
  %v137 = vunpack.c.l.bf16 %v73
  %v138 = vunpack.c.l.bf16 %v74
  %v139 = vunpack.c.l.bf16 %v75
  %v140 = vunpack.c.l.bf16 %v76
  %v141 = vunpack.c.l.bf16 %v77
  %v142 = vld [vmem:[%s1] sm:$0x1]
  %v144 = vlaneseq
  %v145 = vshrl.u32 %v144, 7
  %v146 = vsub.s32 0, %v145
  %v147 = vrot.slane %v142, %v146
  %v149 = vmul.f32 %v78, %v147
  %v150 = vmul.f32 %v79, %v147
  %v151 = vmul.f32 %v80, %v147
  %v152 = vmul.f32 %v81, %v147
  %v153 = vmul.f32 %v82, %v147
  %v154 = vmul.f32 %v83, %v147
  %v155 = vmul.f32 %v84, %v147
  %v156 = vmul.f32 %v85, %v147
  %v157 = vmul.f32 %v86, %v147
  %v158 = vmul.f32 %v87, %v147
  %v159 = vmul.f32 %v88, %v147
  %v160 = vmul.f32 %v89, %v147
  %v161 = vmul.f32 %v90, %v147
  %v162 = vmul.f32 %v91, %v147
  %v163 = vmul.f32 %v92, %v147
  %v164 = vmul.f32 %v93, %v147
  %v165 = vmul.f32 %v94, %v147
  %v166 = vmul.f32 %v95, %v147
  %v167 = vmul.f32 %v96, %v147
  %v168 = vmul.f32 %v97, %v147
  %v169 = vmul.f32 %v98, %v147
  %v170 = vmul.f32 %v99, %v147
  %v171 = vmul.f32 %v100, %v147
  %v172 = vmul.f32 %v101, %v147
  %v173 = vmul.f32 %v102, %v147
  %v174 = vmul.f32 %v103, %v147
  %v175 = vmul.f32 %v104, %v147
  %v176 = vmul.f32 %v105, %v147
  %v177 = vmul.f32 %v106, %v147
  %v178 = vmul.f32 %v107, %v147
  %v179 = vmul.f32 %v108, %v147
  %v180 = vmul.f32 %v109, %v147
  %v181 = vmul.f32 %v110, %v147
  %v182 = vmul.f32 %v111, %v147
  %v183 = vmul.f32 %v112, %v147
  %v184 = vmul.f32 %v113, %v147
  %v185 = vmul.f32 %v114, %v147
  %v186 = vmul.f32 %v115, %v147
  %v187 = vmul.f32 %v116, %v147
  %v188 = vmul.f32 %v117, %v147
  %v189 = vmul.f32 %v118, %v147
  %v190 = vmul.f32 %v119, %v147
  %v191 = vmul.f32 %v120, %v147
  %v192 = vmul.f32 %v121, %v147
  %v193 = vmul.f32 %v122, %v147
  %v194 = vmul.f32 %v123, %v147
  %v195 = vmul.f32 %v124, %v147
  %v196 = vmul.f32 %v125, %v147
  %v197 = vmul.f32 %v126, %v147
  %v198 = vmul.f32 %v127, %v147
  %v199 = vmul.f32 %v128, %v147
  %v200 = vmul.f32 %v129, %v147
  %v201 = vmul.f32 %v130, %v147
  %v202 = vmul.f32 %v131, %v147
  %v203 = vmul.f32 %v132, %v147
  %v204 = vmul.f32 %v133, %v147
  %v205 = vmul.f32 %v134, %v147
  %v206 = vmul.f32 %v135, %v147
  %v207 = vmul.f32 %v136, %v147
  %v208 = vmul.f32 %v137, %v147
  %v209 = vmul.f32 %v138, %v147
  %v210 = vmul.f32 %v139, %v147
  %v211 = vmul.f32 %v140, %v147
  %v212 = vmul.f32 %v141, %v147
  %v213 = vld [vmem:[%s2] sm:$0x1]
  %v215 = vlaneseq
  %v216 = vshrl.u32 %v215, 7
  %v217 = vsub.s32 0, %v216
  %v218 = vrot.slane %v213, %v217
  %v220 = vadd.f32 %v149, %v218
  %v221 = vadd.f32 %v150, %v218
  %v222 = vadd.f32 %v151, %v218
  %v223 = vadd.f32 %v152, %v218
  %v224 = vadd.f32 %v153, %v218
  %v225 = vadd.f32 %v154, %v218
  %v226 = vadd.f32 %v155, %v218
  %v227 = vadd.f32 %v156, %v218
  %v228 = vadd.f32 %v157, %v218
  %v229 = vadd.f32 %v158, %v218
  %v230 = vadd.f32 %v159, %v218
  %v231 = vadd.f32 %v160, %v218
  %v232 = vadd.f32 %v161, %v218
  %v233 = vadd.f32 %v162, %v218
  %v234 = vadd.f32 %v163, %v218
  %v235 = vadd.f32 %v164, %v218
  %v236 = vadd.f32 %v165, %v218
  %v237 = vadd.f32 %v166, %v218
  %v238 = vadd.f32 %v167, %v218
  %v239 = vadd.f32 %v168, %v218
  %v240 = vadd.f32 %v169, %v218
  %v241 = vadd.f32 %v170, %v218
  %v242 = vadd.f32 %v171, %v218
  %v243 = vadd.f32 %v172, %v218
  %v244 = vadd.f32 %v173, %v218
  %v245 = vadd.f32 %v174, %v218
  %v246 = vadd.f32 %v175, %v218
  %v247 = vadd.f32 %v176, %v218
  %v248 = vadd.f32 %v177, %v218
  %v249 = vadd.f32 %v178, %v218
  %v250 = vadd.f32 %v179, %v218
  %v251 = vadd.f32 %v180, %v218
  %v252 = vadd.f32 %v181, %v218
  %v253 = vadd.f32 %v182, %v218
  %v254 = vadd.f32 %v183, %v218
  %v255 = vadd.f32 %v184, %v218
  %v256 = vadd.f32 %v185, %v218
  %v257 = vadd.f32 %v186, %v218
  %v258 = vadd.f32 %v187, %v218
  %v259 = vadd.f32 %v188, %v218
  %v260 = vadd.f32 %v189, %v218
  %v261 = vadd.f32 %v190, %v218
  %v262 = vadd.f32 %v191, %v218
  %v263 = vadd.f32 %v192, %v218
  %v264 = vadd.f32 %v193, %v218
  %v265 = vadd.f32 %v194, %v218
  %v266 = vadd.f32 %v195, %v218
  %v267 = vadd.f32 %v196, %v218
  %v268 = vadd.f32 %v197, %v218
  %v269 = vadd.f32 %v198, %v218
  %v270 = vadd.f32 %v199, %v218
  %v271 = vadd.f32 %v200, %v218
  %v272 = vadd.f32 %v201, %v218
  %v273 = vadd.f32 %v202, %v218
  %v274 = vadd.f32 %v203, %v218
  %v275 = vadd.f32 %v204, %v218
  %v276 = vadd.f32 %v205, %v218
  %v277 = vadd.f32 %v206, %v218
  %v278 = vadd.f32 %v207, %v218
  %v279 = vadd.f32 %v208, %v218
  %v280 = vadd.f32 %v209, %v218
  %v281 = vadd.f32 %v210, %v218
  %v282 = vadd.f32 %v211, %v218
  %v283 = vadd.f32 %v212, %v218
  %284 = vst [vmem:[%s3] sm:$0xff] %v220
  %285 = vst [vmem:[%s3 + $0x8] sm:$0xff] %v221
  %286 = vst [vmem:[%s3 + $0x10] sm:$0xff] %v222
  %287 = vst [vmem:[%s3 + $0x18] sm:$0xff] %v223
  %288 = vst [vmem:[%s3 + $0x20] sm:$0xff] %v224
  %289 = vst [vmem:[%s3 + $0x28] sm:$0xff] %v225
  %290 = vst [vmem:[%s3 + $0x30] sm:$0xff] %v226
  %291 = vst [vmem:[%s3 + $0x38] sm:$0xff] %v227
  %292 = vst [vmem:[%s3 + $0x40] sm:$0xff] %v228
  %293 = vst [vmem:[%s3 + $0x48] sm:$0xff] %v229
  %294 = vst [vmem:[%s3 + $0x50] sm:$0xff] %v230
  %295 = vst [vmem:[%s3 + $0x58] sm:$0xff] %v231
  %296 = vst [vmem:[%s3 + $0x60] sm:$0xff] %v232
  %297 = vst [vmem:[%s3 + $0x68] sm:$0xff] %v233
  %298 = vst [vmem:[%s3 + $0x70] sm:$0xff] %v234
  %299 = vst [vmem:[%s3 + $0x78] sm:$0xff] %v235
  %300 = vst [vmem:[%s3 + $0x80] sm:$0xff] %v236
  %301 = vst [vmem:[%s3 + $0x88] sm:$0xff] %v237
  %302 = vst [vmem:[%s3 + $0x90] sm:$0xff] %v238
  %303 = vst [vmem:[%s3 + $0x98] sm:$0xff] %v239
  %304 = vst [vmem:[%s3 + $0xa0] sm:$0xff] %v240
  %305 = vst [vmem:[%s3 + $0xa8] sm:$0xff] %v241
  %306 = vst [vmem:[%s3 + $0xb0] sm:$0xff] %v242
  %307 = vst [vmem:[%s3 + $0xb8] sm:$0xff] %v243
  %308 = vst [vmem:[%s3 + $0xc0] sm:$0xff] %v244
  %309 = vst [vmem:[%s3 + $0xc8] sm:$0xff] %v245
  %310 = vst [vmem:[%s3 + $0xd0] sm:$0xff] %v246
  %311 = vst [vmem:[%s3 + $0xd8] sm:$0xff] %v247
  %312 = vst [vmem:[%s3 + $0xe0] sm:$0xff] %v248
  %313 = vst [vmem:[%s3 + $0xe8] sm:$0xff] %v249
  %314 = vst [vmem:[%s3 + $0xf0] sm:$0xff] %v250
  %315 = vst [vmem:[%s3 + $0xf8] sm:$0xff] %v251
  %316 = vst [vmem:[%s3 + $0x100] sm:$0xff] %v252
  %317 = vst [vmem:[%s3 + $0x108] sm:$0xff] %v253
  %318 = vst [vmem:[%s3 + $0x110] sm:$0xff] %v254
  %319 = vst [vmem:[%s3 + $0x118] sm:$0xff] %v255
  %320 = vst [vmem:[%s3 + $0x120] sm:$0xff] %v256
  %321 = vst [vmem:[%s3 + $0x128] sm:$0xff] %v257
  %322 = vst [vmem:[%s3 + $0x130] sm:$0xff] %v258
  %323 = vst [vmem:[%s3 + $0x138] sm:$0xff] %v259
  %324 = vst [vmem:[%s3 + $0x140] sm:$0xff] %v260
  %325 = vst [vmem:[%s3 + $0x148] sm:$0xff] %v261
  %326 = vst [vmem:[%s3 + $0x150] sm:$0xff] %v262
  %327 = vst [vmem:[%s3 + $0x158] sm:$0xff] %v263
  %328 = vst [vmem:[%s3 + $0x160] sm:$0xff] %v264
  %329 = vst [vmem:[%s3 + $0x168] sm:$0xff] %v265
  %330 = vst [vmem:[%s3 + $0x170] sm:$0xff] %v266
  %331 = vst [vmem:[%s3 + $0x178] sm:$0xff] %v267
  %332 = vst [vmem:[%s3 + $0x180] sm:$0xff] %v268
  %333 = vst [vmem:[%s3 + $0x188] sm:$0xff] %v269
  %334 = vst [vmem:[%s3 + $0x190] sm:$0xff] %v270
  %335 = vst [vmem:[%s3 + $0x198] sm:$0xff] %v271
  %336 = vst [vmem:[%s3 + $0x1a0] sm:$0xff] %v272
  %337 = vst [vmem:[%s3 + $0x1a8] sm:$0xff] %v273
  %338 = vst [vmem:[%s3 + $0x1b0] sm:$0xff] %v274
  %339 = vst [vmem:[%s3 + $0x1b8] sm:$0xff] %v275
  %340 = vst [vmem:[%s3 + $0x1c0] sm:$0xff] %v276
  %341 = vst [vmem:[%s3 + $0x1c8] sm:$0xff] %v277
  %342 = vst [vmem:[%s3 + $0x1d0] sm:$0xff] %v278
  %343 = vst [vmem:[%s3 + $0x1d8] sm:$0xff] %v279
  %344 = vst [vmem:[%s3 + $0x1e0] sm:$0xff] %v280
  %345 = vst [vmem:[%s3 + $0x1e8] sm:$0xff] %v281
  %346 = vst [vmem:[%s3 + $0x1f0] sm:$0xff] %v282
  %347 = vst [vmem:[%s3 + $0x1f8] sm:$0xff] %v283
  // Predicated region
  $region14: #{conv_relu_bn_nhwc.3} parent=0 // pred_check
    _
  $region15: #{conv_relu_bn_nhwc.3} parent=0 // pred_check_branch
    %349 = sbr.rel (0) target = $region17
  $region16: #{conv_relu_bn_nhwc.3} parent=0 // pred_region
    _
  $region17: #{conv_relu_bn_nhwc.3} parent=0 // pred_fallthru
    _
  // Predicated region
  $region18: #{conv_relu_bn_nhwc.3} parent=0 // pred_check
    _
  $region19: #{conv_relu_bn_nhwc.3} parent=0 // pred_check_branch
    %351 = sbr.rel (0) target = $region21
  $region20: #{conv_relu_bn_nhwc.3} parent=0 // pred_region
    _
  $region21: #{conv_relu_bn_nhwc.3} parent=0 // pred_fallthru
    _

// kernel: conv_relu_bn_nhwc.2
$region0: #{conv_relu_bn_nhwc.2}
  #allocation0 [shape = 'u32[]', space=smem, size = 0x4, offset = 0x4, fixed_abs, tag = 'smem constant byte address 0x4 - core index']
  #allocation1 [shape = 'u32[144,128]{1,0:T(1,128)}', space=vmem, size = 0x12000, scoped, tag = 'internal scratch']
  #allocation2 [shape = 'bf16[256,72]{1,0:T(16,128)(2,1)}', space=vmem, size = 0x10000, scoped, tag = 'scratch operand']
  %s0 = inlined_call_operand.vmem [shape: bf16[2,18,18,8], index: 0, kind: input, shape index: {}]
  %s1 = inlined_call_operand.vmem [shape: bf16[72,128], index: 1, kind: input, shape index: {}]
  %s2 = inlined_call_operand.vmem [shape: f32[1,128], index: 2, kind: input, shape index: {}]
  %s3 = inlined_call_operand.vmem [shape: bf16[512,128], index: 3, kind: output, shape index: {0}]
  %s4 = inlined_call_operand.vmem [shape: f32[2,1,128], index: 4, kind: output, shape index: {1}]
  %s5 = inlined_call_operand.vmem [shape: f32[2,1,128], index: 5, kind: output, shape index: {2}]
  %6 = xla_tuple %s3, %s4, %s5
  %s7 = sld [smem:[#allocation0]]
  $region61: #{conv_relu_bn_nhwc.2} parent=0
    _
  %s9 = ssub.s32 1, %s7
  %s10 = scalar_select 0, %s9, %s7
  loop: start=0, step=1, limit=4
  $region2: #{conv_relu_bn_nhwc.2} parent=0 // loop_pre_header
    _
  $region3: #{conv_relu_bn_nhwc.2} parent=0 // loop_header
    %s12 = sphi 0, %s16
    %p13 = scmp.ge.s32.totalorder %s12, 4
    %s22 = sphi 0, %s24
    %s25 = sphi 0, %s22
    %s26 = sphi 0, %s25
    %s42 = sphi 0, %s26
    %s46 = sphi 0, %s46
    %s48 = sphi 0, %s46
    %s49 = sphi 0, %s48
    %s63 = sphi 0, %s49
    %s67 = sphi 0, %s67
    %s69 = sphi 0, %s67
    %s70 = sphi 0, %s69
    %s84 = sphi 0, %s70
    %s90 = sphi 0, %s92
    %s93 = sphi 0, %s90
    %s94 = sphi 0, %s93
    %s110 = sphi 0, %s94
    %s116 = sphi 0, %s118
    %s119 = sphi 0, %s116
    %s120 = sphi 0, %s119
    %s136 = sphi 0, %s120
    %s142 = sphi 0, %s144
    %s145 = sphi 0, %s142
    %s146 = sphi 0, %s145
    %s162 = sphi 0, %s146
  $region4: #{conv_relu_bn_nhwc.2} parent=0 // loop_header_branch
    %15 = sbr.rel (%p13) target = $region8
  $region5: #{conv_relu_bn_nhwc.2} parent=0 // loop_body
    %s17 = ssub.s32 %s12, 1
    %s18 = ssub.s32 %s12, 2
    %s19 = sadd.s32 %s12, 1
    %s20 = ssub.s32 %s12, %s19
    %p21 = scmp.eq.s32.totalorder %s20, 0
    %s23 = sadd.s32 %s22, 1
    %s24 = scalar_select %p21, %s22, %s23
    %p27 = pneg %p21
    %p28 = scmp.eq.s32.totalorder %s12, 1
    %p29 = por %p27, %p28
    %p30 = scmp.ne.s32.totalorder %s22, %s25
    %p31 = scmp.eq.s32.totalorder %s12, 0
    %p32 = por %p30, %p31
    %p33 = scmp.ne.s32.totalorder %s22, %s25
    %p34 = scmp.eq.s32.totalorder %s17, 1
    %p35 = por %p33, %p34
    %p36 = scmp.ne.s32.totalorder %s25, %s26
    %p37 = scmp.eq.s32.totalorder %s17, 0
    %p38 = por %p36, %p37
    %p39 = scmp.ne.s32.totalorder %s25, %s26
    %p40 = scmp.eq.s32.totalorder %s18, 1
    %p41 = por %p39, %p40
    %p43 = scmp.ne.s32.totalorder %s26, %s42
    %p44 = scmp.eq.s32.totalorder %s18, 0
    %p45 = por %p43, %p44
    %s47 = sadd.s32 %s46, 1
    %p50 = scmp.eq.s32.totalorder %s12, 1
    %p51 = scmp.ne.s32.totalorder %s46, %s48
    %p52 = scmp.eq.s32.totalorder %s12, 0
    %p53 = por %p51, %p52
    %p54 = scmp.ne.s32.totalorder %s46, %s48
    %p55 = scmp.eq.s32.totalorder %s17, 1
    %p56 = por %p54, %p55
    %p57 = scmp.ne.s32.totalorder %s48, %s49
    %p58 = scmp.eq.s32.totalorder %s17, 0
    %p59 = por %p57, %p58
    %p60 = scmp.ne.s32.totalorder %s48, %s49
    %p61 = scmp.eq.s32.totalorder %s18, 1
    %p62 = por %p60, %p61
    %p64 = scmp.ne.s32.totalorder %s49, %s63
    %p65 = scmp.eq.s32.totalorder %s18, 0
    %p66 = por %p64, %p65
    %s68 = sadd.s32 %s67, 1
    %p71 = scmp.eq.s32.totalorder %s12, 1
    %p72 = scmp.ne.s32.totalorder %s67, %s69
    %p73 = scmp.eq.s32.totalorder %s12, 0
    %p74 = por %p72, %p73
    %p75 = scmp.ne.s32.totalorder %s67, %s69
    %p76 = scmp.eq.s32.totalorder %s17, 1
    %p77 = por %p75, %p76
    %p78 = scmp.ne.s32.totalorder %s69, %s70
    %p79 = scmp.eq.s32.totalorder %s17, 0
    %p80 = por %p78, %p79
    %p81 = scmp.ne.s32.totalorder %s69, %s70
    %p82 = scmp.eq.s32.totalorder %s18, 1
    %p83 = por %p81, %p82
    %p85 = scmp.ne.s32.totalorder %s70, %s84
    %p86 = scmp.eq.s32.totalorder %s18, 0
    %p87 = por %p85, %p86
    %s88 = ssub.s32 %s12, %s19
    %p89 = scmp.eq.s32.totalorder %s88, 0
    %s91 = sadd.s32 %s90, 1
    %s92 = scalar_select %p89, %s90, %s91
    %p95 = pneg %p89
    %p96 = scmp.eq.s32.totalorder %s12, 1
    %p97 = por %p95, %p96
    %p98 = scmp.ne.s32.totalorder %s90, %s93
    %p99 = scmp.eq.s32.totalorder %s12, 0
    %p100 = por %p98, %p99
    %p101 = scmp.ne.s32.totalorder %s90, %s93
    %p102 = scmp.eq.s32.totalorder %s17, 1
    %p103 = por %p101, %p102
    %p104 = scmp.ne.s32.totalorder %s93, %s94
    %p105 = scmp.eq.s32.totalorder %s17, 0
    %p106 = por %p104, %p105
    %p107 = scmp.ne.s32.totalorder %s93, %s94
    %p108 = scmp.eq.s32.totalorder %s18, 1
    %p109 = por %p107, %p108
    %p111 = scmp.ne.s32.totalorder %s94, %s110
    %p112 = scmp.eq.s32.totalorder %s18, 0
    %p113 = por %p111, %p112
    %s114 = ssub.s32 %s12, %s19
    %p115 = scmp.eq.s32.totalorder %s114, 0
    %s117 = sadd.s32 %s116, 1
    %s118 = scalar_select %p115, %s116, %s117
    %p121 = pneg %p115
    %p122 = scmp.eq.s32.totalorder %s12, 1
    %p123 = por %p121, %p122
    %p124 = scmp.ne.s32.totalorder %s116, %s119
    %p125 = scmp.eq.s32.totalorder %s12, 0
    %p126 = por %p124, %p125
    %p127 = scmp.ne.s32.totalorder %s116, %s119
    %p128 = scmp.eq.s32.totalorder %s17, 1
    %p129 = por %p127, %p128
    %p130 = scmp.ne.s32.totalorder %s119, %s120
    %p131 = scmp.eq.s32.totalorder %s17, 0
    %p132 = por %p130, %p131
    %p133 = scmp.ne.s32.totalorder %s119, %s120
    %p134 = scmp.eq.s32.totalorder %s18, 1
    %p135 = por %p133, %p134
    %p137 = scmp.ne.s32.totalorder %s120, %s136
    %p138 = scmp.eq.s32.totalorder %s18, 0
    %p139 = por %p137, %p138
    %s140 = ssub.s32 %s12, %s19
    %p141 = scmp.eq.s32.totalorder %s140, 0
    %s143 = sadd.s32 %s142, 1
    %s144 = scalar_select %p141, %s142, %s143
    %p147 = pneg %p141
    %p148 = scmp.eq.s32.totalorder %s12, 1
    %p149 = por %p147, %p148
    %p150 = scmp.ne.s32.totalorder %s142, %s145
    %p151 = scmp.eq.s32.totalorder %s12, 0
    %p152 = por %p150, %p151
    %p153 = scmp.ne.s32.totalorder %s142, %s145
    %p154 = scmp.eq.s32.totalorder %s17, 1
    %p155 = por %p153, %p154
    %p156 = scmp.ne.s32.totalorder %s145, %s146
    %p157 = scmp.eq.s32.totalorder %s17, 0
    %p158 = por %p156, %p157
    %p159 = scmp.ne.s32.totalorder %s145, %s146
    %p160 = scmp.eq.s32.totalorder %s18, 1
    %p161 = por %p159, %p160
    %p163 = scmp.ne.s32.totalorder %s146, %s162
    %p164 = scmp.eq.s32.totalorder %s18, 0
    %p165 = por %p163, %p164
    %p166 = scmp.le.s32.totalorder 1, %s12
    %p167 = scmp.lt.s32.totalorder %s12, 3
    %p168 = pnand %p166, %p167
    %p169 = pneg %p168
    // Predicated region
    $region9: #{conv_relu_bn_nhwc.2} parent=5 // pred_check
      _
    $region10: #{conv_relu_bn_nhwc.2} parent=5 // pred_check_branch
      %171 = sbr.rel (%p168) target = $region12
    $region11: #{conv_relu_bn_nhwc.2} parent=5 // pred_region
      %s172 = ssub.s32 %s12, 1
      // Predicated region
      $region13: #{conv_relu_bn_nhwc.2} parent=11 // pred_check
        %p173 = pneg %p59
      $region14: #{conv_relu_bn_nhwc.2} parent=11 // pred_check_branch
        %175 = sbr.rel (%p173) target = $region16
      $region15: #{conv_relu_bn_nhwc.2} parent=11 // pred_region
        _
      $region16: #{conv_relu_bn_nhwc.2} parent=11 // pred_fallthru
        _
      // Predicated region
      $region17: #{conv_relu_bn_nhwc.2} parent=11 // pred_check
        %p176 = pneg %p80
      $region18: #{conv_relu_bn_nhwc.2} parent=11 // pred_check_branch
        %178 = sbr.rel (%p176) target = $region20
      $region19: #{conv_relu_bn_nhwc.2} parent=11 // pred_region
        _
      $region20: #{conv_relu_bn_nhwc.2} parent=11 // pred_fallthru
        _
    $region12: #{conv_relu_bn_nhwc.2} parent=5 // pred_fallthru
      _
    %p179 = scmp.lt.s32.totalorder %s12, 2
    // Predicated region
    $region21: #{conv_relu_bn_nhwc.2} parent=5 // pred_check
      %p180 = pneg %p179
    $region22: #{conv_relu_bn_nhwc.2} parent=5 // pred_check_branch
      %182 = sbr.rel (%p180) target = $region24
    $region23: #{conv_relu_bn_nhwc.2} parent=5 // pred_region
      // Predicated region
      $region25: #{conv_relu_bn_nhwc.2} parent=23 // pred_check
        %p183 = pneg %p32
      $region26: #{conv_relu_bn_nhwc.2} parent=23 // pred_check_branch
        %185 = sbr.rel (%p183) target = $region28
      $region27: #{conv_relu_bn_nhwc.2} parent=23 // pred_region
        %p186 = scmp.lt.s32.totalorder %s12, 1
        %s187 = scalar_select %p186, %s12, 1
        %s188 = smul.addr %s187, 54
        %s189 = smul.addr %s188, 4
        %s190 = scalar_lea.vmem %s0, %s189
      $region28: #{conv_relu_bn_nhwc.2} parent=23 // pred_fallthru
        _
    $region24: #{conv_relu_bn_nhwc.2} parent=5 // pred_fallthru
      _
    %p191 = scmp.le.s32.totalorder 1, %s12
    %p192 = scmp.lt.s32.totalorder %s12, 3
    %p193 = pnand %p191, %p192
    %p194 = pneg %p193
    // Predicated region
    $region29: #{conv_relu_bn_nhwc.2} parent=5 // pred_check
      _
    $region30: #{conv_relu_bn_nhwc.2} parent=5 // pred_check_branch
      %196 = sbr.rel (%p193) target = $region32
    $region31: #{conv_relu_bn_nhwc.2} parent=5 // pred_region
      %s197 = ssub.s32 %s12, 1
      %p198 = scmp.lt.s32.totalorder %s17, 1
      %s199 = scalar_select %p198, %s17, 1
      %s200 = smul.addr %s199, 54
      %s201 = smul.addr %s200, 4
      %s202 = scalar_lea.vmem %s0, %s201
      %p203 = pneg %p38
      %p204 = pneg %p35
      %p205 = pneg %p59
      %p206 = pneg %p56
      %p207 = pneg %p80
      %p208 = pneg %p77
      %p209 = pneg %p106
      %p210 = pneg %p103
      %s211 = smul.u32 32, %s17
      %p212 = scmp.lt.s32.totalorder %s211, 63
      %s213 = scalar_select %p212, %s211, 63
      %s214 = smul.addr %s213, 4
      %s215 = scalar_lea.vmem %s3, %s214
      %p216 = pneg %p132
      %p217 = pneg %p129
      %p218 = scmp.lt.s32.totalorder %s17, 1
      %s219 = scalar_select %p218, %s17, 1
      %s220 = scalar_lea.vmem %s4, %s219
      %p221 = pneg %p158
      %p222 = pneg %p155
      %p223 = scmp.lt.s32.totalorder %s17, 1
      %s224 = scalar_select %p223, %s17, 1
      %s225 = scalar_lea.vmem %s5, %s224
      %p226 = scmp.lt.s32.totalorder %s17, 1
      %s227 = scalar_select %p226, %s17, 1
      %s228 = smul.addr %s227, 54
      %s229 = smul.addr %s228, 4
      %s230 = scalar_lea.vmem %s0, %s229
      %s231 = smul.u32 32, %s17
      %p232 = scmp.lt.s32.totalorder %s231, 63
      %s233 = scalar_select %p232, %s231, 63
      %s234 = smul.addr %s233, 4
      %s235 = scalar_lea.vmem %s3, %s234
      %s236 = smul.u32 32, %s17
      %p237 = scmp.lt.s32.totalorder %s17, 1
      %s238 = scalar_select %p237, %s17, 1
      %s239 = scalar_lea.vmem %s4, %s238
      %p240 = scmp.lt.s32.totalorder %s17, 1
      %s241 = scalar_select %p240, %s17, 1
      %s242 = scalar_lea.vmem %s5, %s241
      %v244 = vld [vmem:[%s230] sm:$0xf]
      %v245 = vld [vmem:[%s230 + $0x4] sm:$0xf]
      %v246 = vld [vmem:[%s230 + $0xc] sm:$0xf]
      %v247 = vld [vmem:[%s230 + $0x10] sm:$0xf]
      %v248 = vld [vmem:[%s230 + $0x18] sm:$0xf]
      %v249 = vld [vmem:[%s230 + $0x1c] sm:$0xf]
      %v250 = vld [vmem:[%s230 + $0x24] sm:$0xf]
      %v251 = vld [vmem:[%s230 + $0x28] sm:$0xf]
      %v252 = vld [vmem:[%s230 + $0x30] sm:$0xf]
      %v253 = vld [vmem:[%s230 + $0x34] sm:$0xf]
      %v254 = vld [vmem:[%s230 + $0x3c] sm:$0xf]
      %v255 = vld [vmem:[%s230 + $0x40] sm:$0xf]
      %v256 = vld [vmem:[%s230 + $0x48] sm:$0xf]
      %v257 = vld [vmem:[%s230 + $0x4c] sm:$0xf]
      %v258 = vld [vmem:[%s230 + $0x54] sm:$0xf]
      %v259 = vld [vmem:[%s230 + $0x58] sm:$0xf]
      %v260 = vld [vmem:[%s230 + $0x60] sm:$0xf]
      %v261 = vld [vmem:[%s230 + $0x64] sm:$0xf]
      %v262 = vld [vmem:[%s230 + $0x6c] sm:$0xf]
      %v263 = vld [vmem:[%s230 + $0x70] sm:$0xf]
      %v264 = vld [vmem:[%s230 + $0x78] sm:$0xf]
      %v265 = vld [vmem:[%s230 + $0x7c] sm:$0xf]
      %v266 = vld [vmem:[%s230 + $0x84] sm:$0xf]
      %v267 = vld [vmem:[%s230 + $0x88] sm:$0xf]
      %v268 = vld [vmem:[%s230 + $0x90] sm:$0xf]
      %v269 = vld [vmem:[%s230 + $0x94] sm:$0xf]
      %v270 = vld [vmem:[%s230 + $0x9c] sm:$0xf]
      %v271 = vld [vmem:[%s230 + $0xa0] sm:$0xf]
      %v272 = vld [vmem:[%s230 + $0xa8] sm:$0xf]
      %v273 = vld [vmem:[%s230 + $0xac] sm:$0xf]
      %v274 = vld [vmem:[%s230 + $0xb4] sm:$0xf]
      %v275 = vld [vmem:[%s230 + $0xb8] sm:$0xf]
      %v308 = vunpack.c.l.b16 %v244
      %v309 = vunpack.c.l.b16 %v245
      %v310 = vunpack.c.l.b16 %v246
      %v311 = vunpack.c.l.b16 %v247
      %v312 = vunpack.c.l.b16 %v248
      %v313 = vunpack.c.l.b16 %v249
      %v314 = vunpack.c.l.b16 %v250
      %v315 = vunpack.c.l.b16 %v251
      %v316 = vunpack.c.l.b16 %v252
      %v317 = vunpack.c.l.b16 %v253
      %v318 = vunpack.c.l.b16 %v254
      %v319 = vunpack.c.l.b16 %v255
      %v320 = vunpack.c.l.b16 %v256
      %v321 = vunpack.c.l.b16 %v257
      %v322 = vunpack.c.l.b16 %v258
      %v323 = vunpack.c.l.b16 %v259
      %v324 = vunpack.c.l.b16 %v260
      %v325 = vunpack.c.l.b16 %v261
      %v326 = vunpack.c.l.b16 %v262
      %v327 = vunpack.c.l.b16 %v263
      %v328 = vunpack.c.l.b16 %v264
      %v329 = vunpack.c.l.b16 %v265
      %v330 = vunpack.c.l.b16 %v266
      %v331 = vunpack.c.l.b16 %v267
      %v332 = vunpack.c.l.b16 %v268
      %v333 = vunpack.c.l.b16 %v269
      %v334 = vunpack.c.l.b16 %v270
      %v335 = vunpack.c.l.b16 %v271
      %v336 = vunpack.c.l.b16 %v272
      %v337 = vunpack.c.l.b16 %v273
      %v338 = vunpack.c.l.b16 %v274
      %v339 = vunpack.c.l.b16 %v275
      %v340 = vpack.c.b16 %v309, %v308
      %v341 = vpack.c.b16 %v311, %v310
      %v342 = vpack.c.b16 %v313, %v312
      %v343 = vpack.c.b16 %v315, %v314
      %v344 = vpack.c.b16 %v317, %v316
      %v345 = vpack.c.b16 %v319, %v318
      %v346 = vpack.c.b16 %v321, %v320
      %v347 = vpack.c.b16 %v323, %v322
      %v348 = vpack.c.b16 %v325, %v324
      %v349 = vpack.c.b16 %v327, %v326
      %v350 = vpack.c.b16 %v329, %v328
      %v351 = vpack.c.b16 %v331, %v330
      %v352 = vpack.c.b16 %v333, %v332
      %v353 = vpack.c.b16 %v335, %v334
      %v354 = vpack.c.b16 %v337, %v336
      %v355 = vpack.c.b16 %v339, %v338
      %vm372 = vcmask 64512
      %373 = vst.msk [vmem:[#allocation2] sm:$0xff] %vm372, %v340
      %374 = vst.msk [vmem:[#allocation2 + $0x8] sm:$0xff] %vm372, %v341
      %375 = vst.msk [vmem:[#allocation2 + $0x10] sm:$0xff] %vm372, %v342
      %376 = vst.msk [vmem:[#allocation2 + $0x18] sm:$0xff] %vm372, %v343
      %377 = vst.msk [vmem:[#allocation2 + $0x20] sm:$0xff] %vm372, %v344
      %378 = vst.msk [vmem:[#allocation2 + $0x28] sm:$0xff] %vm372, %v345
      %379 = vst.msk [vmem:[#allocation2 + $0x30] sm:$0xff] %vm372, %v346
      %380 = vst.msk [vmem:[#allocation2 + $0x38] sm:$0xff] %vm372, %v347
      %381 = vst.msk [vmem:[#allocation2 + $0x40] sm:$0xff] %vm372, %v348
      %382 = vst.msk [vmem:[#allocation2 + $0x48] sm:$0xff] %vm372, %v349
      %383 = vst.msk [vmem:[#allocation2 + $0x50] sm:$0xff] %vm372, %v350
      %384 = vst.msk [vmem:[#allocation2 + $0x58] sm:$0xff] %vm372, %v351
      %385 = vst.msk [vmem:[#allocation2 + $0x60] sm:$0xff] %vm372, %v352
      %386 = vst.msk [vmem:[#allocation2 + $0x68] sm:$0xff] %vm372, %v353
      %387 = vst.msk [vmem:[#allocation2 + $0x70] sm:$0xff] %vm372, %v354
      %388 = vst.msk [vmem:[#allocation2 + $0x78] sm:$0xff] %vm372, %v355
      %v389 = vld [vmem:[%s230] sm:$0xf]
      %v390 = vld [vmem:[%s230 + $0x4] sm:$0xf]
      %v391 = vld [vmem:[%s230 + $0x8] sm:$0x1]
      %v392 = vld [vmem:[%s230 + $0xc] sm:$0xf]
      %v393 = vld [vmem:[%s230 + $0x10] sm:$0xf]
      %v394 = vld [vmem:[%s230 + $0x14] sm:$0x1]
      %v395 = vld [vmem:[%s230 + $0x18] sm:$0xf]
      %v396 = vld [vmem:[%s230 + $0x1c] sm:$0xf]
      %v397 = vld [vmem:[%s230 + $0x20] sm:$0x1]
      %v398 = vld [vmem:[%s230 + $0x24] sm:$0xf]
      %v399 = vld [vmem:[%s230 + $0x28] sm:$0xf]
      %v400 = vld [vmem:[%s230 + $0x2c] sm:$0x1]
      %v401 = vld [vmem:[%s230 + $0x30] sm:$0xf]
      %v402 = vld [vmem:[%s230 + $0x34] sm:$0xf]
      %v403 = vld [vmem:[%s230 + $0x38] sm:$0x1]
      %v404 = vld [vmem:[%s230 + $0x3c] sm:$0xf]
      %v405 = vld [vmem:[%s230 + $0x40] sm:$0xf]
      %v406 = vld [vmem:[%s230 + $0x44] sm:$0x1]
      %v407 = vld [vmem:[%s230 + $0x48] sm:$0xf]
      %v408 = vld [vmem:[%s230 + $0x4c] sm:$0xf]
      %v409 = vld [vmem:[%s230 + $0x50] sm:$0x1]
      %v410 = vld [vmem:[%s230 + $0x54] sm:$0xf]
      %v411 = vld [vmem:[%s230 + $0x58] sm:$0xf]
      %v412 = vld [vmem:[%s230 + $0x5c] sm:$0x1]
      %v413 = vld [vmem:[%s230 + $0x60] sm:$0xf]
      %v414 = vld [vmem:[%s230 + $0x64] sm:$0xf]
      %v415 = vld [vmem:[%s230 + $0x68] sm:$0x1]
      %v416 = vld [vmem:[%s230 + $0x6c] sm:$0xf]
      %v417 = vld [vmem:[%s230 + $0x70] sm:$0xf]
      %v418 = vld [vmem:[%s230 + $0x74] sm:$0x1]
      %v419 = vld [vmem:[%s230 + $0x78] sm:$0xf]
      %v420 = vld [vmem:[%s230 + $0x7c] sm:$0xf]
      %v421 = vld [vmem:[%s230 + $0x80] sm:$0x1]
      %v422 = vld [vmem:[%s230 + $0x84] sm:$0xf]
      %v423 = vld [vmem:[%s230 + $0x88] sm:$0xf]
      %v424 = vld [vmem:[%s230 + $0x8c] sm:$0x1]
      %v425 = vld [vmem:[%s230 + $0x90] sm:$0xf]
      %v426 = vld [vmem:[%s230 + $0x94] sm:$0xf]
      %v427 = vld [vmem:[%s230 + $0x98] sm:$0x1]
      %v428 = vld [vmem:[%s230 + $0x9c] sm:$0xf]
      %v429 = vld [vmem:[%s230 + $0xa0] sm:$0xf]
      %v430 = vld [vmem:[%s230 + $0xa4] sm:$0x1]
      %v431 = vld [vmem:[%s230 + $0xa8] sm:$0xf]
      %v432 = vld [vmem:[%s230 + $0xac] sm:$0xf]
      %v433 = vld [vmem:[%s230 + $0xb0] sm:$0x1]
      %v434 = vld [vmem:[%s230 + $0xb4] sm:$0xf]
      %v435 = vld [vmem:[%s230 + $0xb8] sm:$0xf]
      %v436 = vld [vmem:[%s230 + $0xbc] sm:$0x1]
      %vm437 = vsmask.f32 3328
      %vm438 = vsmask.f32 7440
      %vm439 = vmor %vm437, %vm438
      %v441 = vshrl.u32 %v389, 16
      %v443 = vrot.slane %v441, 4
      %v444 = vshll.u32 %v389, 16
      %v446 = vrot.slane %v444, 5
      %v447 = vor.u32 %v443, %v446
      %v448 = vrot.slane %v447, 4
      %v450 = vshll.u32 %v390, 16
      %v452 = vrot.slane %v450, 5
      %v453 = vsel %vm439, %v448, %v452
      %v454 = vshrl.u32 %v390, 16
      %v456 = vrot.slane %v454, 4
      %v457 = vor.u32 %v456, %v452
      %v458 = vrot.slane %v457, 4
      %v460 = vshll.u32 %v391, 16
      %v462 = vrot.slane %v460, 5
      %v463 = vsel %vm439, %v458, %v462
      %v465 = vshrl.u32 %v392, 16
      %v467 = vrot.slane %v465, 4
      %v468 = vshll.u32 %v392, 16
      %v470 = vrot.slane %v468, 5
      %v471 = vor.u32 %v467, %v470
      %v472 = vrot.slane %v471, 4
      %v474 = vshll.u32 %v393, 16
      %v476 = vrot.slane %v474, 5
      %v477 = vsel %vm439, %v472, %v476
      %v478 = vshrl.u32 %v393, 16
      %v480 = vrot.slane %v478, 4
      %v481 = vor.u32 %v480, %v476
      %v482 = vrot.slane %v481, 4
      %v484 = vshll.u32 %v394, 16
      %v486 = vrot.slane %v484, 5
      %v487 = vsel %vm439, %v482, %v486
      %v489 = vshrl.u32 %v395, 16
      %v491 = vrot.slane %v489, 4
      %v492 = vshll.u32 %v395, 16
      %v494 = vrot.slane %v492, 5
      %v495 = vor.u32 %v491, %v494
      %v496 = vrot.slane %v495, 4
      %v498 = vshll.u32 %v396, 16
      %v500 = vrot.slane %v498, 5
      %v501 = vsel %vm439, %v496, %v500
      %v502 = vshrl.u32 %v396, 16
      %v504 = vrot.slane %v502, 4
      %v505 = vor.u32 %v504, %v500
      %v506 = vrot.slane %v505, 4
      %v508 = vshll.u32 %v397, 16
      %v510 = vrot.slane %v508, 5
      %v511 = vsel %vm439, %v506, %v510
      %v513 = vshrl.u32 %v398, 16
      %v515 = vrot.slane %v513, 4
      %v516 = vshll.u32 %v398, 16
      %v518 = vrot.slane %v516, 5
      %v519 = vor.u32 %v515, %v518
      %v520 = vrot.slane %v519, 4
      %v522 = vshll.u32 %v399, 16
      %v524 = vrot.slane %v522, 5
      %v525 = vsel %vm439, %v520, %v524
      %v526 = vshrl.u32 %v399, 16
      %v528 = vrot.slane %v526, 4
      %v529 = vor.u32 %v528, %v524
      %v530 = vrot.slane %v529, 4
      %v532 = vshll.u32 %v400, 16
      %v534 = vrot.slane %v532, 5
      %v535 = vsel %vm439, %v530, %v534
      %v537 = vshrl.u32 %v401, 16
      %v539 = vrot.slane %v537, 4
      %v540 = vshll.u32 %v401, 16
      %v542 = vrot.slane %v540, 5
      %v543 = vor.u32 %v539, %v542
      %v544 = vrot.slane %v543, 4
      %v546 = vshll.u32 %v402, 16
      %v548 = vrot.slane %v546, 5
      %v549 = vsel %vm439, %v544, %v548
      %v550 = vshrl.u32 %v402, 16
      %v552 = vrot.slane %v550, 4
      %v553 = vor.u32 %v552, %v548
      %v554 = vrot.slane %v553, 4
      %v556 = vshll.u32 %v403, 16
      %v558 = vrot.slane %v556, 5
      %v559 = vsel %vm439, %v554, %v558
      %v561 = vshrl.u32 %v404, 16
      %v563 = vrot.slane %v561, 4
      %v564 = vshll.u32 %v404, 16
      %v566 = vrot.slane %v564, 5
      %v567 = vor.u32 %v563, %v566
      %v568 = vrot.slane %v567, 4
      %v570 = vshll.u32 %v405, 16
      %v572 = vrot.slane %v570, 5
      %v573 = vsel %vm439, %v568, %v572
      %v574 = vshrl.u32 %v405, 16
      %v576 = vrot.slane %v574, 4
      %v577 = vor.u32 %v576, %v572
      %v578 = vrot.slane %v577, 4
      %v580 = vshll.u32 %v406, 16
      %v582 = vrot.slane %v580, 5
      %v583 = vsel %vm439, %v578, %v582
      %v585 = vshrl.u32 %v407, 16
      %v587 = vrot.slane %v585, 4
      %v588 = vshll.u32 %v407, 16
      %v590 = vrot.slane %v588, 5
      %v591 = vor.u32 %v587, %v590
      %v592 = vrot.slane %v591, 4
      %v594 = vshll.u32 %v408, 16
      %v596 = vrot.slane %v594, 5
      %v597 = vsel %vm439, %v592, %v596
      %v598 = vshrl.u32 %v408, 16
      %v600 = vrot.slane %v598, 4
      %v601 = vor.u32 %v600, %v596
      %v602 = vrot.slane %v601, 4
      %v604 = vshll.u32 %v409, 16
      %v606 = vrot.slane %v604, 5
      %v607 = vsel %vm439, %v602, %v606
      %v609 = vshrl.u32 %v410, 16
      %v611 = vrot.slane %v609, 4
      %v612 = vshll.u32 %v410, 16
      %v614 = vrot.slane %v612, 5
      %v615 = vor.u32 %v611, %v614
      %v616 = vrot.slane %v615, 4
      %v618 = vshll.u32 %v411, 16
      %v620 = vrot.slane %v618, 5
      %v621 = vsel %vm439, %v616, %v620
      %v622 = vshrl.u32 %v411, 16
      %v624 = vrot.slane %v622, 4
      %v625 = vor.u32 %v624, %v620
      %v626 = vrot.slane %v625, 4
      %v628 = vshll.u32 %v412, 16
      %v630 = vrot.slane %v628, 5
      %v631 = vsel %vm439, %v626, %v630
      %v633 = vshrl.u32 %v413, 16
      %v635 = vrot.slane %v633, 4
      %v636 = vshll.u32 %v413, 16
      %v638 = vrot.slane %v636, 5
      %v639 = vor.u32 %v635, %v638
      %v640 = vrot.slane %v639, 4
      %v642 = vshll.u32 %v414, 16
      %v644 = vrot.slane %v642, 5
      %v645 = vsel %vm439, %v640, %v644
      %v646 = vshrl.u32 %v414, 16
      %v648 = vrot.slane %v646, 4
      %v649 = vor.u32 %v648, %v644
      %v650 = vrot.slane %v649, 4
      %v652 = vshll.u32 %v415, 16
      %v654 = vrot.slane %v652, 5
      %v655 = vsel %vm439, %v650, %v654
      %v657 = vshrl.u32 %v416, 16
      %v659 = vrot.slane %v657, 4
      %v660 = vshll.u32 %v416, 16
      %v662 = vrot.slane %v660, 5
      %v663 = vor.u32 %v659, %v662
      %v664 = vrot.slane %v663, 4
      %v666 = vshll.u32 %v417, 16
      %v668 = vrot.slane %v666, 5
      %v669 = vsel %vm439, %v664, %v668
      %v670 = vshrl.u32 %v417, 16
      %v672 = vrot.slane %v670, 4
      %v673 = vor.u32 %v672, %v668
      %v674 = vrot.slane %v673, 4
      %v676 = vshll.u32 %v418, 16
      %v678 = vrot.slane %v676, 5
      %v679 = vsel %vm439, %v674, %v678
      %v681 = vshrl.u32 %v419, 16
      %v683 = vrot.slane %v681, 4
      %v684 = vshll.u32 %v419, 16
      %v686 = vrot.slane %v684, 5
      %v687 = vor.u32 %v683, %v686
      %v688 = vrot.slane %v687, 4
      %v690 = vshll.u32 %v420, 16
      %v692 = vrot.slane %v690, 5
      %v693 = vsel %vm439, %v688, %v692
      %v694 = vshrl.u32 %v420, 16
      %v696 = vrot.slane %v694, 4
      %v697 = vor.u32 %v696, %v692
      %v698 = vrot.slane %v697, 4
      %v700 = vshll.u32 %v421, 16
      %v702 = vrot.slane %v700, 5
      %v703 = vsel %vm439, %v698, %v702
      %v705 = vshrl.u32 %v422, 16
      %v707 = vrot.slane %v705, 4
      %v708 = vshll.u32 %v422, 16
      %v710 = vrot.slane %v708, 5
      %v711 = vor.u32 %v707, %v710
      %v712 = vrot.slane %v711, 4
      %v714 = vshll.u32 %v423, 16
      %v716 = vrot.slane %v714, 5
      %v717 = vsel %vm439, %v712, %v716
      %v718 = vshrl.u32 %v423, 16
      %v720 = vrot.slane %v718, 4
      %v721 = vor.u32 %v720, %v716
      %v722 = vrot.slane %v721, 4
      %v724 = vshll.u32 %v424, 16
      %v726 = vrot.slane %v724, 5
      %v727 = vsel %vm439, %v722, %v726
      %v729 = vshrl.u32 %v425, 16
      %v731 = vrot.slane %v729, 4
      %v732 = vshll.u32 %v425, 16
      %v734 = vrot.slane %v732, 5
      %v735 = vor.u32 %v731, %v734
      %v736 = vrot.slane %v735, 4
      %v738 = vshll.u32 %v426, 16
      %v740 = vrot.slane %v738, 5
      %v741 = vsel %vm439, %v736, %v740
      %v742 = vshrl.u32 %v426, 16
      %v744 = vrot.slane %v742, 4
      %v745 = vor.u32 %v744, %v740
      %v746 = vrot.slane %v745, 4
      %v748 = vshll.u32 %v427, 16
      %v750 = vrot.slane %v748, 5
      %v751 = vsel %vm439, %v746, %v750
      %v753 = vshrl.u32 %v428, 16
      %v755 = vrot.slane %v753, 4
      %v756 = vshll.u32 %v428, 16
      %v758 = vrot.slane %v756, 5
      %v759 = vor.u32 %v755, %v758
      %v760 = vrot.slane %v759, 4
      %v762 = vshll.u32 %v429, 16
      %v764 = vrot.slane %v762, 5
      %v765 = vsel %vm439, %v760, %v764
      %v766 = vshrl.u32 %v429, 16
      %v768 = vrot.slane %v766, 4
      %v769 = vor.u32 %v768, %v764
      %v770 = vrot.slane %v769, 4
      %v772 = vshll.u32 %v430, 16
      %v774 = vrot.slane %v772, 5
      %v775 = vsel %vm439, %v770, %v774
      %v777 = vshrl.u32 %v431, 16
      %v779 = vrot.slane %v777, 4
      %v780 = vshll.u32 %v431, 16
      %v782 = vrot.slane %v780, 5
      %v783 = vor.u32 %v779, %v782
      %v784 = vrot.slane %v783, 4
      %v786 = vshll.u32 %v432, 16
      %v788 = vrot.slane %v786, 5
      %v789 = vsel %vm439, %v784, %v788
      %v790 = vshrl.u32 %v432, 16
      %v792 = vrot.slane %v790, 4
      %v793 = vor.u32 %v792, %v788
      %v794 = vrot.slane %v793, 4
      %v796 = vshll.u32 %v433, 16
      %v798 = vrot.slane %v796, 5
      %v799 = vsel %vm439, %v794, %v798
      %v801 = vshrl.u32 %v434, 16
      %v803 = vrot.slane %v801, 4
      %v804 = vshll.u32 %v434, 16
      %v806 = vrot.slane %v804, 5
      %v807 = vor.u32 %v803, %v806
      %v808 = vrot.slane %v807, 4
      %v810 = vshll.u32 %v435, 16
      %v812 = vrot.slane %v810, 5
      %v813 = vsel %vm439, %v808, %v812
      %v814 = vshrl.u32 %v435, 16
      %v816 = vrot.slane %v814, 4
      %v817 = vor.u32 %v816, %v812
      %v818 = vrot.slane %v817, 4
      %v820 = vshll.u32 %v436, 16
      %v822 = vrot.slane %v820, 5
      %v823 = vsel %vm439, %v818, %v822
      %v824 = vunpack.c.l.b16 %v453
      %v825 = vunpack.c.l.b16 %v463
      %v826 = vunpack.c.l.b16 %v477
      %v827 = vunpack.c.l.b16 %v487
      %v828 = vunpack.c.l.b16 %v501
      %v829 = vunpack.c.l.b16 %v511
      %v830 = vunpack.c.l.b16 %v525
      %v831 = vunpack.c.l.b16 %v535
      %v832 = vunpack.c.l.b16 %v549
      %v833 = vunpack.c.l.b16 %v559
      %v834 = vunpack.c.l.b16 %v573
      %v835 = vunpack.c.l.b16 %v583
      %v836 = vunpack.c.l.b16 %v597
      %v837 = vunpack.c.l.b16 %v607
      %v838 = vunpack.c.l.b16 %v621
      %v839 = vunpack.c.l.b16 %v631
      %v840 = vunpack.c.l.b16 %v645
      %v841 = vunpack.c.l.b16 %v655
      %v842 = vunpack.c.l.b16 %v669
      %v843 = vunpack.c.l.b16 %v679
      %v844 = vunpack.c.l.b16 %v693
      %v845 = vunpack.c.l.b16 %v703
      %v846 = vunpack.c.l.b16 %v717
      %v847 = vunpack.c.l.b16 %v727
      %v848 = vunpack.c.l.b16 %v741
      %v849 = vunpack.c.l.b16 %v751
      %v850 = vunpack.c.l.b16 %v765
      %v851 = vunpack.c.l.b16 %v775
      %v852 = vunpack.c.l.b16 %v789
      %v853 = vunpack.c.l.b16 %v799
      %v854 = vunpack.c.l.b16 %v813
      %v855 = vunpack.c.l.b16 %v823
      %v856 = vpack.c.b16 %v825, %v824
      %v857 = vpack.c.b16 %v827, %v826
      %v858 = vpack.c.b16 %v829, %v828
      %v859 = vpack.c.b16 %v831, %v830
      %v860 = vpack.c.b16 %v833, %v832
      %v861 = vpack.c.b16 %v835, %v834
      %v862 = vpack.c.b16 %v837, %v836
      %v863 = vpack.c.b16 %v839, %v838
      %v864 = vpack.c.b16 %v841, %v840
      %v865 = vpack.c.b16 %v843, %v842
      %v866 = vpack.c.b16 %v845, %v844
      %v867 = vpack.c.b16 %v847, %v846
      %v868 = vpack.c.b16 %v849, %v848
      %v869 = vpack.c.b16 %v851, %v850
      %v870 = vpack.c.b16 %v853, %v852
      %v871 = vpack.c.b16 %v855, %v854
      %872 = vrot.lane.b32.xlu0 %v856, 8
      %v873 = vpop.permute.xlu0 %872
      %874 = vrot.lane.b32.xlu0 %v857, 8
      %v875 = vpop.permute.xlu0 %874
      %876 = vrot.lane.b32.xlu0 %v858, 8
      %v877 = vpop.permute.xlu0 %876
      %878 = vrot.lane.b32.xlu0 %v859, 8
      %v879 = vpop.permute.xlu0 %878
      %880 = vrot.lane.b32.xlu0 %v860, 8
      %v881 = vpop.permute.xlu0 %880
      %882 = vrot.lane.b32.xlu0 %v861, 8
      %v883 = vpop.permute.xlu0 %882
      %884 = vrot.lane.b32.xlu0 %v862, 8
      %v885 = vpop.permute.xlu0 %884
      %886 = vrot.lane.b32.xlu0 %v863, 8
      %v887 = vpop.permute.xlu0 %886
      %888 = vrot.lane.b32.xlu0 %v864, 8
      %v889 = vpop.permute.xlu0 %888
      %890 = vrot.lane.b32.xlu0 %v865, 8
      %v891 = vpop.permute.xlu0 %890
      %892 = vrot.lane.b32.xlu0 %v866, 8
      %v893 = vpop.permute.xlu0 %892
      %894 = vrot.lane.b32.xlu0 %v867, 8
      %v895 = vpop.permute.xlu0 %894
      %896 = vrot.lane.b32.xlu0 %v868, 8
      %v897 = vpop.permute.xlu0 %896
      %898 = vrot.lane.b32.xlu0 %v869, 8
      %v899 = vpop.permute.xlu0 %898
      %900 = vrot.lane.b32.xlu0 %v870, 8
      %v901 = vpop.permute.xlu0 %900
      %902 = vrot.lane.b32.xlu0 %v871, 8
      %v903 = vpop.permute.xlu0 %902
      %vm920 = vcmask 130112
      %921 = vst.msk [vmem:[#allocation2] sm:$0xff] %vm920, %v873
      %922 = vst.msk [vmem:[#allocation2 + $0x8] sm:$0xff] %vm920, %v875
      %923 = vst.msk [vmem:[#allocation2 + $0x10] sm:$0xff] %vm920, %v877
      %924 = vst.msk [vmem:[#allocation2 + $0x18] sm:$0xff] %vm920, %v879
      %925 = vst.msk [vmem:[#allocation2 + $0x20] sm:$0xff] %vm920, %v881
      %926 = vst.msk [vmem:[#allocation2 + $0x28] sm:$0xff] %vm920, %v883
      %927 = vst.msk [vmem:[#allocation2 + $0x30] sm:$0xff] %vm920, %v885
      %928 = vst.msk [vmem:[#allocation2 + $0x38] sm:$0xff] %vm920, %v887
      %929 = vst.msk [vmem:[#allocation2 + $0x40] sm:$0xff] %vm920, %v889
      %930 = vst.msk [vmem:[#allocation2 + $0x48] sm:$0xff] %vm920, %v891
      %931 = vst.msk [vmem:[#allocation2 + $0x50] sm:$0xff] %vm920, %v893
      %932 = vst.msk [vmem:[#allocation2 + $0x58] sm:$0xff] %vm920, %v895
      %933 = vst.msk [vmem:[#allocation2 + $0x60] sm:$0xff] %vm920, %v897
      %934 = vst.msk [vmem:[#allocation2 + $0x68] sm:$0xff] %vm920, %v899
      %935 = vst.msk [vmem:[#allocation2 + $0x70] sm:$0xff] %vm920, %v901
      %936 = vst.msk [vmem:[#allocation2 + $0x78] sm:$0xff] %vm920, %v903
      %v937 = vld [vmem:[%s230] sm:$0xe]
      %v938 = vld [vmem:[%s230 + $0x4] sm:$0xf]
      %v939 = vld [vmem:[%s230 + $0x8] sm:$0x1]
      %v940 = vld [vmem:[%s230 + $0xc] sm:$0xe]
      %v941 = vld [vmem:[%s230 + $0x10] sm:$0xf]
      %v942 = vld [vmem:[%s230 + $0x14] sm:$0x1]
      %v943 = vld [vmem:[%s230 + $0x18] sm:$0xe]
      %v944 = vld [vmem:[%s230 + $0x1c] sm:$0xf]
      %v945 = vld [vmem:[%s230 + $0x20] sm:$0x1]
      %v946 = vld [vmem:[%s230 + $0x24] sm:$0xe]
      %v947 = vld [vmem:[%s230 + $0x28] sm:$0xf]
      %v948 = vld [vmem:[%s230 + $0x2c] sm:$0x1]
      %v949 = vld [vmem:[%s230 + $0x30] sm:$0xe]
      %v950 = vld [vmem:[%s230 + $0x34] sm:$0xf]
      %v951 = vld [vmem:[%s230 + $0x38] sm:$0x1]
      %v952 = vld [vmem:[%s230 + $0x3c] sm:$0xe]
      %v953 = vld [vmem:[%s230 + $0x40] sm:$0xf]
      %v954 = vld [vmem:[%s230 + $0x44] sm:$0x1]
      %v955 = vld [vmem:[%s230 + $0x48] sm:$0xe]
      %v956 = vld [vmem:[%s230 + $0x4c] sm:$0xf]
      %v957 = vld [vmem:[%s230 + $0x50] sm:$0x1]
      %v958 = vld [vmem:[%s230 + $0x54] sm:$0xe]
      %v959 = vld [vmem:[%s230 + $0x58] sm:$0xf]
      %v960 = vld [vmem:[%s230 + $0x5c] sm:$0x1]
      %v961 = vld [vmem:[%s230 + $0x60] sm:$0xe]
      %v962 = vld [vmem:[%s230 + $0x64] sm:$0xf]
      %v963 = vld [vmem:[%s230 + $0x68] sm:$0x1]
      %v964 = vld [vmem:[%s230 + $0x6c] sm:$0xe]
      %v965 = vld [vmem:[%s230 + $0x70] sm:$0xf]
      %v966 = vld [vmem:[%s230 + $0x74] sm:$0x1]
      %v967 = vld [vmem:[%s230 + $0x78] sm:$0xe]
      %v968 = vld [vmem:[%s230 + $0x7c] sm:$0xf]
      %v969 = vld [vmem:[%s230 + $0x80] sm:$0x1]
      %v970 = vld [vmem:[%s230 + $0x84] sm:$0xe]
      %v971 = vld [vmem:[%s230 + $0x88] sm:$0xf]
      %v972 = vld [vmem:[%s230 + $0x8c] sm:$0x1]
      %v973 = vld [vmem:[%s230 + $0x90] sm:$0xe]
      %v974 = vld [vmem:[%s230 + $0x94] sm:$0xf]
      %v975 = vld [vmem:[%s230 + $0x98] sm:$0x1]
      %v976 = vld [vmem:[%s230 + $0x9c] sm:$0xe]
      %v977 = vld [vmem:[%s230 + $0xa0] sm:$0xf]
      %v978 = vld [vmem:[%s230 + $0xa4] sm:$0x1]
      %v979 = vld [vmem:[%s230 + $0xa8] sm:$0xe]
      %v980 = vld [vmem:[%s230 + $0xac] sm:$0xf]
      %v981 = vld [vmem:[%s230 + $0xb0] sm:$0x1]
      %v982 = vld [vmem:[%s230 + $0xb4] sm:$0xe]
      %v983 = vld [vmem:[%s230 + $0xb8] sm:$0xf]
      %v984 = vld [vmem:[%s230 + $0xbc] sm:$0x1]
      %vm1033 = vcmask 1042432
      %vm1034 = vcmask 1046532
      %vm1035 = vmor %vm1033, %vm1034
      %v1036 = vrot.slane %v937, 5
      %v1037 = vrot.slane %v1036, 4
      %v1038 = vrot.slane %v938, 5
      %v1039 = vsel %vm1035, %v1037, %v1038
      %v1040 = vrot.slane %v1038, 4
      %v1041 = vrot.slane %v939, 5
      %v1042 = vsel %vm1035, %v1040, %v1041
      %v1043 = vrot.slane %v940, 5
      %v1044 = vrot.slane %v1043, 4
      %v1045 = vrot.slane %v941, 5
      %v1046 = vsel %vm1035, %v1044, %v1045
      %v1047 = vrot.slane %v1045, 4
      %v1048 = vrot.slane %v942, 5
      %v1049 = vsel %vm1035, %v1047, %v1048
      %v1050 = vrot.slane %v943, 5
      %v1051 = vrot.slane %v1050, 4
      %v1052 = vrot.slane %v944, 5
      %v1053 = vsel %vm1035, %v1051, %v1052
      %v1054 = vrot.slane %v1052, 4
      %v1055 = vrot.slane %v945, 5
      %v1056 = vsel %vm1035, %v1054, %v1055
      %v1057 = vrot.slane %v946, 5
      %v1058 = vrot.slane %v1057, 4
      %v1059 = vrot.slane %v947, 5
      %v1060 = vsel %vm1035, %v1058, %v1059
      %v1061 = vrot.slane %v1059, 4
      %v1062 = vrot.slane %v948, 5
      %v1063 = vsel %vm1035, %v1061, %v1062
      %v1064 = vrot.slane %v949, 5
      %v1065 = vrot.slane %v1064, 4
      %v1066 = vrot.slane %v950, 5
      %v1067 = vsel %vm1035, %v1065, %v1066
      %v1068 = vrot.slane %v1066, 4
      %v1069 = vrot.slane %v951, 5
      %v1070 = vsel %vm1035, %v1068, %v1069
      %v1071 = vrot.slane %v952, 5
      %v1072 = vrot.slane %v1071, 4
      %v1073 = vrot.slane %v953, 5
      %v1074 = vsel %vm1035, %v1072, %v1073
      %v1075 = vrot.slane %v1073, 4
      %v1076 = vrot.slane %v954, 5
      %v1077 = vsel %vm1035, %v1075, %v1076
      %v1078 = vrot.slane %v955, 5
      %v1079 = vrot.slane %v1078, 4
      %v1080 = vrot.slane %v956, 5
      %v1081 = vsel %vm1035, %v1079, %v1080
      %v1082 = vrot.slane %v1080, 4
      %v1083 = vrot.slane %v957, 5
      %v1084 = vsel %vm1035, %v1082, %v1083
      %v1085 = vrot.slane %v958, 5
      %v1086 = vrot.slane %v1085, 4
      %v1087 = vrot.slane %v959, 5
      %v1088 = vsel %vm1035, %v1086, %v1087
      %v1089 = vrot.slane %v1087, 4
      %v1090 = vrot.slane %v960, 5
      %v1091 = vsel %vm1035, %v1089, %v1090
      %v1092 = vrot.slane %v961, 5
      %v1093 = vrot.slane %v1092, 4
      %v1094 = vrot.slane %v962, 5
      %v1095 = vsel %vm1035, %v1093, %v1094
      %v1096 = vrot.slane %v1094, 4
      %v1097 = vrot.slane %v963, 5
      %v1098 = vsel %vm1035, %v1096, %v1097
      %v1099 = vrot.slane %v964, 5
      %v1100 = vrot.slane %v1099, 4
      %v1101 = vrot.slane %v965, 5
      %v1102 = vsel %vm1035, %v1100, %v1101
      %v1103 = vrot.slane %v1101, 4
      %v1104 = vrot.slane %v966, 5
      %v1105 = vsel %vm1035, %v1103, %v1104
      %v1106 = vrot.slane %v967, 5
      %v1107 = vrot.slane %v1106, 4
      %v1108 = vrot.slane %v968, 5
      %v1109 = vsel %vm1035, %v1107, %v1108
      %v1110 = vrot.slane %v1108, 4
      %v1111 = vrot.slane %v969, 5
      %v1112 = vsel %vm1035, %v1110, %v1111
      %v1113 = vrot.slane %v970, 5
      %v1114 = vrot.slane %v1113, 4
      %v1115 = vrot.slane %v971, 5
      %v1116 = vsel %vm1035, %v1114, %v1115
      %v1117 = vrot.slane %v1115, 4
      %v1118 = vrot.slane %v972, 5
      %v1119 = vsel %vm1035, %v1117, %v1118
      %v1120 = vrot.slane %v973, 5
      %v1121 = vrot.slane %v1120, 4
      %v1122 = vrot.slane %v974, 5
      %v1123 = vsel %vm1035, %v1121, %v1122
      %v1124 = vrot.slane %v1122, 4
      %v1125 = vrot.slane %v975, 5
      %v1126 = vsel %vm1035, %v1124, %v1125
      %v1127 = vrot.slane %v976, 5
      %v1128 = vrot.slane %v1127, 4
      %v1129 = vrot.slane %v977, 5
      %v1130 = vsel %vm1035, %v1128, %v1129
      %v1131 = vrot.slane %v1129, 4
      %v1132 = vrot.slane %v978, 5
      %v1133 = vsel %vm1035, %v1131, %v1132
      %v1134 = vrot.slane %v979, 5
      %v1135 = vrot.slane %v1134, 4
      %v1136 = vrot.slane %v980, 5
      %v1137 = vsel %vm1035, %v1135, %v1136
      %v1138 = vrot.slane %v1136, 4
      %v1139 = vrot.slane %v981, 5
      %v1140 = vsel %vm1035, %v1138, %v1139
      %v1141 = vrot.slane %v982, 5
      %v1142 = vrot.slane %v1141, 4
      %v1143 = vrot.slane %v983, 5
      %v1144 = vsel %vm1035, %v1142, %v1143
      %v1145 = vrot.slane %v1143, 4
      %v1146 = vrot.slane %v984, 5
      %v1147 = vsel %vm1035, %v1145, %v1146
      %v1148 = vunpack.c.l.b16 %v1039
      %v1149 = vunpack.c.l.b16 %v1042
      %v1150 = vunpack.c.l.b16 %v1046
      %v1151 = vunpack.c.l.b16 %v1049
      %v1152 = vunpack.c.l.b16 %v1053
      %v1153 = vunpack.c.l.b16 %v1056
      %v1154 = vunpack.c.l.b16 %v1060
      %v1155 = vunpack.c.l.b16 %v1063
      %v1156 = vunpack.c.l.b16 %v1067
      %v1157 = vunpack.c.l.b16 %v1070
      %v1158 = vunpack.c.l.b16 %v1074
      %v1159 = vunpack.c.l.b16 %v1077
      %v1160 = vunpack.c.l.b16 %v1081
      %v1161 = vunpack.c.l.b16 %v1084
      %v1162 = vunpack.c.l.b16 %v1088
      %v1163 = vunpack.c.l.b16 %v1091
      %v1164 = vunpack.c.l.b16 %v1095
      %v1165 = vunpack.c.l.b16 %v1098
      %v1166 = vunpack.c.l.b16 %v1102
      %v1167 = vunpack.c.l.b16 %v1105
      %v1168 = vunpack.c.l.b16 %v1109
      %v1169 = vunpack.c.l.b16 %v1112
      %v1170 = vunpack.c.l.b16 %v1116
      %v1171 = vunpack.c.l.b16 %v1119
      %v1172 = vunpack.c.l.b16 %v1123
      %v1173 = vunpack.c.l.b16 %v1126
      %v1174 = vunpack.c.l.b16 %v1130
      %v1175 = vunpack.c.l.b16 %v1133
      %v1176 = vunpack.c.l.b16 %v1137
      %v1177 = vunpack.c.l.b16 %v1140
      %v1178 = vunpack.c.l.b16 %v1144
      %v1179 = vunpack.c.l.b16 %v1147
      %v1180 = vpack.c.b16 %v1149, %v1148
      %v1181 = vpack.c.b16 %v1151, %v1150
      %v1182 = vpack.c.b16 %v1153, %v1152
      %v1183 = vpack.c.b16 %v1155, %v1154
      %v1184 = vpack.c.b16 %v1157, %v1156
      %v1185 = vpack.c.b16 %v1159, %v1158
      %v1186 = vpack.c.b16 %v1161, %v1160
      %v1187 = vpack.c.b16 %v1163, %v1162
      %v1188 = vpack.c.b16 %v1165, %v1164
      %v1189 = vpack.c.b16 %v1167, %v1166
      %v1190 = vpack.c.b16 %v1169, %v1168
      %v1191 = vpack.c.b16 %v1171, %v1170
      %v1192 = vpack.c.b16 %v1173, %v1172
      %v1193 = vpack.c.b16 %v1175, %v1174
      %v1194 = vpack.c.b16 %v1177, %v1176
      %v1195 = vpack.c.b16 %v1179, %v1178
      %1196 = vrot.lane.b32.xlu0 %v1180, 16
      %v1197 = vpop.permute.xlu0 %1196
      %1198 = vrot.lane.b32.xlu0 %v1181, 16
      %v1199 = vpop.permute.xlu0 %1198
      %1200 = vrot.lane.b32.xlu0 %v1182, 16
      %v1201 = vpop.permute.xlu0 %1200
      %1202 = vrot.lane.b32.xlu0 %v1183, 16
      %v1203 = vpop.permute.xlu0 %1202
      %1204 = vrot.lane.b32.xlu0 %v1184, 16
      %v1205 = vpop.permute.xlu0 %1204
      %1206 = vrot.lane.b32.xlu0 %v1185, 16
      %v1207 = vpop.permute.xlu0 %1206
      %1208 = vrot.lane.b32.xlu0 %v1186, 16
      %v1209 = vpop.permute.xlu0 %1208
      %1210 = vrot.lane.b32.xlu0 %v1187, 16
      %v1211 = vpop.permute.xlu0 %1210
      %1212 = vrot.lane.b32.xlu0 %v1188, 16
      %v1213 = vpop.permute.xlu0 %1212
      %1214 = vrot.lane.b32.xlu0 %v1189, 16
      %v1215 = vpop.permute.xlu0 %1214
      %1216 = vrot.lane.b32.xlu0 %v1190, 16
      %v1217 = vpop.permute.xlu0 %1216
      %1218 = vrot.lane.b32.xlu0 %v1191, 16
      %v1219 = vpop.permute.xlu0 %1218
      %1220 = vrot.lane.b32.xlu0 %v1192, 16
      %v1221 = vpop.permute.xlu0 %1220
      %1222 = vrot.lane.b32.xlu0 %v1193, 16
      %v1223 = vpop.permute.xlu0 %1222
      %1224 = vrot.lane.b32.xlu0 %v1194, 16
      %v1225 = vpop.permute.xlu0 %1224
      %1226 = vrot.lane.b32.xlu0 %v1195, 16
      %v1227 = vpop.permute.xlu0 %1226
      %vm1244 = vcmask 195712
      %1245 = vst.msk [vmem:[#allocation2] sm:$0xff] %vm1244, %v1197
      %1246 = vst.msk [vmem:[#allocation2 + $0x8] sm:$0xff] %vm1244, %v1199
      %1247 = vst.msk [vmem:[#allocation2 + $0x10] sm:$0xff] %vm1244, %v1201
      %1248 = vst.msk [vmem:[#allocation2 + $0x18] sm:$0xff] %vm1244, %v1203
      %1249 = vst.msk [vmem:[#allocation2 + $0x20] sm:$0xff] %vm1244, %v1205
      %1250 = vst.msk [vmem:[#allocation2 + $0x28] sm:$0xff] %vm1244, %v1207
      %1251 = vst.msk [vmem:[#allocation2 + $0x30] sm:$0xff] %vm1244, %v1209
      %1252 = vst.msk [vmem:[#allocation2 + $0x38] sm:$0xff] %vm1244, %v1211
      %1253 = vst.msk [vmem:[#allocation2 + $0x40] sm:$0xff] %vm1244, %v1213
      %1254 = vst.msk [vmem:[#allocation2 + $0x48] sm:$0xff] %vm1244, %v1215
      %1255 = vst.msk [vmem:[#allocation2 + $0x50] sm:$0xff] %vm1244, %v1217
      %1256 = vst.msk [vmem:[#allocation2 + $0x58] sm:$0xff] %vm1244, %v1219
      %1257 = vst.msk [vmem:[#allocation2 + $0x60] sm:$0xff] %vm1244, %v1221
      %1258 = vst.msk [vmem:[#allocation2 + $0x68] sm:$0xff] %vm1244, %v1223
      %1259 = vst.msk [vmem:[#allocation2 + $0x70] sm:$0xff] %vm1244, %v1225
      %1260 = vst.msk [vmem:[#allocation2 + $0x78] sm:$0xff] %vm1244, %v1227
      %s1261 = scalar_lea.vmem %s230, 12
      %v1262 = vld [vmem:[%s1261] sm:$0xf]
      %v1263 = vld [vmem:[%s1261 + $0x4] sm:$0xf]
      %v1264 = vld [vmem:[%s1261 + $0xc] sm:$0xf]
      %v1265 = vld [vmem:[%s1261 + $0x10] sm:$0xf]
      %v1266 = vld [vmem:[%s1261 + $0x18] sm:$0xf]
      %v1267 = vld [vmem:[%s1261 + $0x1c] sm:$0xf]
      %v1268 = vld [vmem:[%s1261 + $0x24] sm:$0xf]
      %v1269 = vld [vmem:[%s1261 + $0x28] sm:$0xf]
      %v1270 = vld [vmem:[%s1261 + $0x30] sm:$0xf]
      %v1271 = vld [vmem:[%s1261 + $0x34] sm:$0xf]
      %v1272 = vld [vmem:[%s1261 + $0x3c] sm:$0xf]
      %v1273 = vld [vmem:[%s1261 + $0x40] sm:$0xf]
      %v1274 = vld [vmem:[%s1261 + $0x48] sm:$0xf]
      %v1275 = vld [vmem:[%s1261 + $0x4c] sm:$0xf]
      %v1276 = vld [vmem:[%s1261 + $0x54] sm:$0xf]
      %v1277 = vld [vmem:[%s1261 + $0x58] sm:$0xf]
      %v1278 = vld [vmem:[%s1261 + $0x60] sm:$0xf]
      %v1279 = vld [vmem:[%s1261 + $0x64] sm:$0xf]
      %v1280 = vld [vmem:[%s1261 + $0x6c] sm:$0xf]
      %v1281 = vld [vmem:[%s1261 + $0x70] sm:$0xf]
      %v1282 = vld [vmem:[%s1261 + $0x78] sm:$0xf]
      %v1283 = vld [vmem:[%s1261 + $0x7c] sm:$0xf]
      %v1284 = vld [vmem:[%s1261 + $0x84] sm:$0xf]
      %v1285 = vld [vmem:[%s1261 + $0x88] sm:$0xf]
      %v1286 = vld [vmem:[%s1261 + $0x90] sm:$0xf]
      %v1287 = vld [vmem:[%s1261 + $0x94] sm:$0xf]
      %v1288 = vld [vmem:[%s1261 + $0x9c] sm:$0xf]
      %v1289 = vld [vmem:[%s1261 + $0xa0] sm:$0xf]
      %v1290 = vld [vmem:[%s1261 + $0xa8] sm:$0xf]
      %v1291 = vld [vmem:[%s1261 + $0xac] sm:$0xf]
      %v1292 = vld [vmem:[%s1261 + $0xb4] sm:$0xf]
      %v1293 = vld [vmem:[%s1261 + $0xb8] sm:$0xf]
      %v1326 = vunpack.c.l.b16 %v1262
      %v1327 = vunpack.c.l.b16 %v1263
      %v1328 = vunpack.c.l.b16 %v1264
      %v1329 = vunpack.c.l.b16 %v1265
      %v1330 = vunpack.c.l.b16 %v1266
      %v1331 = vunpack.c.l.b16 %v1267
      %v1332 = vunpack.c.l.b16 %v1268
      %v1333 = vunpack.c.l.b16 %v1269
      %v1334 = vunpack.c.l.b16 %v1270
      %v1335 = vunpack.c.l.b16 %v1271
      %v1336 = vunpack.c.l.b16 %v1272
      %v1337 = vunpack.c.l.b16 %v1273
      %v1338 = vunpack.c.l.b16 %v1274
      %v1339 = vunpack.c.l.b16 %v1275
      %v1340 = vunpack.c.l.b16 %v1276
      %v1341 = vunpack.c.l.b16 %v1277
      %v1342 = vunpack.c.l.b16 %v1278
      %v1343 = vunpack.c.l.b16 %v1279
      %v1344 = vunpack.c.l.b16 %v1280
      %v1345 = vunpack.c.l.b16 %v1281
      %v1346 = vunpack.c.l.b16 %v1282
      %v1347 = vunpack.c.l.b16 %v1283
      %v1348 = vunpack.c.l.b16 %v1284
      %v1349 = vunpack.c.l.b16 %v1285
      %v1350 = vunpack.c.l.b16 %v1286
      %v1351 = vunpack.c.l.b16 %v1287
      %v1352 = vunpack.c.l.b16 %v1288
      %v1353 = vunpack.c.l.b16 %v1289
      %v1354 = vunpack.c.l.b16 %v1290
      %v1355 = vunpack.c.l.b16 %v1291
      %v1356 = vunpack.c.l.b16 %v1292
      %v1357 = vunpack.c.l.b16 %v1293
      %v1358 = vpack.c.b16 %v1327, %v1326
      %v1359 = vpack.c.b16 %v1329, %v1328
      %v1360 = vpack.c.b16 %v1331, %v1330
      %v1361 = vpack.c.b16 %v1333, %v1332
      %v1362 = vpack.c.b16 %v1335, %v1334
      %v1363 = vpack.c.b16 %v1337, %v1336
      %v1364 = vpack.c.b16 %v1339, %v1338
      %v1365 = vpack.c.b16 %v1341, %v1340
      %v1366 = vpack.c.b16 %v1343, %v1342
      %v1367 = vpack.c.b16 %v1345, %v1344
      %v1368 = vpack.c.b16 %v1347, %v1346
      %v1369 = vpack.c.b16 %v1349, %v1348
      %v1370 = vpack.c.b16 %v1351, %v1350
      %v1371 = vpack.c.b16 %v1353, %v1352
      %v1372 = vpack.c.b16 %v1355, %v1354
      %v1373 = vpack.c.b16 %v1357, %v1356
      %1374 = vrot.lane.b32.xlu0 %v1358, 24
      %v1375 = vpop.permute.xlu0 %1374
      %1376 = vrot.lane.b32.xlu0 %v1359, 24
      %v1377 = vpop.permute.xlu0 %1376
      %1378 = vrot.lane.b32.xlu0 %v1360, 24
      %v1379 = vpop.permute.xlu0 %1378
      %1380 = vrot.lane.b32.xlu0 %v1361, 24
      %v1381 = vpop.permute.xlu0 %1380
      %1382 = vrot.lane.b32.xlu0 %v1362, 24
      %v1383 = vpop.permute.xlu0 %1382
      %1384 = vrot.lane.b32.xlu0 %v1363, 24
      %v1385 = vpop.permute.xlu0 %1384
      %1386 = vrot.lane.b32.xlu0 %v1364, 24
      %v1387 = vpop.permute.xlu0 %1386
      %1388 = vrot.lane.b32.xlu0 %v1365, 24
      %v1389 = vpop.permute.xlu0 %1388
      %1390 = vrot.lane.b32.xlu0 %v1366, 24
      %v1391 = vpop.permute.xlu0 %1390
      %1392 = vrot.lane.b32.xlu0 %v1367, 24
      %v1393 = vpop.permute.xlu0 %1392
      %1394 = vrot.lane.b32.xlu0 %v1368, 24
      %v1395 = vpop.permute.xlu0 %1394
      %1396 = vrot.lane.b32.xlu0 %v1369, 24
      %v1397 = vpop.permute.xlu0 %1396
      %1398 = vrot.lane.b32.xlu0 %v1370, 24
      %v1399 = vpop.permute.xlu0 %1398
      %1400 = vrot.lane.b32.xlu0 %v1371, 24
      %v1401 = vpop.permute.xlu0 %1400
      %1402 = vrot.lane.b32.xlu0 %v1372, 24
      %v1403 = vpop.permute.xlu0 %1402
      %1404 = vrot.lane.b32.xlu0 %v1373, 24
      %v1405 = vpop.permute.xlu0 %1404
      %vm1422 = vcmask 261312
      %1423 = vst.msk [vmem:[#allocation2] sm:$0xff] %vm1422, %v1375
      %1424 = vst.msk [vmem:[#allocation2 + $0x8] sm:$0xff] %vm1422, %v1377
      %1425 = vst.msk [vmem:[#allocation2 + $0x10] sm:$0xff] %vm1422, %v1379
      %1426 = vst.msk [vmem:[#allocation2 + $0x18] sm:$0xff] %vm1422, %v1381
      %1427 = vst.msk [vmem:[#allocation2 + $0x20] sm:$0xff] %vm1422, %v1383
      %1428 = vst.msk [vmem:[#allocation2 + $0x28] sm:$0xff] %vm1422, %v1385
      %1429 = vst.msk [vmem:[#allocation2 + $0x30] sm:$0xff] %vm1422, %v1387
      %1430 = vst.msk [vmem:[#allocation2 + $0x38] sm:$0xff] %vm1422, %v1389
      %1431 = vst.msk [vmem:[#allocation2 + $0x40] sm:$0xff] %vm1422, %v1391
      %1432 = vst.msk [vmem:[#allocation2 + $0x48] sm:$0xff] %vm1422, %v1393
      %1433 = vst.msk [vmem:[#allocation2 + $0x50] sm:$0xff] %vm1422, %v1395
      %1434 = vst.msk [vmem:[#allocation2 + $0x58] sm:$0xff] %vm1422, %v1397
      %1435 = vst.msk [vmem:[#allocation2 + $0x60] sm:$0xff] %vm1422, %v1399
      %1436 = vst.msk [vmem:[#allocation2 + $0x68] sm:$0xff] %vm1422, %v1401
      %1437 = vst.msk [vmem:[#allocation2 + $0x70] sm:$0xff] %vm1422, %v1403
      %1438 = vst.msk [vmem:[#allocation2 + $0x78] sm:$0xff] %vm1422, %v1405
      %v1439 = vld [vmem:[%s1261] sm:$0xf]
      %v1440 = vld [vmem:[%s1261 + $0x4] sm:$0xf]
      %v1441 = vld [vmem:[%s1261 + $0x8] sm:$0x1]
      %v1442 = vld [vmem:[%s1261 + $0xc] sm:$0xf]
      %v1443 = vld [vmem:[%s1261 + $0x10] sm:$0xf]
      %v1444 = vld [vmem:[%s1261 + $0x14] sm:$0x1]
      %v1445 = vld [vmem:[%s1261 + $0x18] sm:$0xf]
      %v1446 = vld [vmem:[%s1261 + $0x1c] sm:$0xf]
      %v1447 = vld [vmem:[%s1261 + $0x20] sm:$0x1]
      %v1448 = vld [vmem:[%s1261 + $0x24] sm:$0xf]
      %v1449 = vld [vmem:[%s1261 + $0x28] sm:$0xf]
      %v1450 = vld [vmem:[%s1261 + $0x2c] sm:$0x1]
      %v1451 = vld [vmem:[%s1261 + $0x30] sm:$0xf]
      %v1452 = vld [vmem:[%s1261 + $0x34] sm:$0xf]
      %v1453 = vld [vmem:[%s1261 + $0x38] sm:$0x1]
      %v1454 = vld [vmem:[%s1261 + $0x3c] sm:$0xf]
      %v1455 = vld [vmem:[%s1261 + $0x40] sm:$0xf]
      %v1456 = vld [vmem:[%s1261 + $0x44] sm:$0x1]
      %v1457 = vld [vmem:[%s1261 + $0x48] sm:$0xf]
      %v1458 = vld [vmem:[%s1261 + $0x4c] sm:$0xf]
      %v1459 = vld [vmem:[%s1261 + $0x50] sm:$0x1]
      %v1460 = vld [vmem:[%s1261 + $0x54] sm:$0xf]
      %v1461 = vld [vmem:[%s1261 + $0x58] sm:$0xf]
      %v1462 = vld [vmem:[%s1261 + $0x5c] sm:$0x1]
      %v1463 = vld [vmem:[%s1261 + $0x60] sm:$0xf]
      %v1464 = vld [vmem:[%s1261 + $0x64] sm:$0xf]
      %v1465 = vld [vmem:[%s1261 + $0x68] sm:$0x1]
      %v1466 = vld [vmem:[%s1261 + $0x6c] sm:$0xf]
      %v1467 = vld [vmem:[%s1261 + $0x70] sm:$0xf]
      %v1468 = vld [vmem:[%s1261 + $0x74] sm:$0x1]
      %v1469 = vld [vmem:[%s1261 + $0x78] sm:$0xf]
      %v1470 = vld [vmem:[%s1261 + $0x7c] sm:$0xf]
      %v1471 = vld [vmem:[%s1261 + $0x80] sm:$0x1]
      %v1472 = vld [vmem:[%s1261 + $0x84] sm:$0xf]
      %v1473 = vld [vmem:[%s1261 + $0x88] sm:$0xf]
      %v1474 = vld [vmem:[%s1261 + $0x8c] sm:$0x1]
      %v1475 = vld [vmem:[%s1261 + $0x90] sm:$0xf]
      %v1476 = vld [vmem:[%s1261 + $0x94] sm:$0xf]
      %v1477 = vld [vmem:[%s1261 + $0x98] sm:$0x1]
      %v1478 = vld [vmem:[%s1261 + $0x9c] sm:$0xf]
      %v1479 = vld [vmem:[%s1261 + $0xa0] sm:$0xf]
      %v1480 = vld [vmem:[%s1261 + $0xa4] sm:$0x1]
      %v1481 = vld [vmem:[%s1261 + $0xa8] sm:$0xf]
      %v1482 = vld [vmem:[%s1261 + $0xac] sm:$0xf]
      %v1483 = vld [vmem:[%s1261 + $0xb0] sm:$0x1]
      %v1484 = vld [vmem:[%s1261 + $0xb4] sm:$0xf]
      %v1485 = vld [vmem:[%s1261 + $0xb8] sm:$0xf]
      %v1486 = vld [vmem:[%s1261 + $0xbc] sm:$0x1]
      %v1488 = vshrl.u32 %v1439, 16
      %v1490 = vrot.slane %v1488, 4
      %v1491 = vshll.u32 %v1439, 16
      %v1493 = vrot.slane %v1491, 5
      %v1494 = vor.u32 %v1490, %v1493
      %v1495 = vrot.slane %v1494, 4
      %v1497 = vshll.u32 %v1440, 16
      %v1499 = vrot.slane %v1497, 5
      %v1500 = vsel %vm439, %v1495, %v1499
      %v1501 = vshrl.u32 %v1440, 16
      %v1503 = vrot.slane %v1501, 4
      %v1504 = vor.u32 %v1503, %v1499
      %v1505 = vrot.slane %v1504, 4
      %v1507 = vshll.u32 %v1441, 16
      %v1509 = vrot.slane %v1507, 5
      %v1510 = vsel %vm439, %v1505, %v1509
      %v1512 = vshrl.u32 %v1442, 16
      %v1514 = vrot.slane %v1512, 4
      %v1515 = vshll.u32 %v1442, 16
      %v1517 = vrot.slane %v1515, 5
      %v1518 = vor.u32 %v1514, %v1517
      %v1519 = vrot.slane %v1518, 4
      %v1521 = vshll.u32 %v1443, 16
      %v1523 = vrot.slane %v1521, 5
      %v1524 = vsel %vm439, %v1519, %v1523
      %v1525 = vshrl.u32 %v1443, 16
      %v1527 = vrot.slane %v1525, 4
      %v1528 = vor.u32 %v1527, %v1523
      %v1529 = vrot.slane %v1528, 4
      %v1531 = vshll.u32 %v1444, 16
      %v1533 = vrot.slane %v1531, 5
      %v1534 = vsel %vm439, %v1529, %v1533
      %v1536 = vshrl.u32 %v1445, 16
      %v1538 = vrot.slane %v1536, 4
      %v1539 = vshll.u32 %v1445, 16
      %v1541 = vrot.slane %v1539, 5
      %v1542 = vor.u32 %v1538, %v1541
      %v1543 = vrot.slane %v1542, 4
      %v1545 = vshll.u32 %v1446, 16
      %v1547 = vrot.slane %v1545, 5
      %v1548 = vsel %vm439, %v1543, %v1547
      %v1549 = vshrl.u32 %v1446, 16
      %v1551 = vrot.slane %v1549, 4
      %v1552 = vor.u32 %v1551, %v1547
      %v1553 = vrot.slane %v1552, 4
      %v1555 = vshll.u32 %v1447, 16
      %v1557 = vrot.slane %v1555, 5
      %v1558 = vsel %vm439, %v1553, %v1557
      %v1560 = vshrl.u32 %v1448, 16
      %v1562 = vrot.slane %v1560, 4
      %v1563 = vshll.u32 %v1448, 16
      %v1565 = vrot.slane %v1563, 5
      %v1566 = vor.u32 %v1562, %v1565
      %v1567 = vrot.slane %v1566, 4
      %v1569 = vshll.u32 %v1449, 16
      %v1571 = vrot.slane %v1569, 5
      %v1572 = vsel %vm439, %v1567, %v1571
      %v1573 = vshrl.u32 %v1449, 16
      %v1575 = vrot.slane %v1573, 4
      %v1576 = vor.u32 %v1575, %v1571
      %v1577 = vrot.slane %v1576, 4
      %v1579 = vshll.u32 %v1450, 16
      %v1581 = vrot.slane %v1579, 5
      %v1582 = vsel %vm439, %v1577, %v1581
      %v1584 = vshrl.u32 %v1451, 16
      %v1586 = vrot.slane %v1584, 4
      %v1587 = vshll.u32 %v1451, 16
      %v1589 = vrot.slane %v1587, 5
      %v1590 = vor.u32 %v1586, %v1589
      %v1591 = vrot.slane %v1590, 4
      %v1593 = vshll.u32 %v1452, 16
      %v1595 = vrot.slane %v1593, 5
      %v1596 = vsel %vm439, %v1591, %v1595
      %v1597 = vshrl.u32 %v1452, 16
      %v1599 = vrot.slane %v1597, 4
      %v1600 = vor.u32 %v1599, %v1595
      %v1601 = vrot.slane %v1600, 4
      %v1603 = vshll.u32 %v1453, 16
      %v1605 = vrot.slane %v1603, 5
      %v1606 = vsel %vm439, %v1601, %v1605
      %v1608 = vshrl.u32 %v1454, 16
      %v1610 = vrot.slane %v1608, 4
      %v1611 = vshll.u32 %v1454, 16
      %v1613 = vrot.slane %v1611, 5
      %v1614 = vor.u32 %v1610, %v1613
      %v1615 = vrot.slane %v1614, 4
      %v1617 = vshll.u32 %v1455, 16
      %v1619 = vrot.slane %v1617, 5
      %v1620 = vsel %vm439, %v1615, %v1619
      %v1621 = vshrl.u32 %v1455, 16
      %v1623 = vrot.slane %v1621, 4
      %v1624 = vor.u32 %v1623, %v1619
      %v1625 = vrot.slane %v1624, 4
      %v1627 = vshll.u32 %v1456, 16
      %v1629 = vrot.slane %v1627, 5
      %v1630 = vsel %vm439, %v1625, %v1629
      %v1632 = vshrl.u32 %v1457, 16
      %v1634 = vrot.slane %v1632, 4
      %v1635 = vshll.u32 %v1457, 16
      %v1637 = vrot.slane %v1635, 5
      %v1638 = vor.u32 %v1634, %v1637
      %v1639 = vrot.slane %v1638, 4
      %v1641 = vshll.u32 %v1458, 16
      %v1643 = vrot.slane %v1641, 5
      %v1644 = vsel %vm439, %v1639, %v1643
      %v1645 = vshrl.u32 %v1458, 16
      %v1647 = vrot.slane %v1645, 4
      %v1648 = vor.u32 %v1647, %v1643
      %v1649 = vrot.slane %v1648, 4
      %v1651 = vshll.u32 %v1459, 16
      %v1653 = vrot.slane %v1651, 5
      %v1654 = vsel %vm439, %v1649, %v1653
      %v1656 = vshrl.u32 %v1460, 16
      %v1658 = vrot.slane %v1656, 4
      %v1659 = vshll.u32 %v1460, 16
      %v1661 = vrot.slane %v1659, 5
      %v1662 = vor.u32 %v1658, %v1661
      %v1663 = vrot.slane %v1662, 4
      %v1665 = vshll.u32 %v1461, 16
      %v1667 = vrot.slane %v1665, 5
      %v1668 = vsel %vm439, %v1663, %v1667
      %v1669 = vshrl.u32 %v1461, 16
      %v1671 = vrot.slane %v1669, 4
      %v1672 = vor.u32 %v1671, %v1667
      %v1673 = vrot.slane %v1672, 4
      %v1675 = vshll.u32 %v1462, 16
      %v1677 = vrot.slane %v1675, 5
      %v1678 = vsel %vm439, %v1673, %v1677
      %v1680 = vshrl.u32 %v1463, 16
      %v1682 = vrot.slane %v1680, 4
      %v1683 = vshll.u32 %v1463, 16
      %v1685 = vrot.slane %v1683, 5
      %v1686 = vor.u32 %v1682, %v1685
      %v1687 = vrot.slane %v1686, 4
      %v1689 = vshll.u32 %v1464, 16
      %v1691 = vrot.slane %v1689, 5
      %v1692 = vsel %vm439, %v1687, %v1691
      %v1693 = vshrl.u32 %v1464, 16
      %v1695 = vrot.slane %v1693, 4
      %v1696 = vor.u32 %v1695, %v1691
      %v1697 = vrot.slane %v1696, 4
      %v1699 = vshll.u32 %v1465, 16
      %v1701 = vrot.slane %v1699, 5
      %v1702 = vsel %vm439, %v1697, %v1701
      %v1704 = vshrl.u32 %v1466, 16
      %v1706 = vrot.slane %v1704, 4
      %v1707 = vshll.u32 %v1466, 16
      %v1709 = vrot.slane %v1707, 5
      %v1710 = vor.u32 %v1706, %v1709
      %v1711 = vrot.slane %v1710, 4
      %v1713 = vshll.u32 %v1467, 16
      %v1715 = vrot.slane %v1713, 5
      %v1716 = vsel %vm439, %v1711, %v1715
      %v1717 = vshrl.u32 %v1467, 16
      %v1719 = vrot.slane %v1717, 4
      %v1720 = vor.u32 %v1719, %v1715
      %v1721 = vrot.slane %v1720, 4
      %v1723 = vshll.u32 %v1468, 16
      %v1725 = vrot.slane %v1723, 5
      %v1726 = vsel %vm439, %v1721, %v1725
      %v1728 = vshrl.u32 %v1469, 16
      %v1730 = vrot.slane %v1728, 4
      %v1731 = vshll.u32 %v1469, 16
      %v1733 = vrot.slane %v1731, 5
      %v1734 = vor.u32 %v1730, %v1733
      %v1735 = vrot.slane %v1734, 4
      %v1737 = vshll.u32 %v1470, 16
      %v1739 = vrot.slane %v1737, 5
      %v1740 = vsel %vm439, %v1735, %v1739
      %v1741 = vshrl.u32 %v1470, 16
      %v1743 = vrot.slane %v1741, 4
      %v1744 = vor.u32 %v1743, %v1739
      %v1745 = vrot.slane %v1744, 4
      %v1747 = vshll.u32 %v1471, 16
      %v1749 = vrot.slane %v1747, 5
      %v1750 = vsel %vm439, %v1745, %v1749
      %v1752 = vshrl.u32 %v1472, 16
      %v1754 = vrot.slane %v1752, 4
      %v1755 = vshll.u32 %v1472, 16
      %v1757 = vrot.slane %v1755, 5
      %v1758 = vor.u32 %v1754, %v1757
      %v1759 = vrot.slane %v1758, 4
      %v1761 = vshll.u32 %v1473, 16
      %v1763 = vrot.slane %v1761, 5
      %v1764 = vsel %vm439, %v1759, %v1763
      %v1765 = vshrl.u32 %v1473, 16
      %v1767 = vrot.slane %v1765, 4
      %v1768 = vor.u32 %v1767, %v1763
      %v1769 = vrot.slane %v1768, 4
      %v1771 = vshll.u32 %v1474, 16
      %v1773 = vrot.slane %v1771, 5
      %v1774 = vsel %vm439, %v1769, %v1773
      %v1776 = vshrl.u32 %v1475, 16
      %v1778 = vrot.slane %v1776, 4
      %v1779 = vshll.u32 %v1475, 16
      %v1781 = vrot.slane %v1779, 5
      %v1782 = vor.u32 %v1778, %v1781
      %v1783 = vrot.slane %v1782, 4
      %v1785 = vshll.u32 %v1476, 16
      %v1787 = vrot.slane %v1785, 5
      %v1788 = vsel %vm439, %v1783, %v1787
      %v1789 = vshrl.u32 %v1476, 16
      %v1791 = vrot.slane %v1789, 4
      %v1792 = vor.u32 %v1791, %v1787
      %v1793 = vrot.slane %v1792, 4
      %v1795 = vshll.u32 %v1477, 16
      %v1797 = vrot.slane %v1795, 5
      %v1798 = vsel %vm439, %v1793, %v1797
      %v1800 = vshrl.u32 %v1478, 16
      %v1802 = vrot.slane %v1800, 4
      %v1803 = vshll.u32 %v1478, 16
      %v1805 = vrot.slane %v1803, 5
      %v1806 = vor.u32 %v1802, %v1805
      %v1807 = vrot.slane %v1806, 4
      %v1809 = vshll.u32 %v1479, 16
      %v1811 = vrot.slane %v1809, 5
      %v1812 = vsel %vm439, %v1807, %v1811
      %v1813 = vshrl.u32 %v1479, 16
      %v1815 = vrot.slane %v1813, 4
      %v1816 = vor.u32 %v1815, %v1811
      %v1817 = vrot.slane %v1816, 4
      %v1819 = vshll.u32 %v1480, 16
      %v1821 = vrot.slane %v1819, 5
      %v1822 = vsel %vm439, %v1817, %v1821
      %v1824 = vshrl.u32 %v1481, 16
      %v1826 = vrot.slane %v1824, 4
      %v1827 = vshll.u32 %v1481, 16
      %v1829 = vrot.slane %v1827, 5
      %v1830 = vor.u32 %v1826, %v1829
      %v1831 = vrot.slane %v1830, 4
      %v1833 = vshll.u32 %v1482, 16
      %v1835 = vrot.slane %v1833, 5
      %v1836 = vsel %vm439, %v1831, %v1835
      %v1837 = vshrl.u32 %v1482, 16
      %v1839 = vrot.slane %v1837, 4
      %v1840 = vor.u32 %v1839, %v1835
      %v1841 = vrot.slane %v1840, 4
      %v1843 = vshll.u32 %v1483, 16
      %v1845 = vrot.slane %v1843, 5
      %v1846 = vsel %vm439, %v1841, %v1845
      %v1848 = vshrl.u32 %v1484, 16
      %v1850 = vrot.slane %v1848, 4
      %v1851 = vshll.u32 %v1484, 16
      %v1853 = vrot.slane %v1851, 5
      %v1854 = vor.u32 %v1850, %v1853
      %v1855 = vrot.slane %v1854, 4
      %v1857 = vshll.u32 %v1485, 16
      %v1859 = vrot.slane %v1857, 5
      %v1860 = vsel %vm439, %v1855, %v1859
      %v1861 = vshrl.u32 %v1485, 16
      %v1863 = vrot.slane %v1861, 4
      %v1864 = vor.u32 %v1863, %v1859
      %v1865 = vrot.slane %v1864, 4
      %v1867 = vshll.u32 %v1486, 16
      %v1869 = vrot.slane %v1867, 5
      %v1870 = vsel %vm439, %v1865, %v1869
      %v1871 = vunpack.c.l.b16 %v1500
      %v1872 = vunpack.c.l.b16 %v1510
      %v1873 = vunpack.c.l.b16 %v1524
      %v1874 = vunpack.c.l.b16 %v1534
      %v1875 = vunpack.c.l.b16 %v1548
      %v1876 = vunpack.c.l.b16 %v1558
      %v1877 = vunpack.c.l.b16 %v1572
      %v1878 = vunpack.c.l.b16 %v1582
      %v1879 = vunpack.c.l.b16 %v1596
      %v1880 = vunpack.c.l.b16 %v1606
      %v1881 = vunpack.c.l.b16 %v1620
      %v1882 = vunpack.c.l.b16 %v1630
      %v1883 = vunpack.c.l.b16 %v1644
      %v1884 = vunpack.c.l.b16 %v1654
      %v1885 = vunpack.c.l.b16 %v1668
      %v1886 = vunpack.c.l.b16 %v1678
      %v1887 = vunpack.c.l.b16 %v1692
      %v1888 = vunpack.c.l.b16 %v1702
      %v1889 = vunpack.c.l.b16 %v1716
      %v1890 = vunpack.c.l.b16 %v1726
      %v1891 = vunpack.c.l.b16 %v1740
      %v1892 = vunpack.c.l.b16 %v1750
      %v1893 = vunpack.c.l.b16 %v1764
      %v1894 = vunpack.c.l.b16 %v1774
      %v1895 = vunpack.c.l.b16 %v1788
      %v1896 = vunpack.c.l.b16 %v1798
      %v1897 = vunpack.c.l.b16 %v1812
      %v1898 = vunpack.c.l.b16 %v1822
      %v1899 = vunpack.c.l.b16 %v1836
      %v1900 = vunpack.c.l.b16 %v1846
      %v1901 = vunpack.c.l.b16 %v1860
      %v1902 = vunpack.c.l.b16 %v1870
      %v1903 = vpack.c.b16 %v1872, %v1871
      %v1904 = vpack.c.b16 %v1874, %v1873
      %v1905 = vpack.c.b16 %v1876, %v1875
      %v1906 = vpack.c.b16 %v1878, %v1877
      %v1907 = vpack.c.b16 %v1880, %v1879
      %v1908 = vpack.c.b16 %v1882, %v1881
      %v1909 = vpack.c.b16 %v1884, %v1883
      %v1910 = vpack.c.b16 %v1886, %v1885
      %v1911 = vpack.c.b16 %v1888, %v1887
      %v1912 = vpack.c.b16 %v1890, %v1889
      %v1913 = vpack.c.b16 %v1892, %v1891
      %v1914 = vpack.c.b16 %v1894, %v1893
      %v1915 = vpack.c.b16 %v1896, %v1895
      %v1916 = vpack.c.b16 %v1898, %v1897
      %v1917 = vpack.c.b16 %v1900, %v1899
      %v1918 = vpack.c.b16 %v1902, %v1901
      %1919 = vrot.lane.b32.xlu0 %v1903, 32
      %v1920 = vpop.permute.xlu0 %1919
      %1921 = vrot.lane.b32.xlu0 %v1904, 32
      %v1922 = vpop.permute.xlu0 %1921
      %1923 = vrot.lane.b32.xlu0 %v1905, 32
      %v1924 = vpop.permute.xlu0 %1923
      %1925 = vrot.lane.b32.xlu0 %v1906, 32
      %v1926 = vpop.permute.xlu0 %1925
      %1927 = vrot.lane.b32.xlu0 %v1907, 32
      %v1928 = vpop.permute.xlu0 %1927
      %1929 = vrot.lane.b32.xlu0 %v1908, 32
      %v1930 = vpop.permute.xlu0 %1929
      %1931 = vrot.lane.b32.xlu0 %v1909, 32
      %v1932 = vpop.permute.xlu0 %1931
      %1933 = vrot.lane.b32.xlu0 %v1910, 32
      %v1934 = vpop.permute.xlu0 %1933
      %1935 = vrot.lane.b32.xlu0 %v1911, 32
      %v1936 = vpop.permute.xlu0 %1935
      %1937 = vrot.lane.b32.xlu0 %v1912, 32
      %v1938 = vpop.permute.xlu0 %1937
      %1939 = vrot.lane.b32.xlu0 %v1913, 32
      %v1940 = vpop.permute.xlu0 %1939
      %1941 = vrot.lane.b32.xlu0 %v1914, 32
      %v1942 = vpop.permute.xlu0 %1941
      %1943 = vrot.lane.b32.xlu0 %v1915, 32
      %v1944 = vpop.permute.xlu0 %1943
      %1945 = vrot.lane.b32.xlu0 %v1916, 32
      %v1946 = vpop.permute.xlu0 %1945
      %1947 = vrot.lane.b32.xlu0 %v1917, 32
      %v1948 = vpop.permute.xlu0 %1947
      %1949 = vrot.lane.b32.xlu0 %v1918, 32
      %v1950 = vpop.permute.xlu0 %1949
      %vm1967 = vcmask 326912
      %1968 = vst.msk [vmem:[#allocation2] sm:$0xff] %vm1967, %v1920
      %1969 = vst.msk [vmem:[#allocation2 + $0x8] sm:$0xff] %vm1967, %v1922
      %1970 = vst.msk [vmem:[#allocation2 + $0x10] sm:$0xff] %vm1967, %v1924
      %1971 = vst.msk [vmem:[#allocation2 + $0x18] sm:$0xff] %vm1967, %v1926
      %1972 = vst.msk [vmem:[#allocation2 + $0x20] sm:$0xff] %vm1967, %v1928
      %1973 = vst.msk [vmem:[#allocation2 + $0x28] sm:$0xff] %vm1967, %v1930
      %1974 = vst.msk [vmem:[#allocation2 + $0x30] sm:$0xff] %vm1967, %v1932
      %1975 = vst.msk [vmem:[#allocation2 + $0x38] sm:$0xff] %vm1967, %v1934
      %1976 = vst.msk [vmem:[#allocation2 + $0x40] sm:$0xff] %vm1967, %v1936
      %1977 = vst.msk [vmem:[#allocation2 + $0x48] sm:$0xff] %vm1967, %v1938
      %1978 = vst.msk [vmem:[#allocation2 + $0x50] sm:$0xff] %vm1967, %v1940
      %1979 = vst.msk [vmem:[#allocation2 + $0x58] sm:$0xff] %vm1967, %v1942
      %1980 = vst.msk [vmem:[#allocation2 + $0x60] sm:$0xff] %vm1967, %v1944
      %1981 = vst.msk [vmem:[#allocation2 + $0x68] sm:$0xff] %vm1967, %v1946
      %1982 = vst.msk [vmem:[#allocation2 + $0x70] sm:$0xff] %vm1967, %v1948
      %1983 = vst.msk [vmem:[#allocation2 + $0x78] sm:$0xff] %vm1967, %v1950
      %v1984 = vld [vmem:[%s1261] sm:$0xe]
      %v1985 = vld [vmem:[%s1261 + $0x4] sm:$0xf]
      %v1986 = vld [vmem:[%s1261 + $0x8] sm:$0x1]
      %v1987 = vld [vmem:[%s1261 + $0xc] sm:$0xe]
      %v1988 = vld [vmem:[%s1261 + $0x10] sm:$0xf]
      %v1989 = vld [vmem:[%s1261 + $0x14] sm:$0x1]
      %v1990 = vld [vmem:[%s1261 + $0x18] sm:$0xe]
      %v1991 = vld [vmem:[%s1261 + $0x1c] sm:$0xf]
      %v1992 = vld [vmem:[%s1261 + $0x20] sm:$0x1]
      %v1993 = vld [vmem:[%s1261 + $0x24] sm:$0xe]
      %v1994 = vld [vmem:[%s1261 + $0x28] sm:$0xf]
      %v1995 = vld [vmem:[%s1261 + $0x2c] sm:$0x1]
      %v1996 = vld [vmem:[%s1261 + $0x30] sm:$0xe]
      %v1997 = vld [vmem:[%s1261 + $0x34] sm:$0xf]
      %v1998 = vld [vmem:[%s1261 + $0x38] sm:$0x1]
      %v1999 = vld [vmem:[%s1261 + $0x3c] sm:$0xe]
      %v2000 = vld [vmem:[%s1261 + $0x40] sm:$0xf]
      %v2001 = vld [vmem:[%s1261 + $0x44] sm:$0x1]
      %v2002 = vld [vmem:[%s1261 + $0x48] sm:$0xe]
      %v2003 = vld [vmem:[%s1261 + $0x4c] sm:$0xf]
      %v2004 = vld [vmem:[%s1261 + $0x50] sm:$0x1]
      %v2005 = vld [vmem:[%s1261 + $0x54] sm:$0xe]
      %v2006 = vld [vmem:[%s1261 + $0x58] sm:$0xf]
      %v2007 = vld [vmem:[%s1261 + $0x5c] sm:$0x1]
      %v2008 = vld [vmem:[%s1261 + $0x60] sm:$0xe]
      %v2009 = vld [vmem:[%s1261 + $0x64] sm:$0xf]
      %v2010 = vld [vmem:[%s1261 + $0x68] sm:$0x1]
      %v2011 = vld [vmem:[%s1261 + $0x6c] sm:$0xe]
      %v2012 = vld [vmem:[%s1261 + $0x70] sm:$0xf]
      %v2013 = vld [vmem:[%s1261 + $0x74] sm:$0x1]
      %v2014 = vld [vmem:[%s1261 + $0x78] sm:$0xe]
      %v2015 = vld [vmem:[%s1261 + $0x7c] sm:$0xf]
      %v2016 = vld [vmem:[%s1261 + $0x80] sm:$0x1]
      %v2017 = vld [vmem:[%s1261 + $0x84] sm:$0xe]
      %v2018 = vld [vmem:[%s1261 + $0x88] sm:$0xf]
      %v2019 = vld [vmem:[%s1261 + $0x8c] sm:$0x1]
      %v2020 = vld [vmem:[%s1261 + $0x90] sm:$0xe]
      %v2021 = vld [vmem:[%s1261 + $0x94] sm:$0xf]
      %v2022 = vld [vmem:[%s1261 + $0x98] sm:$0x1]
      %v2023 = vld [vmem:[%s1261 + $0x9c] sm:$0xe]
      %v2024 = vld [vmem:[%s1261 + $0xa0] sm:$0xf]
      %v2025 = vld [vmem:[%s1261 + $0xa4] sm:$0x1]
      %v2026 = vld [vmem:[%s1261 + $0xa8] sm:$0xe]
      %v2027 = vld [vmem:[%s1261 + $0xac] sm:$0xf]
      %v2028 = vld [vmem:[%s1261 + $0xb0] sm:$0x1]
      %v2029 = vld [vmem:[%s1261 + $0xb4] sm:$0xe]
      %v2030 = vld [vmem:[%s1261 + $0xb8] sm:$0xf]
      %v2031 = vld [vmem:[%s1261 + $0xbc] sm:$0x1]
      %v2080 = vrot.slane %v1984, 5
      %v2081 = vrot.slane %v2080, 4
      %v2082 = vrot.slane %v1985, 5
      %v2083 = vsel %vm1035, %v2081, %v2082
      %v2084 = vrot.slane %v2082, 4
      %v2085 = vrot.slane %v1986, 5
      %v2086 = vsel %vm1035, %v2084, %v2085
      %v2087 = vrot.slane %v1987, 5
      %v2088 = vrot.slane %v2087, 4
      %v2089 = vrot.slane %v1988, 5
      %v2090 = vsel %vm1035, %v2088, %v2089
      %v2091 = vrot.slane %v2089, 4
      %v2092 = vrot.slane %v1989, 5
      %v2093 = vsel %vm1035, %v2091, %v2092
      %v2094 = vrot.slane %v1990, 5
      %v2095 = vrot.slane %v2094, 4
      %v2096 = vrot.slane %v1991, 5
      %v2097 = vsel %vm1035, %v2095, %v2096
      %v2098 = vrot.slane %v2096, 4
      %v2099 = vrot.slane %v1992, 5
      %v2100 = vsel %vm1035, %v2098, %v2099
      %v2101 = vrot.slane %v1993, 5
      %v2102 = vrot.slane %v2101, 4
      %v2103 = vrot.slane %v1994, 5
      %v2104 = vsel %vm1035, %v2102, %v2103
      %v2105 = vrot.slane %v2103, 4
      %v2106 = vrot.slane %v1995, 5
      %v2107 = vsel %vm1035, %v2105, %v2106
      %v2108 = vrot.slane %v1996, 5
      %v2109 = vrot.slane %v2108, 4
      %v2110 = vrot.slane %v1997, 5
      %v2111 = vsel %vm1035, %v2109, %v2110
      %v2112 = vrot.slane %v2110, 4
      %v2113 = vrot.slane %v1998, 5
      %v2114 = vsel %vm1035, %v2112, %v2113
      %v2115 = vrot.slane %v1999, 5
      %v2116 = vrot.slane %v2115, 4
      %v2117 = vrot.slane %v2000, 5
      %v2118 = vsel %vm1035, %v2116, %v2117
      %v2119 = vrot.slane %v2117, 4
      %v2120 = vrot.slane %v2001, 5
      %v2121 = vsel %vm1035, %v2119, %v2120
      %v2122 = vrot.slane %v2002, 5
      %v2123 = vrot.slane %v2122, 4
      %v2124 = vrot.slane %v2003, 5
      %v2125 = vsel %vm1035, %v2123, %v2124
      %v2126 = vrot.slane %v2124, 4
      %v2127 = vrot.slane %v2004, 5
      %v2128 = vsel %vm1035, %v2126, %v2127
      %v2129 = vrot.slane %v2005, 5
      %v2130 = vrot.slane %v2129, 4
      %v2131 = vrot.slane %v2006, 5
      %v2132 = vsel %vm1035, %v2130, %v2131
      %v2133 = vrot.slane %v2131, 4
      %v2134 = vrot.slane %v2007, 5
      %v2135 = vsel %vm1035, %v2133, %v2134
      %v2136 = vrot.slane %v2008, 5
      %v2137 = vrot.slane %v2136, 4
      %v2138 = vrot.slane %v2009, 5
      %v2139 = vsel %vm1035, %v2137, %v2138
      %v2140 = vrot.slane %v2138, 4
      %v2141 = vrot.slane %v2010, 5
      %v2142 = vsel %vm1035, %v2140, %v2141
      %v2143 = vrot.slane %v2011, 5
      %v2144 = vrot.slane %v2143, 4
      %v2145 = vrot.slane %v2012, 5
      %v2146 = vsel %vm1035, %v2144, %v2145
      %v2147 = vrot.slane %v2145, 4
      %v2148 = vrot.slane %v2013, 5
      %v2149 = vsel %vm1035, %v2147, %v2148
      %v2150 = vrot.slane %v2014, 5
      %v2151 = vrot.slane %v2150, 4
      %v2152 = vrot.slane %v2015, 5
      %v2153 = vsel %vm1035, %v2151, %v2152
      %v2154 = vrot.slane %v2152, 4
      %v2155 = vrot.slane %v2016, 5
      %v2156 = vsel %vm1035, %v2154, %v2155
      %v2157 = vrot.slane %v2017, 5
      %v2158 = vrot.slane %v2157, 4
      %v2159 = vrot.slane %v2018, 5
      %v2160 = vsel %vm1035, %v2158, %v2159
      %v2161 = vrot.slane %v2159, 4
      %v2162 = vrot.slane %v2019, 5
      %v2163 = vsel %vm1035, %v2161, %v2162
      %v2164 = vrot.slane %v2020, 5
      %v2165 = vrot.slane %v2164, 4
      %v2166 = vrot.slane %v2021, 5
      %v2167 = vsel %vm1035, %v2165, %v2166
      %v2168 = vrot.slane %v2166, 4
      %v2169 = vrot.slane %v2022, 5
      %v2170 = vsel %vm1035, %v2168, %v2169
      %v2171 = vrot.slane %v2023, 5
      %v2172 = vrot.slane %v2171, 4
      %v2173 = vrot.slane %v2024, 5
      %v2174 = vsel %vm1035, %v2172, %v2173
      %v2175 = vrot.slane %v2173, 4
      %v2176 = vrot.slane %v2025, 5
      %v2177 = vsel %vm1035, %v2175, %v2176
      %v2178 = vrot.slane %v2026, 5
      %v2179 = vrot.slane %v2178, 4
      %v2180 = vrot.slane %v2027, 5
      %v2181 = vsel %vm1035, %v2179, %v2180
      %v2182 = vrot.slane %v2180, 4
      %v2183 = vrot.slane %v2028, 5
      %v2184 = vsel %vm1035, %v2182, %v2183
      %v2185 = vrot.slane %v2029, 5
      %v2186 = vrot.slane %v2185, 4
      %v2187 = vrot.slane %v2030, 5
      %v2188 = vsel %vm1035, %v2186, %v2187
      %v2189 = vrot.slane %v2187, 4
      %v2190 = vrot.slane %v2031, 5
      %v2191 = vsel %vm1035, %v2189, %v2190
      %v2192 = vunpack.c.l.b16 %v2083
      %v2193 = vunpack.c.l.b16 %v2086
      %v2194 = vunpack.c.l.b16 %v2090
      %v2195 = vunpack.c.l.b16 %v2093
      %v2196 = vunpack.c.l.b16 %v2097
      %v2197 = vunpack.c.l.b16 %v2100
      %v2198 = vunpack.c.l.b16 %v2104
      %v2199 = vunpack.c.l.b16 %v2107
      %v2200 = vunpack.c.l.b16 %v2111
      %v2201 = vunpack.c.l.b16 %v2114
      %v2202 = vunpack.c.l.b16 %v2118
      %v2203 = vunpack.c.l.b16 %v2121
      %v2204 = vunpack.c.l.b16 %v2125
      %v2205 = vunpack.c.l.b16 %v2128
      %v2206 = vunpack.c.l.b16 %v2132
      %v2207 = vunpack.c.l.b16 %v2135
      %v2208 = vunpack.c.l.b16 %v2139
      %v2209 = vunpack.c.l.b16 %v2142
      %v2210 = vunpack.c.l.b16 %v2146
      %v2211 = vunpack.c.l.b16 %v2149
      %v2212 = vunpack.c.l.b16 %v2153
      %v2213 = vunpack.c.l.b16 %v2156
      %v2214 = vunpack.c.l.b16 %v2160
      %v2215 = vunpack.c.l.b16 %v2163
      %v2216 = vunpack.c.l.b16 %v2167
      %v2217 = vunpack.c.l.b16 %v2170
      %v2218 = vunpack.c.l.b16 %v2174
      %v2219 = vunpack.c.l.b16 %v2177
      %v2220 = vunpack.c.l.b16 %v2181
      %v2221 = vunpack.c.l.b16 %v2184
      %v2222 = vunpack.c.l.b16 %v2188
      %v2223 = vunpack.c.l.b16 %v2191
      %v2224 = vpack.c.b16 %v2193, %v2192
      %v2225 = vpack.c.b16 %v2195, %v2194
      %v2226 = vpack.c.b16 %v2197, %v2196
      %v2227 = vpack.c.b16 %v2199, %v2198
      %v2228 = vpack.c.b16 %v2201, %v2200
      %v2229 = vpack.c.b16 %v2203, %v2202
      %v2230 = vpack.c.b16 %v2205, %v2204
      %v2231 = vpack.c.b16 %v2207, %v2206
      %v2232 = vpack.c.b16 %v2209, %v2208
      %v2233 = vpack.c.b16 %v2211, %v2210
      %v2234 = vpack.c.b16 %v2213, %v2212
      %v2235 = vpack.c.b16 %v2215, %v2214
      %v2236 = vpack.c.b16 %v2217, %v2216
      %v2237 = vpack.c.b16 %v2219, %v2218
      %v2238 = vpack.c.b16 %v2221, %v2220
      %v2239 = vpack.c.b16 %v2223, %v2222
      %2240 = vrot.lane.b32.xlu0 %v2224, 40
      %v2241 = vpop.permute.xlu0 %2240
      %2242 = vrot.lane.b32.xlu0 %v2225, 40
      %v2243 = vpop.permute.xlu0 %2242
      %2244 = vrot.lane.b32.xlu0 %v2226, 40
      %v2245 = vpop.permute.xlu0 %2244
      %2246 = vrot.lane.b32.xlu0 %v2227, 40
      %v2247 = vpop.permute.xlu0 %2246
      %2248 = vrot.lane.b32.xlu0 %v2228, 40
      %v2249 = vpop.permute.xlu0 %2248
      %2250 = vrot.lane.b32.xlu0 %v2229, 40
      %v2251 = vpop.permute.xlu0 %2250
      %2252 = vrot.lane.b32.xlu0 %v2230, 40
      %v2253 = vpop.permute.xlu0 %2252
      %2254 = vrot.lane.b32.xlu0 %v2231, 40
      %v2255 = vpop.permute.xlu0 %2254
      %2256 = vrot.lane.b32.xlu0 %v2232, 40
      %v2257 = vpop.permute.xlu0 %2256
      %2258 = vrot.lane.b32.xlu0 %v2233, 40
      %v2259 = vpop.permute.xlu0 %2258
      %2260 = vrot.lane.b32.xlu0 %v2234, 40
      %v2261 = vpop.permute.xlu0 %2260
      %2262 = vrot.lane.b32.xlu0 %v2235, 40
      %v2263 = vpop.permute.xlu0 %2262
      %2264 = vrot.lane.b32.xlu0 %v2236, 40
      %v2265 = vpop.permute.xlu0 %2264
      %2266 = vrot.lane.b32.xlu0 %v2237, 40
      %v2267 = vpop.permute.xlu0 %2266
      %2268 = vrot.lane.b32.xlu0 %v2238, 40
      %v2269 = vpop.permute.xlu0 %2268
      %2270 = vrot.lane.b32.xlu0 %v2239, 40
      %v2271 = vpop.permute.xlu0 %2270
      %vm2288 = vcmask 392512
      %2289 = vst.msk [vmem:[#allocation2] sm:$0xff] %vm2288, %v2241
      %2290 = vst.msk [vmem:[#allocation2 + $0x8] sm:$0xff] %vm2288, %v2243
      %2291 = vst.msk [vmem:[#allocation2 + $0x10] sm:$0xff] %vm2288, %v2245
      %2292 = vst.msk [vmem:[#allocation2 + $0x18] sm:$0xff] %vm2288, %v2247
      %2293 = vst.msk [vmem:[#allocation2 + $0x20] sm:$0xff] %vm2288, %v2249
      %2294 = vst.msk [vmem:[#allocation2 + $0x28] sm:$0xff] %vm2288, %v2251
      %2295 = vst.msk [vmem:[#allocation2 + $0x30] sm:$0xff] %vm2288, %v2253
      %2296 = vst.msk [vmem:[#allocation2 + $0x38] sm:$0xff] %vm2288, %v2255
      %2297 = vst.msk [vmem:[#allocation2 + $0x40] sm:$0xff] %vm2288, %v2257
      %2298 = vst.msk [vmem:[#allocation2 + $0x48] sm:$0xff] %vm2288, %v2259
      %2299 = vst.msk [vmem:[#allocation2 + $0x50] sm:$0xff] %vm2288, %v2261
      %2300 = vst.msk [vmem:[#allocation2 + $0x58] sm:$0xff] %vm2288, %v2263
      %2301 = vst.msk [vmem:[#allocation2 + $0x60] sm:$0xff] %vm2288, %v2265
      %2302 = vst.msk [vmem:[#allocation2 + $0x68] sm:$0xff] %vm2288, %v2267
      %2303 = vst.msk [vmem:[#allocation2 + $0x70] sm:$0xff] %vm2288, %v2269
      %2304 = vst.msk [vmem:[#allocation2 + $0x78] sm:$0xff] %vm2288, %v2271
      %s2305 = scalar_lea.vmem %s230, 24
      %v2306 = vld [vmem:[%s2305] sm:$0xf]
      %v2307 = vld [vmem:[%s2305 + $0x4] sm:$0xf]
      %v2308 = vld [vmem:[%s2305 + $0xc] sm:$0xf]
      %v2309 = vld [vmem:[%s2305 + $0x10] sm:$0xf]
      %v2310 = vld [vmem:[%s2305 + $0x18] sm:$0xf]
      %v2311 = vld [vmem:[%s2305 + $0x1c] sm:$0xf]
      %v2312 = vld [vmem:[%s2305 + $0x24] sm:$0xf]
      %v2313 = vld [vmem:[%s2305 + $0x28] sm:$0xf]
      %v2314 = vld [vmem:[%s2305 + $0x30] sm:$0xf]
      %v2315 = vld [vmem:[%s2305 + $0x34] sm:$0xf]
      %v2316 = vld [vmem:[%s2305 + $0x3c] sm:$0xf]
      %v2317 = vld [vmem:[%s2305 + $0x40] sm:$0xf]
      %v2318 = vld [vmem:[%s2305 + $0x48] sm:$0xf]
      %v2319 = vld [vmem:[%s2305 + $0x4c] sm:$0xf]
      %v2320 = vld [vmem:[%s2305 + $0x54] sm:$0xf]
      %v2321 = vld [vmem:[%s2305 + $0x58] sm:$0xf]
      %v2322 = vld [vmem:[%s2305 + $0x60] sm:$0xf]
      %v2323 = vld [vmem:[%s2305 + $0x64] sm:$0xf]
      %v2324 = vld [vmem:[%s2305 + $0x6c] sm:$0xf]
      %v2325 = vld [vmem:[%s2305 + $0x70] sm:$0xf]
      %v2326 = vld [vmem:[%s2305 + $0x78] sm:$0xf]
      %v2327 = vld [vmem:[%s2305 + $0x7c] sm:$0xf]
      %v2328 = vld [vmem:[%s2305 + $0x84] sm:$0xf]
      %v2329 = vld [vmem:[%s2305 + $0x88] sm:$0xf]
      %v2330 = vld [vmem:[%s2305 + $0x90] sm:$0xf]
      %v2331 = vld [vmem:[%s2305 + $0x94] sm:$0xf]
      %v2332 = vld [vmem:[%s2305 + $0x9c] sm:$0xf]
      %v2333 = vld [vmem:[%s2305 + $0xa0] sm:$0xf]
      %v2334 = vld [vmem:[%s2305 + $0xa8] sm:$0xf]
      %v2335 = vld [vmem:[%s2305 + $0xac] sm:$0xf]
      %v2336 = vld [vmem:[%s2305 + $0xb4] sm:$0xf]
      %v2337 = vld [vmem:[%s2305 + $0xb8] sm:$0xf]
      %v2370 = vunpack.c.l.b16 %v2306
      %v2371 = vunpack.c.l.b16 %v2307
      %v2372 = vunpack.c.l.b16 %v2308
      %v2373 = vunpack.c.l.b16 %v2309
      %v2374 = vunpack.c.l.b16 %v2310
      %v2375 = vunpack.c.l.b16 %v2311
      %v2376 = vunpack.c.l.b16 %v2312
      %v2377 = vunpack.c.l.b16 %v2313
      %v2378 = vunpack.c.l.b16 %v2314
      %v2379 = vunpack.c.l.b16 %v2315
      %v2380 = vunpack.c.l.b16 %v2316
      %v2381 = vunpack.c.l.b16 %v2317
      %v2382 = vunpack.c.l.b16 %v2318
      %v2383 = vunpack.c.l.b16 %v2319
      %v2384 = vunpack.c.l.b16 %v2320
      %v2385 = vunpack.c.l.b16 %v2321
      %v2386 = vunpack.c.l.b16 %v2322
      %v2387 = vunpack.c.l.b16 %v2323
      %v2388 = vunpack.c.l.b16 %v2324
      %v2389 = vunpack.c.l.b16 %v2325
      %v2390 = vunpack.c.l.b16 %v2326
      %v2391 = vunpack.c.l.b16 %v2327
      %v2392 = vunpack.c.l.b16 %v2328
      %v2393 = vunpack.c.l.b16 %v2329
      %v2394 = vunpack.c.l.b16 %v2330
      %v2395 = vunpack.c.l.b16 %v2331
      %v2396 = vunpack.c.l.b16 %v2332
      %v2397 = vunpack.c.l.b16 %v2333
      %v2398 = vunpack.c.l.b16 %v2334
      %v2399 = vunpack.c.l.b16 %v2335
      %v2400 = vunpack.c.l.b16 %v2336
      %v2401 = vunpack.c.l.b16 %v2337
      %v2402 = vpack.c.b16 %v2371, %v2370
      %v2403 = vpack.c.b16 %v2373, %v2372
      %v2404 = vpack.c.b16 %v2375, %v2374
      %v2405 = vpack.c.b16 %v2377, %v2376
      %v2406 = vpack.c.b16 %v2379, %v2378
      %v2407 = vpack.c.b16 %v2381, %v2380
      %v2408 = vpack.c.b16 %v2383, %v2382
      %v2409 = vpack.c.b16 %v2385, %v2384
      %v2410 = vpack.c.b16 %v2387, %v2386
      %v2411 = vpack.c.b16 %v2389, %v2388
      %v2412 = vpack.c.b16 %v2391, %v2390
      %v2413 = vpack.c.b16 %v2393, %v2392
      %v2414 = vpack.c.b16 %v2395, %v2394
      %v2415 = vpack.c.b16 %v2397, %v2396
      %v2416 = vpack.c.b16 %v2399, %v2398
      %v2417 = vpack.c.b16 %v2401, %v2400
      %2418 = vrot.lane.b32.xlu0 %v2402, 48
      %v2419 = vpop.permute.xlu0 %2418
      %2420 = vrot.lane.b32.xlu0 %v2403, 48
      %v2421 = vpop.permute.xlu0 %2420
      %2422 = vrot.lane.b32.xlu0 %v2404, 48
      %v2423 = vpop.permute.xlu0 %2422
      %2424 = vrot.lane.b32.xlu0 %v2405, 48
      %v2425 = vpop.permute.xlu0 %2424
      %2426 = vrot.lane.b32.xlu0 %v2406, 48
      %v2427 = vpop.permute.xlu0 %2426
      %2428 = vrot.lane.b32.xlu0 %v2407, 48
      %v2429 = vpop.permute.xlu0 %2428
      %2430 = vrot.lane.b32.xlu0 %v2408, 48
      %v2431 = vpop.permute.xlu0 %2430
      %2432 = vrot.lane.b32.xlu0 %v2409, 48
      %v2433 = vpop.permute.xlu0 %2432
      %2434 = vrot.lane.b32.xlu0 %v2410, 48
      %v2435 = vpop.permute.xlu0 %2434
      %2436 = vrot.lane.b32.xlu0 %v2411, 48
      %v2437 = vpop.permute.xlu0 %2436
      %2438 = vrot.lane.b32.xlu0 %v2412, 48
      %v2439 = vpop.permute.xlu0 %2438
      %2440 = vrot.lane.b32.xlu0 %v2413, 48
      %v2441 = vpop.permute.xlu0 %2440
      %2442 = vrot.lane.b32.xlu0 %v2414, 48
      %v2443 = vpop.permute.xlu0 %2442
      %2444 = vrot.lane.b32.xlu0 %v2415, 48
      %v2445 = vpop.permute.xlu0 %2444
      %2446 = vrot.lane.b32.xlu0 %v2416, 48
      %v2447 = vpop.permute.xlu0 %2446
      %2448 = vrot.lane.b32.xlu0 %v2417, 48
      %v2449 = vpop.permute.xlu0 %2448
      %vm2466 = vcmask 458112
      %2467 = vst.msk [vmem:[#allocation2] sm:$0xff] %vm2466, %v2419
      %2468 = vst.msk [vmem:[#allocation2 + $0x8] sm:$0xff] %vm2466, %v2421
      %2469 = vst.msk [vmem:[#allocation2 + $0x10] sm:$0xff] %vm2466, %v2423
      %2470 = vst.msk [vmem:[#allocation2 + $0x18] sm:$0xff] %vm2466, %v2425
      %2471 = vst.msk [vmem:[#allocation2 + $0x20] sm:$0xff] %vm2466, %v2427
      %2472 = vst.msk [vmem:[#allocation2 + $0x28] sm:$0xff] %vm2466, %v2429
      %2473 = vst.msk [vmem:[#allocation2 + $0x30] sm:$0xff] %vm2466, %v2431
      %2474 = vst.msk [vmem:[#allocation2 + $0x38] sm:$0xff] %vm2466, %v2433
      %2475 = vst.msk [vmem:[#allocation2 + $0x40] sm:$0xff] %vm2466, %v2435
      %2476 = vst.msk [vmem:[#allocation2 + $0x48] sm:$0xff] %vm2466, %v2437
      %2477 = vst.msk [vmem:[#allocation2 + $0x50] sm:$0xff] %vm2466, %v2439
      %2478 = vst.msk [vmem:[#allocation2 + $0x58] sm:$0xff] %vm2466, %v2441
      %2479 = vst.msk [vmem:[#allocation2 + $0x60] sm:$0xff] %vm2466, %v2443
      %2480 = vst.msk [vmem:[#allocation2 + $0x68] sm:$0xff] %vm2466, %v2445
      %2481 = vst.msk [vmem:[#allocation2 + $0x70] sm:$0xff] %vm2466, %v2447
      %2482 = vst.msk [vmem:[#allocation2 + $0x78] sm:$0xff] %vm2466, %v2449
      %v2483 = vld [vmem:[%s2305] sm:$0xf]
      %v2484 = vld [vmem:[%s2305 + $0x4] sm:$0xf]
      %v2485 = vld [vmem:[%s2305 + $0x8] sm:$0x1]
      %v2486 = vld [vmem:[%s2305 + $0xc] sm:$0xf]
      %v2487 = vld [vmem:[%s2305 + $0x10] sm:$0xf]
      %v2488 = vld [vmem:[%s2305 + $0x14] sm:$0x1]
      %v2489 = vld [vmem:[%s2305 + $0x18] sm:$0xf]
      %v2490 = vld [vmem:[%s2305 + $0x1c] sm:$0xf]
      %v2491 = vld [vmem:[%s2305 + $0x20] sm:$0x1]
      %v2492 = vld [vmem:[%s2305 + $0x24] sm:$0xf]
      %v2493 = vld [vmem:[%s2305 + $0x28] sm:$0xf]
      %v2494 = vld [vmem:[%s2305 + $0x2c] sm:$0x1]
      %v2495 = vld [vmem:[%s2305 + $0x30] sm:$0xf]
      %v2496 = vld [vmem:[%s2305 + $0x34] sm:$0xf]
      %v2497 = vld [vmem:[%s2305 + $0x38] sm:$0x1]
      %v2498 = vld [vmem:[%s2305 + $0x3c] sm:$0xf]
      %v2499 = vld [vmem:[%s2305 + $0x40] sm:$0xf]
      %v2500 = vld [vmem:[%s2305 + $0x44] sm:$0x1]
      %v2501 = vld [vmem:[%s2305 + $0x48] sm:$0xf]
      %v2502 = vld [vmem:[%s2305 + $0x4c] sm:$0xf]
      %v2503 = vld [vmem:[%s2305 + $0x50] sm:$0x1]
      %v2504 = vld [vmem:[%s2305 + $0x54] sm:$0xf]
      %v2505 = vld [vmem:[%s2305 + $0x58] sm:$0xf]
      %v2506 = vld [vmem:[%s2305 + $0x5c] sm:$0x1]
      %v2507 = vld [vmem:[%s2305 + $0x60] sm:$0xf]
      %v2508 = vld [vmem:[%s2305 + $0x64] sm:$0xf]
      %v2509 = vld [vmem:[%s2305 + $0x68] sm:$0x1]
      %v2510 = vld [vmem:[%s2305 + $0x6c] sm:$0xf]
      %v2511 = vld [vmem:[%s2305 + $0x70] sm:$0xf]
      %v2512 = vld [vmem:[%s2305 + $0x74] sm:$0x1]
      %v2513 = vld [vmem:[%s2305 + $0x78] sm:$0xf]
      %v2514 = vld [vmem:[%s2305 + $0x7c] sm:$0xf]
      %v2515 = vld [vmem:[%s2305 + $0x80] sm:$0x1]
      %v2516 = vld [vmem:[%s2305 + $0x84] sm:$0xf]
      %v2517 = vld [vmem:[%s2305 + $0x88] sm:$0xf]
      %v2518 = vld [vmem:[%s2305 + $0x8c] sm:$0x1]
      %v2519 = vld [vmem:[%s2305 + $0x90] sm:$0xf]
      %v2520 = vld [vmem:[%s2305 + $0x94] sm:$0xf]
      %v2521 = vld [vmem:[%s2305 + $0x98] sm:$0x1]
      %v2522 = vld [vmem:[%s2305 + $0x9c] sm:$0xf]
      %v2523 = vld [vmem:[%s2305 + $0xa0] sm:$0xf]
      %v2524 = vld [vmem:[%s2305 + $0xa4] sm:$0x1]
      %v2525 = vld [vmem:[%s2305 + $0xa8] sm:$0xf]
      %v2526 = vld [vmem:[%s2305 + $0xac] sm:$0xf]
      %v2527 = vld [vmem:[%s2305 + $0xb0] sm:$0x1]
      %v2528 = vld [vmem:[%s2305 + $0xb4] sm:$0xf]
      %v2529 = vld [vmem:[%s2305 + $0xb8] sm:$0xf]
      %v2530 = vld [vmem:[%s2305 + $0xbc] sm:$0x1]
      %v2532 = vshrl.u32 %v2483, 16
      %v2534 = vrot.slane %v2532, 4
      %v2535 = vshll.u32 %v2483, 16
      %v2537 = vrot.slane %v2535, 5
      %v2538 = vor.u32 %v2534, %v2537
      %v2539 = vrot.slane %v2538, 4
      %v2541 = vshll.u32 %v2484, 16
      %v2543 = vrot.slane %v2541, 5
      %v2544 = vsel %vm439, %v2539, %v2543
      %v2545 = vshrl.u32 %v2484, 16
      %v2547 = vrot.slane %v2545, 4
      %v2548 = vor.u32 %v2547, %v2543
      %v2549 = vrot.slane %v2548, 4
      %v2551 = vshll.u32 %v2485, 16
      %v2553 = vrot.slane %v2551, 5
      %v2554 = vsel %vm439, %v2549, %v2553
      %v2556 = vshrl.u32 %v2486, 16
      %v2558 = vrot.slane %v2556, 4
      %v2559 = vshll.u32 %v2486, 16
      %v2561 = vrot.slane %v2559, 5
      %v2562 = vor.u32 %v2558, %v2561
      %v2563 = vrot.slane %v2562, 4
      %v2565 = vshll.u32 %v2487, 16
      %v2567 = vrot.slane %v2565, 5
      %v2568 = vsel %vm439, %v2563, %v2567
      %v2569 = vshrl.u32 %v2487, 16
      %v2571 = vrot.slane %v2569, 4
      %v2572 = vor.u32 %v2571, %v2567
      %v2573 = vrot.slane %v2572, 4
      %v2575 = vshll.u32 %v2488, 16
      %v2577 = vrot.slane %v2575, 5
      %v2578 = vsel %vm439, %v2573, %v2577
      %v2580 = vshrl.u32 %v2489, 16
      %v2582 = vrot.slane %v2580, 4
      %v2583 = vshll.u32 %v2489, 16
      %v2585 = vrot.slane %v2583, 5
      %v2586 = vor.u32 %v2582, %v2585
      %v2587 = vrot.slane %v2586, 4
      %v2589 = vshll.u32 %v2490, 16
      %v2591 = vrot.slane %v2589, 5
      %v2592 = vsel %vm439, %v2587, %v2591
      %v2593 = vshrl.u32 %v2490, 16
      %v2595 = vrot.slane %v2593, 4
      %v2596 = vor.u32 %v2595, %v2591
      %v2597 = vrot.slane %v2596, 4
      %v2599 = vshll.u32 %v2491, 16
      %v2601 = vrot.slane %v2599, 5
      %v2602 = vsel %vm439, %v2597, %v2601
      %v2604 = vshrl.u32 %v2492, 16
      %v2606 = vrot.slane %v2604, 4
      %v2607 = vshll.u32 %v2492, 16
      %v2609 = vrot.slane %v2607, 5
      %v2610 = vor.u32 %v2606, %v2609
      %v2611 = vrot.slane %v2610, 4
      %v2613 = vshll.u32 %v2493, 16
      %v2615 = vrot.slane %v2613, 5
      %v2616 = vsel %vm439, %v2611, %v2615
      %v2617 = vshrl.u32 %v2493, 16
      %v2619 = vrot.slane %v2617, 4
      %v2620 = vor.u32 %v2619, %v2615
      %v2621 = vrot.slane %v2620, 4
      %v2623 = vshll.u32 %v2494, 16
      %v2625 = vrot.slane %v2623, 5
      %v2626 = vsel %vm439, %v2621, %v2625
      %v2628 = vshrl.u32 %v2495, 16
      %v2630 = vrot.slane %v2628, 4
      %v2631 = vshll.u32 %v2495, 16
      %v2633 = vrot.slane %v2631, 5
      %v2634 = vor.u32 %v2630, %v2633
      %v2635 = vrot.slane %v2634, 4
      %v2637 = vshll.u32 %v2496, 16
      %v2639 = vrot.slane %v2637, 5
      %v2640 = vsel %vm439, %v2635, %v2639
      %v2641 = vshrl.u32 %v2496, 16
      %v2643 = vrot.slane %v2641, 4
      %v2644 = vor.u32 %v2643, %v2639
      %v2645 = vrot.slane %v2644, 4
      %v2647 = vshll.u32 %v2497, 16
      %v2649 = vrot.slane %v2647, 5
      %v2650 = vsel %vm439, %v2645, %v2649
      %v2652 = vshrl.u32 %v2498, 16
      %v2654 = vrot.slane %v2652, 4
      %v2655 = vshll.u32 %v2498, 16
      %v2657 = vrot.slane %v2655, 5
      %v2658 = vor.u32 %v2654, %v2657
      %v2659 = vrot.slane %v2658, 4
      %v2661 = vshll.u32 %v2499, 16
      %v2663 = vrot.slane %v2661, 5
      %v2664 = vsel %vm439, %v2659, %v2663
      %v2665 = vshrl.u32 %v2499, 16
      %v2667 = vrot.slane %v2665, 4
      %v2668 = vor.u32 %v2667, %v2663
      %v2669 = vrot.slane %v2668, 4
      %v2671 = vshll.u32 %v2500, 16
      %v2673 = vrot.slane %v2671, 5
      %v2674 = vsel %vm439, %v2669, %v2673
      %v2676 = vshrl.u32 %v2501, 16
      %v2678 = vrot.slane %v2676, 4
      %v2679 = vshll.u32 %v2501, 16
      %v2681 = vrot.slane %v2679, 5
      %v2682 = vor.u32 %v2678, %v2681
      %v2683 = vrot.slane %v2682, 4
      %v2685 = vshll.u32 %v2502, 16
      %v2687 = vrot.slane %v2685, 5
      %v2688 = vsel %vm439, %v2683, %v2687
      %v2689 = vshrl.u32 %v2502, 16
      %v2691 = vrot.slane %v2689, 4
      %v2692 = vor.u32 %v2691, %v2687
      %v2693 = vrot.slane %v2692, 4
      %v2695 = vshll.u32 %v2503, 16
      %v2697 = vrot.slane %v2695, 5
      %v2698 = vsel %vm439, %v2693, %v2697
      %v2700 = vshrl.u32 %v2504, 16
      %v2702 = vrot.slane %v2700, 4
      %v2703 = vshll.u32 %v2504, 16
      %v2705 = vrot.slane %v2703, 5
      %v2706 = vor.u32 %v2702, %v2705
      %v2707 = vrot.slane %v2706, 4
      %v2709 = vshll.u32 %v2505, 16
      %v2711 = vrot.slane %v2709, 5
      %v2712 = vsel %vm439, %v2707, %v2711
      %v2713 = vshrl.u32 %v2505, 16
      %v2715 = vrot.slane %v2713, 4
      %v2716 = vor.u32 %v2715, %v2711
      %v2717 = vrot.slane %v2716, 4
      %v2719 = vshll.u32 %v2506, 16
      %v2721 = vrot.slane %v2719, 5
      %v2722 = vsel %vm439, %v2717, %v2721
      %v2724 = vshrl.u32 %v2507, 16
      %v2726 = vrot.slane %v2724, 4
      %v2727 = vshll.u32 %v2507, 16
      %v2729 = vrot.slane %v2727, 5
      %v2730 = vor.u32 %v2726, %v2729
      %v2731 = vrot.slane %v2730, 4
      %v2733 = vshll.u32 %v2508, 16
      %v2735 = vrot.slane %v2733, 5
      %v2736 = vsel %vm439, %v2731, %v2735
      %v2737 = vshrl.u32 %v2508, 16
      %v2739 = vrot.slane %v2737, 4
      %v2740 = vor.u32 %v2739, %v2735
      %v2741 = vrot.slane %v2740, 4
      %v2743 = vshll.u32 %v2509, 16
      %v2745 = vrot.slane %v2743, 5
      %v2746 = vsel %vm439, %v2741, %v2745
      %v2748 = vshrl.u32 %v2510, 16
      %v2750 = vrot.slane %v2748, 4
      %v2751 = vshll.u32 %v2510, 16
      %v2753 = vrot.slane %v2751, 5
      %v2754 = vor.u32 %v2750, %v2753
      %v2755 = vrot.slane %v2754, 4
      %v2757 = vshll.u32 %v2511, 16
      %v2759 = vrot.slane %v2757, 5
      %v2760 = vsel %vm439, %v2755, %v2759
      %v2761 = vshrl.u32 %v2511, 16
      %v2763 = vrot.slane %v2761, 4
      %v2764 = vor.u32 %v2763, %v2759
      %v2765 = vrot.slane %v2764, 4
      %v2767 = vshll.u32 %v2512, 16
      %v2769 = vrot.slane %v2767, 5
      %v2770 = vsel %vm439, %v2765, %v2769
      %v2772 = vshrl.u32 %v2513, 16
      %v2774 = vrot.slane %v2772, 4
      %v2775 = vshll.u32 %v2513, 16
      %v2777 = vrot.slane %v2775, 5
      %v2778 = vor.u32 %v2774, %v2777
      %v2779 = vrot.slane %v2778, 4
      %v2781 = vshll.u32 %v2514, 16
      %v2783 = vrot.slane %v2781, 5
      %v2784 = vsel %vm439, %v2779, %v2783
      %v2785 = vshrl.u32 %v2514, 16
      %v2787 = vrot.slane %v2785, 4
      %v2788 = vor.u32 %v2787, %v2783
      %v2789 = vrot.slane %v2788, 4
      %v2791 = vshll.u32 %v2515, 16
      %v2793 = vrot.slane %v2791, 5
      %v2794 = vsel %vm439, %v2789, %v2793
      %v2796 = vshrl.u32 %v2516, 16
      %v2798 = vrot.slane %v2796, 4
      %v2799 = vshll.u32 %v2516, 16
      %v2801 = vrot.slane %v2799, 5
      %v2802 = vor.u32 %v2798, %v2801
      %v2803 = vrot.slane %v2802, 4
      %v2805 = vshll.u32 %v2517, 16
      %v2807 = vrot.slane %v2805, 5
      %v2808 = vsel %vm439, %v2803, %v2807
      %v2809 = vshrl.u32 %v2517, 16
      %v2811 = vrot.slane %v2809, 4
      %v2812 = vor.u32 %v2811, %v2807
      %v2813 = vrot.slane %v2812, 4
      %v2815 = vshll.u32 %v2518, 16
      %v2817 = vrot.slane %v2815, 5
      %v2818 = vsel %vm439, %v2813, %v2817
      %v2820 = vshrl.u32 %v2519, 16
      %v2822 = vrot.slane %v2820, 4
      %v2823 = vshll.u32 %v2519, 16
      %v2825 = vrot.slane %v2823, 5
      %v2826 = vor.u32 %v2822, %v2825
      %v2827 = vrot.slane %v2826, 4
      %v2829 = vshll.u32 %v2520, 16
      %v2831 = vrot.slane %v2829, 5
      %v2832 = vsel %vm439, %v2827, %v2831
      %v2833 = vshrl.u32 %v2520, 16
      %v2835 = vrot.slane %v2833, 4
      %v2836 = vor.u32 %v2835, %v2831
      %v2837 = vrot.slane %v2836, 4
      %v2839 = vshll.u32 %v2521, 16
      %v2841 = vrot.slane %v2839, 5
      %v2842 = vsel %vm439, %v2837, %v2841
      %v2844 = vshrl.u32 %v2522, 16
      %v2846 = vrot.slane %v2844, 4
      %v2847 = vshll.u32 %v2522, 16
      %v2849 = vrot.slane %v2847, 5
      %v2850 = vor.u32 %v2846, %v2849
      %v2851 = vrot.slane %v2850, 4
      %v2853 = vshll.u32 %v2523, 16
      %v2855 = vrot.slane %v2853, 5
      %v2856 = vsel %vm439, %v2851, %v2855
      %v2857 = vshrl.u32 %v2523, 16
      %v2859 = vrot.slane %v2857, 4
      %v2860 = vor.u32 %v2859, %v2855
      %v2861 = vrot.slane %v2860, 4
      %v2863 = vshll.u32 %v2524, 16
      %v2865 = vrot.slane %v2863, 5
      %v2866 = vsel %vm439, %v2861, %v2865
      %v2868 = vshrl.u32 %v2525, 16
      %v2870 = vrot.slane %v2868, 4
      %v2871 = vshll.u32 %v2525, 16
      %v2873 = vrot.slane %v2871, 5
      %v2874 = vor.u32 %v2870, %v2873
      %v2875 = vrot.slane %v2874, 4
      %v2877 = vshll.u32 %v2526, 16
      %v2879 = vrot.slane %v2877, 5
      %v2880 = vsel %vm439, %v2875, %v2879
      %v2881 = vshrl.u32 %v2526, 16
      %v2883 = vrot.slane %v2881, 4
      %v2884 = vor.u32 %v2883, %v2879
      %v2885 = vrot.slane %v2884, 4
      %v2887 = vshll.u32 %v2527, 16
      %v2889 = vrot.slane %v2887, 5
      %v2890 = vsel %vm439, %v2885, %v2889
      %v2892 = vshrl.u32 %v2528, 16
      %v2894 = vrot.slane %v2892, 4
      %v2895 = vshll.u32 %v2528, 16
      %v2897 = vrot.slane %v2895, 5
      %v2898 = vor.u32 %v2894, %v2897
      %v2899 = vrot.slane %v2898, 4
      %v2901 = vshll.u32 %v2529, 16
      %v2903 = vrot.slane %v2901, 5
      %v2904 = vsel %vm439, %v2899, %v2903
      %v2905 = vshrl.u32 %v2529, 16
      %v2907 = vrot.slane %v2905, 4
      %v2908 = vor.u32 %v2907, %v2903
      %v2909 = vrot.slane %v2908, 4
      %v2911 = vshll.u32 %v2530, 16
      %v2913 = vrot.slane %v2911, 5
      %v2914 = vsel %vm439, %v2909, %v2913
      %v2915 = vunpack.c.l.b16 %v2544
      %v2916 = vunpack.c.l.b16 %v2554
      %v2917 = vunpack.c.l.b16 %v2568
      %v2918 = vunpack.c.l.b16 %v2578
      %v2919 = vunpack.c.l.b16 %v2592
      %v2920 = vunpack.c.l.b16 %v2602
      %v2921 = vunpack.c.l.b16 %v2616
      %v2922 = vunpack.c.l.b16 %v2626
      %v2923 = vunpack.c.l.b16 %v2640
      %v2924 = vunpack.c.l.b16 %v2650
      %v2925 = vunpack.c.l.b16 %v2664
      %v2926 = vunpack.c.l.b16 %v2674
      %v2927 = vunpack.c.l.b16 %v2688
      %v2928 = vunpack.c.l.b16 %v2698
      %v2929 = vunpack.c.l.b16 %v2712
      %v2930 = vunpack.c.l.b16 %v2722
      %v2931 = vunpack.c.l.b16 %v2736
      %v2932 = vunpack.c.l.b16 %v2746
      %v2933 = vunpack.c.l.b16 %v2760
      %v2934 = vunpack.c.l.b16 %v2770
      %v2935 = vunpack.c.l.b16 %v2784
      %v2936 = vunpack.c.l.b16 %v2794
      %v2937 = vunpack.c.l.b16 %v2808
      %v2938 = vunpack.c.l.b16 %v2818
      %v2939 = vunpack.c.l.b16 %v2832
      %v2940 = vunpack.c.l.b16 %v2842
      %v2941 = vunpack.c.l.b16 %v2856
      %v2942 = vunpack.c.l.b16 %v2866
      %v2943 = vunpack.c.l.b16 %v2880
      %v2944 = vunpack.c.l.b16 %v2890
      %v2945 = vunpack.c.l.b16 %v2904
      %v2946 = vunpack.c.l.b16 %v2914
      %v2947 = vpack.c.b16 %v2916, %v2915
      %v2948 = vpack.c.b16 %v2918, %v2917
      %v2949 = vpack.c.b16 %v2920, %v2919
      %v2950 = vpack.c.b16 %v2922, %v2921
      %v2951 = vpack.c.b16 %v2924, %v2923
      %v2952 = vpack.c.b16 %v2926, %v2925
      %v2953 = vpack.c.b16 %v2928, %v2927
      %v2954 = vpack.c.b16 %v2930, %v2929
      %v2955 = vpack.c.b16 %v2932, %v2931
      %v2956 = vpack.c.b16 %v2934, %v2933
      %v2957 = vpack.c.b16 %v2936, %v2935
      %v2958 = vpack.c.b16 %v2938, %v2937
      %v2959 = vpack.c.b16 %v2940, %v2939
      %v2960 = vpack.c.b16 %v2942, %v2941
      %v2961 = vpack.c.b16 %v2944, %v2943
      %v2962 = vpack.c.b16 %v2946, %v2945
      %2963 = vrot.lane.b32.xlu0 %v2947, 56
      %v2964 = vpop.permute.xlu0 %2963
      %2965 = vrot.lane.b32.xlu0 %v2948, 56
      %v2966 = vpop.permute.xlu0 %2965
      %2967 = vrot.lane.b32.xlu0 %v2949, 56
      %v2968 = vpop.permute.xlu0 %2967
      %2969 = vrot.lane.b32.xlu0 %v2950, 56
      %v2970 = vpop.permute.xlu0 %2969
      %2971 = vrot.lane.b32.xlu0 %v2951, 56
      %v2972 = vpop.permute.xlu0 %2971
      %2973 = vrot.lane.b32.xlu0 %v2952, 56
      %v2974 = vpop.permute.xlu0 %2973
      %2975 = vrot.lane.b32.xlu0 %v2953, 56
      %v2976 = vpop.permute.xlu0 %2975
      %2977 = vrot.lane.b32.xlu0 %v2954, 56
      %v2978 = vpop.permute.xlu0 %2977
      %2979 = vrot.lane.b32.xlu0 %v2955, 56
      %v2980 = vpop.permute.xlu0 %2979
      %2981 = vrot.lane.b32.xlu0 %v2956, 56
      %v2982 = vpop.permute.xlu0 %2981
      %2983 = vrot.lane.b32.xlu0 %v2957, 56
      %v2984 = vpop.permute.xlu0 %2983
      %2985 = vrot.lane.b32.xlu0 %v2958, 56
      %v2986 = vpop.permute.xlu0 %2985
      %2987 = vrot.lane.b32.xlu0 %v2959, 56
      %v2988 = vpop.permute.xlu0 %2987
      %2989 = vrot.lane.b32.xlu0 %v2960, 56
      %v2990 = vpop.permute.xlu0 %2989
      %2991 = vrot.lane.b32.xlu0 %v2961, 56
      %v2992 = vpop.permute.xlu0 %2991
      %2993 = vrot.lane.b32.xlu0 %v2962, 56
      %v2994 = vpop.permute.xlu0 %2993
      %vm3011 = vcmask 523712
      %3012 = vst.msk [vmem:[#allocation2] sm:$0xff] %vm3011, %v2964
      %3013 = vst.msk [vmem:[#allocation2 + $0x8] sm:$0xff] %vm3011, %v2966
      %3014 = vst.msk [vmem:[#allocation2 + $0x10] sm:$0xff] %vm3011, %v2968
      %3015 = vst.msk [vmem:[#allocation2 + $0x18] sm:$0xff] %vm3011, %v2970
      %3016 = vst.msk [vmem:[#allocation2 + $0x20] sm:$0xff] %vm3011, %v2972
      %3017 = vst.msk [vmem:[#allocation2 + $0x28] sm:$0xff] %vm3011, %v2974
      %3018 = vst.msk [vmem:[#allocation2 + $0x30] sm:$0xff] %vm3011, %v2976
      %3019 = vst.msk [vmem:[#allocation2 + $0x38] sm:$0xff] %vm3011, %v2978
      %3020 = vst.msk [vmem:[#allocation2 + $0x40] sm:$0xff] %vm3011, %v2980
      %3021 = vst.msk [vmem:[#allocation2 + $0x48] sm:$0xff] %vm3011, %v2982
      %3022 = vst.msk [vmem:[#allocation2 + $0x50] sm:$0xff] %vm3011, %v2984
      %3023 = vst.msk [vmem:[#allocation2 + $0x58] sm:$0xff] %vm3011, %v2986
      %3024 = vst.msk [vmem:[#allocation2 + $0x60] sm:$0xff] %vm3011, %v2988
      %3025 = vst.msk [vmem:[#allocation2 + $0x68] sm:$0xff] %vm3011, %v2990
      %3026 = vst.msk [vmem:[#allocation2 + $0x70] sm:$0xff] %vm3011, %v2992
      %3027 = vst.msk [vmem:[#allocation2 + $0x78] sm:$0xff] %vm3011, %v2994
      %v3028 = vld [vmem:[%s2305] sm:$0xe]
      %v3029 = vld [vmem:[%s2305 + $0x4] sm:$0xf]
      %v3030 = vld [vmem:[%s2305 + $0x8] sm:$0x1]
      %v3031 = vld [vmem:[%s2305 + $0xc] sm:$0xe]
      %v3032 = vld [vmem:[%s2305 + $0x10] sm:$0xf]
      %v3033 = vld [vmem:[%s2305 + $0x14] sm:$0x1]
      %v3034 = vld [vmem:[%s2305 + $0x18] sm:$0xe]
      %v3035 = vld [vmem:[%s2305 + $0x1c] sm:$0xf]
      %v3036 = vld [vmem:[%s2305 + $0x20] sm:$0x1]
      %v3037 = vld [vmem:[%s2305 + $0x24] sm:$0xe]
      %v3038 = vld [vmem:[%s2305 + $0x28] sm:$0xf]
      %v3039 = vld [vmem:[%s2305 + $0x2c] sm:$0x1]
      %v3040 = vld [vmem:[%s2305 + $0x30] sm:$0xe]
      %v3041 = vld [vmem:[%s2305 + $0x34] sm:$0xf]
      %v3042 = vld [vmem:[%s2305 + $0x38] sm:$0x1]
      %v3043 = vld [vmem:[%s2305 + $0x3c] sm:$0xe]
      %v3044 = vld [vmem:[%s2305 + $0x40] sm:$0xf]
      %v3045 = vld [vmem:[%s2305 + $0x44] sm:$0x1]
      %v3046 = vld [vmem:[%s2305 + $0x48] sm:$0xe]
      %v3047 = vld [vmem:[%s2305 + $0x4c] sm:$0xf]
      %v3048 = vld [vmem:[%s2305 + $0x50] sm:$0x1]
      %v3049 = vld [vmem:[%s2305 + $0x54] sm:$0xe]
      %v3050 = vld [vmem:[%s2305 + $0x58] sm:$0xf]
      %v3051 = vld [vmem:[%s2305 + $0x5c] sm:$0x1]
      %v3052 = vld [vmem:[%s2305 + $0x60] sm:$0xe]
      %v3053 = vld [vmem:[%s2305 + $0x64] sm:$0xf]
      %v3054 = vld [vmem:[%s2305 + $0x68] sm:$0x1]
      %v3055 = vld [vmem:[%s2305 + $0x6c] sm:$0xe]
      %v3056 = vld [vmem:[%s2305 + $0x70] sm:$0xf]
      %v3057 = vld [vmem:[%s2305 + $0x74] sm:$0x1]
      %v3058 = vld [vmem:[%s2305 + $0x78] sm:$0xe]
      %v3059 = vld [vmem:[%s2305 + $0x7c] sm:$0xf]
      %v3060 = vld [vmem:[%s2305 + $0x80] sm:$0x1]
      %v3061 = vld [vmem:[%s2305 + $0x84] sm:$0xe]
      %v3062 = vld [vmem:[%s2305 + $0x88] sm:$0xf]
      %v3063 = vld [vmem:[%s2305 + $0x8c] sm:$0x1]
      %v3064 = vld [vmem:[%s2305 + $0x90] sm:$0xe]
      %v3065 = vld [vmem:[%s2305 + $0x94] sm:$0xf]
      %v3066 = vld [vmem:[%s2305 + $0x98] sm:$0x1]
      %v3067 = vld [vmem:[%s2305 + $0x9c] sm:$0xe]
      %v3068 = vld [vmem:[%s2305 + $0xa0] sm:$0xf]
      %v3069 = vld [vmem:[%s2305 + $0xa4] sm:$0x1]
      %v3070 = vld [vmem:[%s2305 + $0xa8] sm:$0xe]
      %v3071 = vld [vmem:[%s2305 + $0xac] sm:$0xf]
      %v3072 = vld [vmem:[%s2305 + $0xb0] sm:$0x1]
      %v3073 = vld [vmem:[%s2305 + $0xb4] sm:$0xe]
      %v3074 = vld [vmem:[%s2305 + $0xb8] sm:$0xf]
      %v3075 = vld [vmem:[%s2305 + $0xbc] sm:$0x1]
      %v3124 = vrot.slane %v3028, 5
      %v3125 = vrot.slane %v3124, 4
      %v3126 = vrot.slane %v3029, 5
      %v3127 = vsel %vm1035, %v3125, %v3126
      %v3128 = vrot.slane %v3126, 4
      %v3129 = vrot.slane %v3030, 5
      %v3130 = vsel %vm1035, %v3128, %v3129
      %v3131 = vrot.slane %v3031, 5
      %v3132 = vrot.slane %v3131, 4
      %v3133 = vrot.slane %v3032, 5
      %v3134 = vsel %vm1035, %v3132, %v3133
      %v3135 = vrot.slane %v3133, 4
      %v3136 = vrot.slane %v3033, 5
      %v3137 = vsel %vm1035, %v3135, %v3136
      %v3138 = vrot.slane %v3034, 5
      %v3139 = vrot.slane %v3138, 4
      %v3140 = vrot.slane %v3035, 5
      %v3141 = vsel %vm1035, %v3139, %v3140
      %v3142 = vrot.slane %v3140, 4
      %v3143 = vrot.slane %v3036, 5
      %v3144 = vsel %vm1035, %v3142, %v3143
      %v3145 = vrot.slane %v3037, 5
      %v3146 = vrot.slane %v3145, 4
      %v3147 = vrot.slane %v3038, 5
      %v3148 = vsel %vm1035, %v3146, %v3147
      %v3149 = vrot.slane %v3147, 4
      %v3150 = vrot.slane %v3039, 5
      %v3151 = vsel %vm1035, %v3149, %v3150
      %v3152 = vrot.slane %v3040, 5
      %v3153 = vrot.slane %v3152, 4
      %v3154 = vrot.slane %v3041, 5
      %v3155 = vsel %vm1035, %v3153, %v3154
      %v3156 = vrot.slane %v3154, 4
      %v3157 = vrot.slane %v3042, 5
      %v3158 = vsel %vm1035, %v3156, %v3157
      %v3159 = vrot.slane %v3043, 5
      %v3160 = vrot.slane %v3159, 4
      %v3161 = vrot.slane %v3044, 5
      %v3162 = vsel %vm1035, %v3160, %v3161
      %v3163 = vrot.slane %v3161, 4
      %v3164 = vrot.slane %v3045, 5
      %v3165 = vsel %vm1035, %v3163, %v3164
      %v3166 = vrot.slane %v3046, 5
      %v3167 = vrot.slane %v3166, 4
      %v3168 = vrot.slane %v3047, 5
      %v3169 = vsel %vm1035, %v3167, %v3168
      %v3170 = vrot.slane %v3168, 4
      %v3171 = vrot.slane %v3048, 5
      %v3172 = vsel %vm1035, %v3170, %v3171
      %v3173 = vrot.slane %v3049, 5
      %v3174 = vrot.slane %v3173, 4
      %v3175 = vrot.slane %v3050, 5
      %v3176 = vsel %vm1035, %v3174, %v3175
      %v3177 = vrot.slane %v3175, 4
      %v3178 = vrot.slane %v3051, 5
      %v3179 = vsel %vm1035, %v3177, %v3178
      %v3180 = vrot.slane %v3052, 5
      %v3181 = vrot.slane %v3180, 4
      %v3182 = vrot.slane %v3053, 5
      %v3183 = vsel %vm1035, %v3181, %v3182
      %v3184 = vrot.slane %v3182, 4
      %v3185 = vrot.slane %v3054, 5
      %v3186 = vsel %vm1035, %v3184, %v3185
      %v3187 = vrot.slane %v3055, 5
      %v3188 = vrot.slane %v3187, 4
      %v3189 = vrot.slane %v3056, 5
      %v3190 = vsel %vm1035, %v3188, %v3189
      %v3191 = vrot.slane %v3189, 4
      %v3192 = vrot.slane %v3057, 5
      %v3193 = vsel %vm1035, %v3191, %v3192
      %v3194 = vrot.slane %v3058, 5
      %v3195 = vrot.slane %v3194, 4
      %v3196 = vrot.slane %v3059, 5
      %v3197 = vsel %vm1035, %v3195, %v3196
      %v3198 = vrot.slane %v3196, 4
      %v3199 = vrot.slane %v3060, 5
      %v3200 = vsel %vm1035, %v3198, %v3199
      %v3201 = vrot.slane %v3061, 5
      %v3202 = vrot.slane %v3201, 4
      %v3203 = vrot.slane %v3062, 5
      %v3204 = vsel %vm1035, %v3202, %v3203
      %v3205 = vrot.slane %v3203, 4
      %v3206 = vrot.slane %v3063, 5
      %v3207 = vsel %vm1035, %v3205, %v3206
      %v3208 = vrot.slane %v3064, 5
      %v3209 = vrot.slane %v3208, 4
      %v3210 = vrot.slane %v3065, 5
      %v3211 = vsel %vm1035, %v3209, %v3210
      %v3212 = vrot.slane %v3210, 4
      %v3213 = vrot.slane %v3066, 5
      %v3214 = vsel %vm1035, %v3212, %v3213
      %v3215 = vrot.slane %v3067, 5
      %v3216 = vrot.slane %v3215, 4
      %v3217 = vrot.slane %v3068, 5
      %v3218 = vsel %vm1035, %v3216, %v3217
      %v3219 = vrot.slane %v3217, 4
      %v3220 = vrot.slane %v3069, 5
      %v3221 = vsel %vm1035, %v3219, %v3220
      %v3222 = vrot.slane %v3070, 5
      %v3223 = vrot.slane %v3222, 4
      %v3224 = vrot.slane %v3071, 5
      %v3225 = vsel %vm1035, %v3223, %v3224
      %v3226 = vrot.slane %v3224, 4
      %v3227 = vrot.slane %v3072, 5
      %v3228 = vsel %vm1035, %v3226, %v3227
      %v3229 = vrot.slane %v3073, 5
      %v3230 = vrot.slane %v3229, 4
      %v3231 = vrot.slane %v3074, 5
      %v3232 = vsel %vm1035, %v3230, %v3231
      %v3233 = vrot.slane %v3231, 4
      %v3234 = vrot.slane %v3075, 5
      %v3235 = vsel %vm1035, %v3233, %v3234
      %v3236 = vunpack.c.l.b16 %v3127
      %v3237 = vunpack.c.l.b16 %v3130
      %v3238 = vunpack.c.l.b16 %v3134
      %v3239 = vunpack.c.l.b16 %v3137
      %v3240 = vunpack.c.l.b16 %v3141
      %v3241 = vunpack.c.l.b16 %v3144
      %v3242 = vunpack.c.l.b16 %v3148
      %v3243 = vunpack.c.l.b16 %v3151
      %v3244 = vunpack.c.l.b16 %v3155
      %v3245 = vunpack.c.l.b16 %v3158
      %v3246 = vunpack.c.l.b16 %v3162
      %v3247 = vunpack.c.l.b16 %v3165
      %v3248 = vunpack.c.l.b16 %v3169
      %v3249 = vunpack.c.l.b16 %v3172
      %v3250 = vunpack.c.l.b16 %v3176
      %v3251 = vunpack.c.l.b16 %v3179
      %v3252 = vunpack.c.l.b16 %v3183
      %v3253 = vunpack.c.l.b16 %v3186
      %v3254 = vunpack.c.l.b16 %v3190
      %v3255 = vunpack.c.l.b16 %v3193
      %v3256 = vunpack.c.l.b16 %v3197
      %v3257 = vunpack.c.l.b16 %v3200
      %v3258 = vunpack.c.l.b16 %v3204
      %v3259 = vunpack.c.l.b16 %v3207
      %v3260 = vunpack.c.l.b16 %v3211
      %v3261 = vunpack.c.l.b16 %v3214
      %v3262 = vunpack.c.l.b16 %v3218
      %v3263 = vunpack.c.l.b16 %v3221
      %v3264 = vunpack.c.l.b16 %v3225
      %v3265 = vunpack.c.l.b16 %v3228
      %v3266 = vunpack.c.l.b16 %v3232
      %v3267 = vunpack.c.l.b16 %v3235
      %v3268 = vpack.c.b16 %v3237, %v3236
      %v3269 = vpack.c.b16 %v3239, %v3238
      %v3270 = vpack.c.b16 %v3241, %v3240
      %v3271 = vpack.c.b16 %v3243, %v3242
      %v3272 = vpack.c.b16 %v3245, %v3244
      %v3273 = vpack.c.b16 %v3247, %v3246
      %v3274 = vpack.c.b16 %v3249, %v3248
      %v3275 = vpack.c.b16 %v3251, %v3250
      %v3276 = vpack.c.b16 %v3253, %v3252
      %v3277 = vpack.c.b16 %v3255, %v3254
      %v3278 = vpack.c.b16 %v3257, %v3256
      %v3279 = vpack.c.b16 %v3259, %v3258
      %v3280 = vpack.c.b16 %v3261, %v3260
      %v3281 = vpack.c.b16 %v3263, %v3262
      %v3282 = vpack.c.b16 %v3265, %v3264
      %v3283 = vpack.c.b16 %v3267, %v3266
      %3284 = vrot.lane.b32.xlu0 %v3268, 64
      %v3285 = vpop.permute.xlu0 %3284
      %3286 = vrot.lane.b32.xlu0 %v3269, 64
      %v3287 = vpop.permute.xlu0 %3286
      %3288 = vrot.lane.b32.xlu0 %v3270, 64
      %v3289 = vpop.permute.xlu0 %3288
      %3290 = vrot.lane.b32.xlu0 %v3271, 64
      %v3291 = vpop.permute.xlu0 %3290
      %3292 = vrot.lane.b32.xlu0 %v3272, 64
      %v3293 = vpop.permute.xlu0 %3292
      %3294 = vrot.lane.b32.xlu0 %v3273, 64
      %v3295 = vpop.permute.xlu0 %3294
      %3296 = vrot.lane.b32.xlu0 %v3274, 64
      %v3297 = vpop.permute.xlu0 %3296
      %3298 = vrot.lane.b32.xlu0 %v3275, 64
      %v3299 = vpop.permute.xlu0 %3298
      %3300 = vrot.lane.b32.xlu0 %v3276, 64
      %v3301 = vpop.permute.xlu0 %3300
      %3302 = vrot.lane.b32.xlu0 %v3277, 64
      %v3303 = vpop.permute.xlu0 %3302
      %3304 = vrot.lane.b32.xlu0 %v3278, 64
      %v3305 = vpop.permute.xlu0 %3304
      %3306 = vrot.lane.b32.xlu0 %v3279, 64
      %v3307 = vpop.permute.xlu0 %3306
      %3308 = vrot.lane.b32.xlu0 %v3280, 64
      %v3309 = vpop.permute.xlu0 %3308
      %3310 = vrot.lane.b32.xlu0 %v3281, 64
      %v3311 = vpop.permute.xlu0 %3310
      %3312 = vrot.lane.b32.xlu0 %v3282, 64
      %v3313 = vpop.permute.xlu0 %3312
      %3314 = vrot.lane.b32.xlu0 %v3283, 64
      %v3315 = vpop.permute.xlu0 %3314
      %vm3332 = vcmask 589312
      %3333 = vst.msk [vmem:[#allocation2] sm:$0xff] %vm3332, %v3285
      %3334 = vst.msk [vmem:[#allocation2 + $0x8] sm:$0xff] %vm3332, %v3287
      %3335 = vst.msk [vmem:[#allocation2 + $0x10] sm:$0xff] %vm3332, %v3289
      %3336 = vst.msk [vmem:[#allocation2 + $0x18] sm:$0xff] %vm3332, %v3291
      %3337 = vst.msk [vmem:[#allocation2 + $0x20] sm:$0xff] %vm3332, %v3293
      %3338 = vst.msk [vmem:[#allocation2 + $0x28] sm:$0xff] %vm3332, %v3295
      %3339 = vst.msk [vmem:[#allocation2 + $0x30] sm:$0xff] %vm3332, %v3297
      %3340 = vst.msk [vmem:[#allocation2 + $0x38] sm:$0xff] %vm3332, %v3299
      %3341 = vst.msk [vmem:[#allocation2 + $0x40] sm:$0xff] %vm3332, %v3301
      %3342 = vst.msk [vmem:[#allocation2 + $0x48] sm:$0xff] %vm3332, %v3303
      %3343 = vst.msk [vmem:[#allocation2 + $0x50] sm:$0xff] %vm3332, %v3305
      %3344 = vst.msk [vmem:[#allocation2 + $0x58] sm:$0xff] %vm3332, %v3307
      %3345 = vst.msk [vmem:[#allocation2 + $0x60] sm:$0xff] %vm3332, %v3309
      %3346 = vst.msk [vmem:[#allocation2 + $0x68] sm:$0xff] %vm3332, %v3311
      %3347 = vst.msk [vmem:[#allocation2 + $0x70] sm:$0xff] %vm3332, %v3313
      %3348 = vst.msk [vmem:[#allocation2 + $0x78] sm:$0xff] %vm3332, %v3315
      %v3349 = vld [vmem:[#allocation2] sm:$0xff]
      %v3350 = vld [vmem:[#allocation2 + $0x8] sm:$0xff]
      %v3351 = vld [vmem:[#allocation2 + $0x10] sm:$0xff]
      %v3352 = vld [vmem:[#allocation2 + $0x18] sm:$0xff]
      %v3353 = vld [vmem:[#allocation2 + $0x20] sm:$0xff]
      %v3354 = vld [vmem:[#allocation2 + $0x28] sm:$0xff]
      %v3355 = vld [vmem:[#allocation2 + $0x30] sm:$0xff]
      %v3356 = vld [vmem:[#allocation2 + $0x38] sm:$0xff]
      %v3357 = vld [vmem:[#allocation2 + $0x40] sm:$0xff]
      %v3358 = vld [vmem:[#allocation2 + $0x48] sm:$0xff]
      %v3359 = vld [vmem:[#allocation2 + $0x50] sm:$0xff]
      %v3360 = vld [vmem:[#allocation2 + $0x58] sm:$0xff]
      %v3361 = vld [vmem:[#allocation2 + $0x60] sm:$0xff]
      %v3362 = vld [vmem:[#allocation2 + $0x68] sm:$0xff]
      %v3363 = vld [vmem:[#allocation2 + $0x70] sm:$0xff]
      %v3364 = vld [vmem:[#allocation2 + $0x78] sm:$0xff]
      %v3365 = vld [vmem:[%s1] sm:$0xf]
      %v3366 = vld [vmem:[%s1 + $0x4] sm:$0xf]
      %v3367 = vld [vmem:[%s1 + $0x8] sm:$0xf]
      %v3368 = vld [vmem:[%s1 + $0xc] sm:$0xf]
      %v3369 = vld [vmem:[%s1 + $0x10] sm:$0xf]
      %v3370 = vld [vmem:[%s1 + $0x14] sm:$0xf]
      %v3371 = vld [vmem:[%s1 + $0x18] sm:$0xf]
      %v3372 = vld [vmem:[%s1 + $0x1c] sm:$0xf]
      %v3373 = vld [vmem:[%s1 + $0x20] sm:$0xf]
      %v3374 = vld [vmem:[%s2] sm:$0x1]
      %v3376 = vlaneseq
      %v3377 = vshrl.u32 %v3376, 7
      %v3378 = vsub.s32 0, %v3377
      %v3379 = vrot.slane %v3374, %v3378
      %v3390 = vunpack.c.l.b16 %v3365
      %v3391 = vunpack.c.l.b16 %v3366
      %v3392 = vunpack.c.l.b16 %v3367
      %v3393 = vunpack.c.l.b16 %v3368
      %v3394 = vunpack.c.l.b16 %v3369
      %v3395 = vunpack.c.l.b16 %v3370
      %v3396 = vunpack.c.l.b16 %v3371
      %v3397 = vunpack.c.l.b16 %v3372
      %v3398 = vunpack.c.l.b16 %v3373
      %v3399 = vpack.c.b16 %v3391, %v3390
      %v3400 = vpack.c.b16 %v3393, %v3392
      %v3401 = vpack.c.b16 %v3395, %v3394
      %v3402 = vpack.c.b16 %v3397, %v3396
      %v3403 = vpack.c.b16 %v3398, %v3398
      %vm3408 = vcmask 588800
      %v3410 = vsel %vm3408, %v3349, 0
      %v3413 = vsel %vm3408, %v3350, 0
      %v3416 = vsel %vm3408, %v3351, 0
      %v3419 = vsel %vm3408, %v3352, 0
      %v3422 = vsel %vm3408, %v3353, 0
      %v3425 = vsel %vm3408, %v3354, 0
      %v3428 = vsel %vm3408, %v3355, 0
      %v3431 = vsel %vm3408, %v3356, 0
      %v3434 = vsel %vm3408, %v3357, 0
      %v3437 = vsel %vm3408, %v3358, 0
      %v3440 = vsel %vm3408, %v3359, 0
      %v3443 = vsel %vm3408, %v3360, 0
      %v3446 = vsel %vm3408, %v3361, 0
      %v3449 = vsel %vm3408, %v3362, 0
      %v3452 = vsel %vm3408, %v3363, 0
      %v3455 = vsel %vm3408, %v3364, 0
      %vm3457 = vcmask 1043456
      %v3459 = vsel %vm3457, %v3403, 0
      %3461 = vmatprep.subr.bf16.mxu0 0
      %3462 = vmatpush1.bf16.msra.mxu0 %v3399
      %3463 = vmatprep.subr.bf16.mxu0 0
      %3464 = vmatpush1.bf16.msra.mxu0 %v3400
      %3465 = vmatprep.subr.bf16.mxu0 0
      %3466 = vmatpush1.bf16.msra.mxu0 %v3401
      %3467 = vmatprep.subr.bf16.mxu0 0
      %3468 = vmatpush1.bf16.msra.mxu0 %v3402
      %3469 = vmatprep.subr.bf16.mxu0 0
      %3470 = vmatpush1.bf16.msra.mxu0 %v3459
      %3471 = vmatprep.subr.bf16.mxu0 0
      %3472 = vmatpush1.bf16.msra.mxu0 0
      %3473 = vmatprep.subr.bf16.mxu0 0
      %3474 = vmatpush1.bf16.msra.mxu0 0
      %3475 = vmatprep.subr.bf16.mxu0 0
      %3476 = vmatpush1.bf16.msra.mxu0 0
      %3477 = vmatprep.subr.bf16.mxu0 0
      %3478 = vmatpush1.bf16.msra.mxu0 0
      %3479 = vmatprep.subr.bf16.mxu0 0
      %3480 = vmatpush1.bf16.msra.mxu0 0
      %3481 = vmatprep.subr.bf16.mxu0 0
      %3482 = vmatpush1.bf16.msra.mxu0 0
      %3483 = vmatprep.subr.bf16.mxu0 0
      %3484 = vmatpush1.bf16.msra.mxu0 0
      %3485 = vmatprep.subr.bf16.mxu0 0
      %3486 = vmatpush1.bf16.msra.mxu0 0
      %3487 = vmatprep.subr.bf16.mxu0 0
      %3488 = vmatpush1.bf16.msra.mxu0 0
      %3489 = vmatprep.subr.bf16.mxu0 0
      %3490 = vmatpush1.bf16.msra.mxu0 0
      %3491 = vmatprep.subr.bf16.mxu0 0
      %3492 = vmatpush1.bf16.msra.mxu0 0
      %3493 = vmatprep.mubr.bf16.mxu0 0
      %3494 = vmatmul.mubr.bf16.gmra.mrb[0].mxu0 %v3410
      %v3495 = vpop.f32.mrb[0].mxu0
      %v3496 = vadd.f32 %v3379, %v3495
      %v3497 = vpop.f32.mrb[0].mxu0
      %v3498 = vpop.f32.mrb[0].mxu0
      %v3499 = vadd.f32 %v3379, %v3498
      %v3500 = vpop.f32.mrb[0].mxu0
      %3501 = vmatprep.mubr.bf16.mxu0 0
      %3502 = vmatmul.mubr.bf16.gmra.mrb[0].mxu0 %v3413
      %v3503 = vpop.f32.mrb[0].mxu0
      %v3504 = vadd.f32 %v3379, %v3503
      %v3505 = vpop.f32.mrb[0].mxu0
      %v3506 = vpop.f32.mrb[0].mxu0
      %v3507 = vadd.f32 %v3379, %v3506
      %v3508 = vpop.f32.mrb[0].mxu0
      %3509 = vmatprep.mubr.bf16.mxu0 0
      %3510 = vmatmul.mubr.bf16.gmra.mrb[0].mxu0 %v3416
      %v3511 = vpop.f32.mrb[0].mxu0
      %v3512 = vadd.f32 %v3379, %v3511
      %v3513 = vpop.f32.mrb[0].mxu0
      %v3514 = vpop.f32.mrb[0].mxu0
      %v3515 = vadd.f32 %v3379, %v3514
      %v3516 = vpop.f32.mrb[0].mxu0
      %3517 = vmatprep.mubr.bf16.mxu0 0
      %3518 = vmatmul.mubr.bf16.gmra.mrb[0].mxu0 %v3419
      %v3519 = vpop.f32.mrb[0].mxu0
      %v3520 = vadd.f32 %v3379, %v3519
      %v3521 = vpop.f32.mrb[0].mxu0
      %v3522 = vpop.f32.mrb[0].mxu0
      %v3523 = vadd.f32 %v3379, %v3522
      %v3524 = vpop.f32.mrb[0].mxu0
      %3525 = vmatprep.mubr.bf16.mxu0 0
      %3526 = vmatmul.mubr.bf16.gmra.mrb[0].mxu0 %v3422
      %v3527 = vpop.f32.mrb[0].mxu0
      %v3528 = vadd.f32 %v3379, %v3527
      %v3529 = vpop.f32.mrb[0].mxu0
      %v3530 = vpop.f32.mrb[0].mxu0
      %v3531 = vadd.f32 %v3379, %v3530
      %v3532 = vpop.f32.mrb[0].mxu0
      %3533 = vmatprep.mubr.bf16.mxu0 0
      %3534 = vmatmul.mubr.bf16.gmra.mrb[0].mxu0 %v3425
      %v3535 = vpop.f32.mrb[0].mxu0
      %v3536 = vadd.f32 %v3379, %v3535
      %v3537 = vpop.f32.mrb[0].mxu0
      %v3538 = vpop.f32.mrb[0].mxu0
      %v3539 = vadd.f32 %v3379, %v3538
      %v3540 = vpop.f32.mrb[0].mxu0
      %3541 = vmatprep.mubr.bf16.mxu0 0
      %3542 = vmatmul.mubr.bf16.gmra.mrb[0].mxu0 %v3428
      %v3543 = vpop.f32.mrb[0].mxu0
      %v3544 = vadd.f32 %v3379, %v3543
      %v3545 = vpop.f32.mrb[0].mxu0
      %v3546 = vpop.f32.mrb[0].mxu0
      %v3547 = vadd.f32 %v3379, %v3546
      %v3548 = vpop.f32.mrb[0].mxu0
      %3549 = vmatprep.mubr.bf16.mxu0 0
      %3550 = vmatmul.mubr.bf16.gmra.mrb[0].mxu0 %v3431
      %v3551 = vpop.f32.mrb[0].mxu0
      %v3552 = vadd.f32 %v3379, %v3551
      %v3553 = vpop.f32.mrb[0].mxu0
      %v3554 = vpop.f32.mrb[0].mxu0
      %v3555 = vadd.f32 %v3379, %v3554
      %v3556 = vpop.f32.mrb[0].mxu0
      %3557 = vmatprep.mubr.bf16.mxu0 0
      %3558 = vmatmul.mubr.bf16.gmra.mrb[0].mxu0 %v3434
      %v3559 = vpop.f32.mrb[0].mxu0
      %v3560 = vadd.f32 %v3379, %v3559
      %v3561 = vpop.f32.mrb[0].mxu0
      %v3562 = vpop.f32.mrb[0].mxu0
      %v3563 = vadd.f32 %v3379, %v3562
      %v3564 = vpop.f32.mrb[0].mxu0
      %3565 = vmatprep.mubr.bf16.mxu0 0
      %3566 = vmatmul.mubr.bf16.gmra.mrb[0].mxu0 %v3437
      %v3567 = vpop.f32.mrb[0].mxu0
      %v3568 = vadd.f32 %v3379, %v3567
      %v3569 = vpop.f32.mrb[0].mxu0
      %v3570 = vpop.f32.mrb[0].mxu0
      %v3571 = vadd.f32 %v3379, %v3570
      %v3572 = vpop.f32.mrb[0].mxu0
      %3573 = vmatprep.mubr.bf16.mxu0 0
      %3574 = vmatmul.mubr.bf16.gmra.mrb[0].mxu0 %v3440
      %v3575 = vpop.f32.mrb[0].mxu0
      %v3576 = vadd.f32 %v3379, %v3575
      %v3577 = vpop.f32.mrb[0].mxu0
      %v3578 = vpop.f32.mrb[0].mxu0
      %v3579 = vadd.f32 %v3379, %v3578
      %v3580 = vpop.f32.mrb[0].mxu0
      %3581 = vmatprep.mubr.bf16.mxu0 0
      %3582 = vmatmul.mubr.bf16.gmra.mrb[0].mxu0 %v3443
      %v3583 = vpop.f32.mrb[0].mxu0
      %v3584 = vadd.f32 %v3379, %v3583
      %v3585 = vpop.f32.mrb[0].mxu0
      %v3586 = vpop.f32.mrb[0].mxu0
      %v3587 = vadd.f32 %v3379, %v3586
      %v3588 = vpop.f32.mrb[0].mxu0
      %3589 = vmatprep.mubr.bf16.mxu0 0
      %3590 = vmatmul.mubr.bf16.gmra.mrb[0].mxu0 %v3446
      %v3591 = vpop.f32.mrb[0].mxu0
      %v3592 = vadd.f32 %v3379, %v3591
      %v3593 = vpop.f32.mrb[0].mxu0
      %v3594 = vpop.f32.mrb[0].mxu0
      %v3595 = vadd.f32 %v3379, %v3594
      %v3596 = vpop.f32.mrb[0].mxu0
      %3597 = vmatprep.mubr.bf16.mxu0 0
      %3598 = vmatmul.mubr.bf16.gmra.mrb[0].mxu0 %v3449
      %v3599 = vpop.f32.mrb[0].mxu0
      %v3600 = vadd.f32 %v3379, %v3599
      %v3601 = vpop.f32.mrb[0].mxu0
      %v3602 = vpop.f32.mrb[0].mxu0
      %v3603 = vadd.f32 %v3379, %v3602
      %v3604 = vpop.f32.mrb[0].mxu0
      %3605 = vmatprep.mubr.bf16.mxu0 0
      %3606 = vmatmul.mubr.bf16.gmra.mrb[0].mxu0 %v3452
      %v3607 = vpop.f32.mrb[0].mxu0
      %v3608 = vadd.f32 %v3379, %v3607
      %v3609 = vpop.f32.mrb[0].mxu0
      %v3610 = vpop.f32.mrb[0].mxu0
      %v3611 = vadd.f32 %v3379, %v3610
      %v3612 = vpop.f32.mrb[0].mxu0
      %3613 = vmatprep.mubr.bf16.mxu0 0
      %3614 = vmatmul.mubr.bf16.gmra.mrb[0].mxu0 %v3455
      %v3615 = vpop.f32.mrb[0].mxu0
      %v3616 = vadd.f32 %v3379, %v3615
      %v3617 = vpop.f32.mrb[0].mxu0
      %v3618 = vpop.f32.mrb[0].mxu0
      %v3619 = vadd.f32 %v3379, %v3618
      %v3620 = vpop.f32.mrb[0].mxu0
      %3621 = vdwg.mxu0
      %v3622 = vmax.f32 %v3496, 0.0
      %v3623 = vmax.f32 %v3499, 0.0
      %v3624 = vmax.f32 %v3504, 0.0
      %v3625 = vmax.f32 %v3507, 0.0
      %v3626 = vmax.f32 %v3512, 0.0
      %v3627 = vmax.f32 %v3515, 0.0
      %v3628 = vmax.f32 %v3520, 0.0
      %v3629 = vmax.f32 %v3523, 0.0
      %v3630 = vmax.f32 %v3528, 0.0
      %v3631 = vmax.f32 %v3531, 0.0
      %v3632 = vmax.f32 %v3536, 0.0
      %v3633 = vmax.f32 %v3539, 0.0
      %v3634 = vmax.f32 %v3544, 0.0
      %v3635 = vmax.f32 %v3547, 0.0
      %v3636 = vmax.f32 %v3552, 0.0
      %v3637 = vmax.f32 %v3555, 0.0
      %v3638 = vmax.f32 %v3560, 0.0
      %v3639 = vmax.f32 %v3563, 0.0
      %v3640 = vmax.f32 %v3568, 0.0
      %v3641 = vmax.f32 %v3571, 0.0
      %v3642 = vmax.f32 %v3576, 0.0
      %v3643 = vmax.f32 %v3579, 0.0
      %v3644 = vmax.f32 %v3584, 0.0
      %v3645 = vmax.f32 %v3587, 0.0
      %v3646 = vmax.f32 %v3592, 0.0
      %v3647 = vmax.f32 %v3595, 0.0
      %v3648 = vmax.f32 %v3600, 0.0
      %v3649 = vmax.f32 %v3603, 0.0
      %v3650 = vmax.f32 %v3608, 0.0
      %v3651 = vmax.f32 %v3611, 0.0
      %v3652 = vmax.f32 %v3616, 0.0
      %v3653 = vmax.f32 %v3619, 0.0
      %v3654 = vpack.c.bf16 %v3623, %v3622
      %v3655 = vpack.c.bf16 %v3625, %v3624
      %v3656 = vpack.c.bf16 %v3627, %v3626
      %v3657 = vpack.c.bf16 %v3629, %v3628
      %v3658 = vpack.c.bf16 %v3631, %v3630
      %v3659 = vpack.c.bf16 %v3633, %v3632
      %v3660 = vpack.c.bf16 %v3635, %v3634
      %v3661 = vpack.c.bf16 %v3637, %v3636
      %v3662 = vpack.c.bf16 %v3639, %v3638
      %v3663 = vpack.c.bf16 %v3641, %v3640
      %v3664 = vpack.c.bf16 %v3643, %v3642
      %v3665 = vpack.c.bf16 %v3645, %v3644
      %v3666 = vpack.c.bf16 %v3647, %v3646
      %v3667 = vpack.c.bf16 %v3649, %v3648
      %v3668 = vpack.c.bf16 %v3651, %v3650
      %v3669 = vpack.c.bf16 %v3653, %v3652
      %v3686 = vunpack.c.l.b16 %v3654
      %v3687 = vunpack.c.h.b16 %v3654
      %v3688 = vunpack.c.l.b16 %v3655
      %v3689 = vunpack.c.h.b16 %v3655
      %v3690 = vunpack.c.l.b16 %v3656
      %v3691 = vunpack.c.h.b16 %v3656
      %v3692 = vunpack.c.l.b16 %v3657
      %v3693 = vunpack.c.h.b16 %v3657
      %v3694 = vunpack.c.l.b16 %v3658
      %v3695 = vunpack.c.h.b16 %v3658
      %v3696 = vunpack.c.l.b16 %v3659
      %v3697 = vunpack.c.h.b16 %v3659
      %v3698 = vunpack.c.l.b16 %v3660
      %v3699 = vunpack.c.h.b16 %v3660
      %v3700 = vunpack.c.l.b16 %v3661
      %v3701 = vunpack.c.h.b16 %v3661
      %v3702 = vunpack.c.l.b16 %v3662
      %v3703 = vunpack.c.h.b16 %v3662
      %v3704 = vunpack.c.l.b16 %v3663
      %v3705 = vunpack.c.h.b16 %v3663
      %v3706 = vunpack.c.l.b16 %v3664
      %v3707 = vunpack.c.h.b16 %v3664
      %v3708 = vunpack.c.l.b16 %v3665
      %v3709 = vunpack.c.h.b16 %v3665
      %v3710 = vunpack.c.l.b16 %v3666
      %v3711 = vunpack.c.h.b16 %v3666
      %v3712 = vunpack.c.l.b16 %v3667
      %v3713 = vunpack.c.h.b16 %v3667
      %v3714 = vunpack.c.l.b16 %v3668
      %v3715 = vunpack.c.h.b16 %v3668
      %v3716 = vunpack.c.l.b16 %v3669
      %v3717 = vunpack.c.h.b16 %v3669
      %v3718 = vpack.c.b16 %v3686, %v3686
      %v3719 = vpack.c.b16 %v3687, %v3687
      %v3720 = vpack.c.b16 %v3688, %v3688
      %v3721 = vpack.c.b16 %v3689, %v3689
      %v3722 = vpack.c.b16 %v3690, %v3690
      %v3723 = vpack.c.b16 %v3691, %v3691
      %v3724 = vpack.c.b16 %v3692, %v3692
      %v3725 = vpack.c.b16 %v3693, %v3693
      %v3726 = vpack.c.b16 %v3694, %v3694
      %v3727 = vpack.c.b16 %v3695, %v3695
      %v3728 = vpack.c.b16 %v3696, %v3696
      %v3729 = vpack.c.b16 %v3697, %v3697
      %v3730 = vpack.c.b16 %v3698, %v3698
      %v3731 = vpack.c.b16 %v3699, %v3699
      %v3732 = vpack.c.b16 %v3700, %v3700
      %v3733 = vpack.c.b16 %v3701, %v3701
      %v3734 = vpack.c.b16 %v3702, %v3702
      %v3735 = vpack.c.b16 %v3703, %v3703
      %v3736 = vpack.c.b16 %v3704, %v3704
      %v3737 = vpack.c.b16 %v3705, %v3705
      %v3738 = vpack.c.b16 %v3706, %v3706
      %v3739 = vpack.c.b16 %v3707, %v3707
      %v3740 = vpack.c.b16 %v3708, %v3708
      %v3741 = vpack.c.b16 %v3709, %v3709
      %v3742 = vpack.c.b16 %v3710, %v3710
      %v3743 = vpack.c.b16 %v3711, %v3711
      %v3744 = vpack.c.b16 %v3712, %v3712
      %v3745 = vpack.c.b16 %v3713, %v3713
      %v3746 = vpack.c.b16 %v3714, %v3714
      %v3747 = vpack.c.b16 %v3715, %v3715
      %v3748 = vpack.c.b16 %v3716, %v3716
      %v3749 = vpack.c.b16 %v3717, %v3717
      %3782 = vst [vmem:[%s235] sm:$0xf] %v3718
      %3783 = vst [vmem:[%s235 + $0x4] sm:$0xf] %v3719
      %3784 = vst [vmem:[%s235 + $0x8] sm:$0xf] %v3720
      %3785 = vst [vmem:[%s235 + $0xc] sm:$0xf] %v3721
      %3786 = vst [vmem:[%s235 + $0x10] sm:$0xf] %v3722
      %3787 = vst [vmem:[%s235 + $0x14] sm:$0xf] %v3723
      %3788 = vst [vmem:[%s235 + $0x18] sm:$0xf] %v3724
      %3789 = vst [vmem:[%s235 + $0x1c] sm:$0xf] %v3725
      %3790 = vst [vmem:[%s235 + $0x20] sm:$0xf] %v3726
      %3791 = vst [vmem:[%s235 + $0x24] sm:$0xf] %v3727
      %3792 = vst [vmem:[%s235 + $0x28] sm:$0xf] %v3728
      %3793 = vst [vmem:[%s235 + $0x2c] sm:$0xf] %v3729
      %3794 = vst [vmem:[%s235 + $0x30] sm:$0xf] %v3730
      %3795 = vst [vmem:[%s235 + $0x34] sm:$0xf] %v3731
      %3796 = vst [vmem:[%s235 + $0x38] sm:$0xf] %v3732
      %3797 = vst [vmem:[%s235 + $0x3c] sm:$0xf] %v3733
      %3798 = vst [vmem:[%s235 + $0x40] sm:$0xf] %v3734
      %3799 = vst [vmem:[%s235 + $0x44] sm:$0xf] %v3735
      %3800 = vst [vmem:[%s235 + $0x48] sm:$0xf] %v3736
      %3801 = vst [vmem:[%s235 + $0x4c] sm:$0xf] %v3737
      %3802 = vst [vmem:[%s235 + $0x50] sm:$0xf] %v3738
      %3803 = vst [vmem:[%s235 + $0x54] sm:$0xf] %v3739
      %3804 = vst [vmem:[%s235 + $0x58] sm:$0xf] %v3740
      %3805 = vst [vmem:[%s235 + $0x5c] sm:$0xf] %v3741
      %3806 = vst [vmem:[%s235 + $0x60] sm:$0xf] %v3742
      %3807 = vst [vmem:[%s235 + $0x64] sm:$0xf] %v3743
      %3808 = vst [vmem:[%s235 + $0x68] sm:$0xf] %v3744
      %3809 = vst [vmem:[%s235 + $0x6c] sm:$0xf] %v3745
      %3810 = vst [vmem:[%s235 + $0x70] sm:$0xf] %v3746
      %3811 = vst [vmem:[%s235 + $0x74] sm:$0xf] %v3747
      %3812 = vst [vmem:[%s235 + $0x78] sm:$0xf] %v3748
      %3813 = vst [vmem:[%s235 + $0x7c] sm:$0xf] %v3749
      %v3814 = vadd.f32 %v3622, %v3623
      %v3815 = vadd.f32 %v3814, %v3624
      %v3816 = vadd.f32 %v3815, %v3625
      %v3817 = vadd.f32 %v3816, %v3626
      %v3818 = vadd.f32 %v3817, %v3627
      %v3819 = vadd.f32 %v3818, %v3628
      %v3820 = vadd.f32 %v3819, %v3629
      %v3821 = vadd.f32 %v3820, %v3630
      %v3822 = vadd.f32 %v3821, %v3631
      %v3823 = vadd.f32 %v3822, %v3632
      %v3824 = vadd.f32 %v3823, %v3633
      %v3825 = vadd.f32 %v3824, %v3634
      %v3826 = vadd.f32 %v3825, %v3635
      %v3827 = vadd.f32 %v3826, %v3636
      %v3828 = vadd.f32 %v3827, %v3637
      %v3829 = vadd.f32 %v3828, %v3638
      %v3830 = vadd.f32 %v3829, %v3639
      %v3831 = vadd.f32 %v3830, %v3640
      %v3832 = vadd.f32 %v3831, %v3641
      %v3833 = vadd.f32 %v3832, %v3642
      %v3834 = vadd.f32 %v3833, %v3643
      %v3835 = vadd.f32 %v3834, %v3644
      %v3836 = vadd.f32 %v3835, %v3645
      %v3837 = vadd.f32 %v3836, %v3646
      %v3838 = vadd.f32 %v3837, %v3647
      %v3839 = vadd.f32 %v3838, %v3648
      %v3840 = vadd.f32 %v3839, %v3649
      %v3841 = vadd.f32 %v3840, %v3650
      %v3842 = vadd.f32 %v3841, %v3651
      %v3843 = vadd.f32 %v3842, %v3652
      %v3844 = vadd.f32 %v3843, %v3653
      %v3845 = vrot.slane %v3844, 4
      %v3846 = vadd.f32 %v3844, %v3845
      %v3847 = vrot.slane %v3846, 2
      %v3848 = vadd.f32 %v3846, %v3847
      %v3849 = vrot.slane %v3848, 1
      %v3850 = vadd.f32 %v3848, %v3849
      %3851 = vst [vmem:[%s239] sm:$0x1] %v3850
      %v3852 = vmul.f32 %v3622, %v3622
      %v3853 = vmul.f32 %v3623, %v3623
      %v3854 = vmul.f32 %v3624, %v3624
      %v3855 = vmul.f32 %v3625, %v3625
      %v3856 = vmul.f32 %v3626, %v3626
      %v3857 = vmul.f32 %v3627, %v3627
      %v3858 = vmul.f32 %v3628, %v3628
      %v3859 = vmul.f32 %v3629, %v3629
      %v3860 = vmul.f32 %v3630, %v3630
      %v3861 = vmul.f32 %v3631, %v3631
      %v3862 = vmul.f32 %v3632, %v3632
      %v3863 = vmul.f32 %v3633, %v3633
      %v3864 = vmul.f32 %v3634, %v3634
      %v3865 = vmul.f32 %v3635, %v3635
      %v3866 = vmul.f32 %v3636, %v3636
      %v3867 = vmul.f32 %v3637, %v3637
      %v3868 = vmul.f32 %v3638, %v3638
      %v3869 = vmul.f32 %v3639, %v3639
      %v3870 = vmul.f32 %v3640, %v3640
      %v3871 = vmul.f32 %v3641, %v3641
      %v3872 = vmul.f32 %v3642, %v3642
      %v3873 = vmul.f32 %v3643, %v3643
      %v3874 = vmul.f32 %v3644, %v3644
      %v3875 = vmul.f32 %v3645, %v3645
      %v3876 = vmul.f32 %v3646, %v3646
      %v3877 = vmul.f32 %v3647, %v3647
      %v3878 = vmul.f32 %v3648, %v3648
      %v3879 = vmul.f32 %v3649, %v3649
      %v3880 = vmul.f32 %v3650, %v3650
      %v3881 = vmul.f32 %v3651, %v3651
      %v3882 = vmul.f32 %v3652, %v3652
      %v3883 = vmul.f32 %v3653, %v3653
      %v3884 = vadd.f32 %v3852, %v3853
      %v3885 = vadd.f32 %v3884, %v3854
      %v3886 = vadd.f32 %v3885, %v3855
      %v3887 = vadd.f32 %v3886, %v3856
      %v3888 = vadd.f32 %v3887, %v3857
      %v3889 = vadd.f32 %v3888, %v3858
      %v3890 = vadd.f32 %v3889, %v3859
      %v3891 = vadd.f32 %v3890, %v3860
      %v3892 = vadd.f32 %v3891, %v3861
      %v3893 = vadd.f32 %v3892, %v3862
      %v3894 = vadd.f32 %v3893, %v3863
      %v3895 = vadd.f32 %v3894, %v3864
      %v3896 = vadd.f32 %v3895, %v3865
      %v3897 = vadd.f32 %v3896, %v3866
      %v3898 = vadd.f32 %v3897, %v3867
      %v3899 = vadd.f32 %v3898, %v3868
      %v3900 = vadd.f32 %v3899, %v3869
      %v3901 = vadd.f32 %v3900, %v3870
      %v3902 = vadd.f32 %v3901, %v3871
      %v3903 = vadd.f32 %v3902, %v3872
      %v3904 = vadd.f32 %v3903, %v3873
      %v3905 = vadd.f32 %v3904, %v3874
      %v3906 = vadd.f32 %v3905, %v3875
      %v3907 = vadd.f32 %v3906, %v3876
      %v3908 = vadd.f32 %v3907, %v3877
      %v3909 = vadd.f32 %v3908, %v3878
      %v3910 = vadd.f32 %v3909, %v3879
      %v3911 = vadd.f32 %v3910, %v3880
      %v3912 = vadd.f32 %v3911, %v3881
      %v3913 = vadd.f32 %v3912, %v3882
      %v3914 = vadd.f32 %v3913, %v3883
      %v3915 = vrot.slane %v3914, 4
      %v3916 = vadd.f32 %v3914, %v3915
      %v3917 = vrot.slane %v3916, 2
      %v3918 = vadd.f32 %v3916, %v3917
      %v3919 = vrot.slane %v3918, 1
      %v3920 = vadd.f32 %v3918, %v3919
      %3921 = vst [vmem:[%s242] sm:$0x1] %v3920
      %s3922 = smul.u32 32, %s17
      %p3923 = scmp.lt.s32.totalorder %s3922, 63
      %s3924 = scalar_select %p3923, %s3922, 63
      %s3925 = smul.addr %s3924, 4
      %s3926 = scalar_lea.vmem %s3, %s3925
      %p3927 = scmp.lt.s32.totalorder %s17, 1
      %s3928 = scalar_select %p3927, %s17, 1
      %s3929 = scalar_lea.vmem %s4, %s3928
      %p3930 = scmp.lt.s32.totalorder %s17, 1
      %s3931 = scalar_select %p3930, %s17, 1
      %s3932 = scalar_lea.vmem %s5, %s3931
      // Predicated region
      $region33: #{conv_relu_bn_nhwc.2} parent=31 // pred_check
        %p3933 = pneg %p103
      $region34: #{conv_relu_bn_nhwc.2} parent=31 // pred_check_branch
        %3935 = sbr.rel (%p3933) target = $region36
      $region35: #{conv_relu_bn_nhwc.2} parent=31 // pred_region
        %s3936 = smul.u32 32, %s17
      $region36: #{conv_relu_bn_nhwc.2} parent=31 // pred_fallthru
        _
      // Predicated region
      $region37: #{conv_relu_bn_nhwc.2} parent=31 // pred_check
        %p3937 = pneg %p129
      $region38: #{conv_relu_bn_nhwc.2} parent=31 // pred_check_branch
        %3939 = sbr.rel (%p3937) target = $region40
      $region39: #{conv_relu_bn_nhwc.2} parent=31 // pred_region
        _
      $region40: #{conv_relu_bn_nhwc.2} parent=31 // pred_fallthru
        _
      // Predicated region
      $region41: #{conv_relu_bn_nhwc.2} parent=31 // pred_check
        %p3940 = pneg %p155
      $region42: #{conv_relu_bn_nhwc.2} parent=31 // pred_check_branch
        %3942 = sbr.rel (%p3940) target = $region44
      $region43: #{conv_relu_bn_nhwc.2} parent=31 // pred_region
        _
      $region44: #{conv_relu_bn_nhwc.2} parent=31 // pred_fallthru
        _
    $region32: #{conv_relu_bn_nhwc.2} parent=5 // pred_fallthru
      _
    %p3943 = scmp.le.s32.totalorder 2, %s12
    // Predicated region
    $region45: #{conv_relu_bn_nhwc.2} parent=5 // pred_check
      %p3944 = pneg %p3943
    $region46: #{conv_relu_bn_nhwc.2} parent=5 // pred_check_branch
      %3946 = sbr.rel (%p3944) target = $region48
    $region47: #{conv_relu_bn_nhwc.2} parent=5 // pred_region
      %s3947 = ssub.s32 %s12, 2
      // Predicated region
      $region49: #{conv_relu_bn_nhwc.2} parent=47 // pred_check
        %p3948 = pneg %p109
      $region50: #{conv_relu_bn_nhwc.2} parent=47 // pred_check_branch
        %3950 = sbr.rel (%p3948) target = $region52
      $region51: #{conv_relu_bn_nhwc.2} parent=47 // pred_region
        %s3951 = smul.u32 32, %s18
        %p3952 = scmp.lt.s32.totalorder %s3951, 63
        %s3953 = scalar_select %p3952, %s3951, 63
        %s3954 = smul.addr %s3953, 4
        %s3955 = scalar_lea.vmem %s3, %s3954
      $region52: #{conv_relu_bn_nhwc.2} parent=47 // pred_fallthru
        _
      // Predicated region
      $region53: #{conv_relu_bn_nhwc.2} parent=47 // pred_check
        %p3956 = pneg %p135
      $region54: #{conv_relu_bn_nhwc.2} parent=47 // pred_check_branch
        %3958 = sbr.rel (%p3956) target = $region56
      $region55: #{conv_relu_bn_nhwc.2} parent=47 // pred_region
        %p3959 = scmp.lt.s32.totalorder %s18, 1
        %s3960 = scalar_select %p3959, %s18, 1
        %s3961 = scalar_lea.vmem %s4, %s3960
      $region56: #{conv_relu_bn_nhwc.2} parent=47 // pred_fallthru
        _
      // Predicated region
      $region57: #{conv_relu_bn_nhwc.2} parent=47 // pred_check
        %p3962 = pneg %p161
      $region58: #{conv_relu_bn_nhwc.2} parent=47 // pred_check_branch
        %3964 = sbr.rel (%p3962) target = $region60
      $region59: #{conv_relu_bn_nhwc.2} parent=47 // pred_region
        %p3965 = scmp.lt.s32.totalorder %s18, 1
        %s3966 = scalar_select %p3965, %s18, 1
        %s3967 = scalar_lea.vmem %s5, %s3966
      $region60: #{conv_relu_bn_nhwc.2} parent=47 // pred_fallthru
        _
    $region48: #{conv_relu_bn_nhwc.2} parent=5 // pred_fallthru
      _
  $region6: #{conv_relu_bn_nhwc.2} parent=0 // loop_footer
    %s16 = sadd.s32 1, %s12
  $region7: #{conv_relu_bn_nhwc.2} parent=0 // loop_footer_branch
    %11 = sbr.rel target = $region3
  $region8: #{conv_relu_bn_nhwc.2} parent=0 // loop_exit
    _

</llo_original>
